<compile_context>
chip_gen: v7x
topology: tpu7x:2x2x1
jax: 0.10.0
libtpu: 0.0.40
codegen_flags: <defaults>
</compile_context>

<pallas_src>
import functools

import jax
import jax.numpy as jnp
from jax import lax
from jax.experimental import pallas as pl
from jax.experimental.pallas import tpu as pltpu


# ----------------------------------------------------------------------------
# Fused Pallas kernel: the whole encoder stack for one batch element.
# ----------------------------------------------------------------------------
def _fused_encoder_kernel(cfgs, x_ref, w_ref, aff_ref, pmat_ref, o_ref,
                          buf_a, buf_b):
    # cfgs     : static tuple of (l_out, k, stride, pad) per layer
    # x_ref    : (L0_buf, C)            layer-0 input, time pre-padded, channels
    #                                   zero-padded to C = encoder_h
    # w_ref    : (n_layers, Kmax*C, C)  conv weights, k-major / cin-minor,
    #                                   zero-padded input channels
    # aff_ref  : (3*n_layers, C)        rows [bias | gamma | beta] per layer
    # pmat_ref : (C, C)                 GroupNorm pair projector (hoisted)
    # o_ref    : (L_final, C)
    # buf_a/b  : VMEM ping-pong buffers holding padded intermediate activations
    c = pmat_ref.shape[0]
    n_layers = len(cfgs)
    pmat = pmat_ref[...]                                  # (C, C), loaded once
    bufs = (buf_a, buf_b)

    src = x_ref
    for l, (l_out, kw, stride, _pad) in enumerate(cfgs):
        w_l = w_ref[l]                                    # (Kmax*C, C)
        b_l = aff_ref[pl.ds(l, 1), :]                     # (1, C)
        gam = aff_ref[pl.ds(n_layers + l, 1), :]          # (1, C)
        bet = aff_ref[pl.ds(2 * n_layers + l, 1), :]      # (1, C)

        # --- Conv1d: K accumulated strided-read matmuls (MXU), no im2col ---
        acc = jnp.zeros((l_out, c), jnp.float32)
        for k in range(kw):
            if stride > 1 and l_out > 1:
                idx = pl.ds(k, l_out, stride=stride)
            else:
                idx = pl.ds(k, l_out)
            xk = src[idx, :]                              # (l_out, C)
            acc = acc + jnp.dot(xk, w_l[k * c:(k + 1) * c, :],
                                preferred_element_type=jnp.float32)
        y = acc + b_l
        # Dropout2d(p=0.0) is an identity -> intentionally skipped.

        # --- GroupNorm (2 channels/group), two-pass centered variance ---
        scale = 1.0 / float(2 * l_out)
        s = jnp.sum(y, axis=0, keepdims=True)             # (1, C)
        mean = jnp.dot(s, pmat, preferred_element_type=jnp.float32) * scale
        d = y - mean
        var = jnp.dot(jnp.sum(d * d, axis=0, keepdims=True), pmat,
                      preferred_element_type=jnp.float32) * scale
        yn = d * lax.rsqrt(var + 1e-5) * gam + bet

        # --- exact GELU (erf form, PyTorch nn.GELU default) ---
        out = 0.5 * yn * (1.0 + lax.erf(yn * 0.7071067811865476))

        if l == n_layers - 1:
            o_ref[...] = out.astype(o_ref.dtype)
        else:
            nxt_pad = cfgs[l + 1][3]
            dst = bufs[l % 2]
            if nxt_pad:                                   # zero the halo rows
                dst[pl.ds(0, nxt_pad), :] = jnp.zeros((nxt_pad, c), jnp.float32)
                dst[pl.ds(nxt_pad + l_out, nxt_pad), :] = jnp.zeros(
                    (nxt_pad, c), jnp.float32)
            dst[pl.ds(nxt_pad, l_out), :] = out           # stays in VMEM
            src = dst


# ----------------------------------------------------------------------------
# Wrapper: parameter packing + single pallas_call.
# ----------------------------------------------------------------------------
def conv_encoder_bendr_forward(x_ncl, params):
    """Forward pass. x_ncl: (N, C_in, L) like PyTorch; returns (N, encoder_h, L')."""
    n, c_in, l0 = x_ncl.shape
    c = params[0]["w"].shape[0]                 # encoder_h
    assert c_in <= c, "kernel assumes in_features <= encoder_h (as in BENDR)"
    n_layers = len(params)

    # Static per-layer geometry (pad = width // 2; widths are odd, as in the
    # PyTorch module which bumps even widths to the next odd value).
    cfgs, l_in = [], l0
    for p in params:
        kw, stride = int(p["width"]), int(p["stride"])
        pad = kw // 2
        l_out = (l_in + 2 * pad - kw) // stride + 1
        cfgs.append((l_in, l_out, kw, stride, pad))
        l_in = l_out
    l_final = l_in
    k_max = max(cfg[2] for cfg in cfgs)
    kernel_cfgs = tuple((lo, kw, st, pd) for (_, lo, kw, st, pd) in cfgs)

    # NCL -> NLC; pre-pad time for layer 0 and zero-pad channels to encoder_h
    # so every layer sees a uniform lane-dense (L, C) slab.
    h = jnp.transpose(x_ncl, (0, 2, 1)).astype(jnp.float32)
    pad0 = cfgs[0][4]
    l0_buf = -(-(l0 + 2 * pad0) // 8) * 8
    h = jnp.pad(h, ((0, 0), (pad0, l0_buf - l0 - pad0), (0, c - c_in)))

    # Pack parameters once: PyTorch conv weight (C_out, C_in, K) -> k-major,
    # cin-minor, zero-padded to (k_max*C, C); bias/gamma/beta -> (3*L, C).
    w_pack, b_pack, g_pack, be_pack = [], [], [], []
    for p in params:
        w = jnp.transpose(p["w"], (2, 1, 0))              # (K, C_in, C_out)
        w = jnp.pad(w, ((0, k_max - w.shape[0]), (0, c - w.shape[1]), (0, 0)))
        w_pack.append(w.reshape(k_max * c, c))
        b_pack.append(p["b"]); g_pack.append(p["gamma"]); be_pack.append(p["beta"])
    w_pack = jnp.stack(w_pack).astype(jnp.float32)        # (n_layers, Kmax*C, C)
    aff_pack = jnp.concatenate(
        [jnp.stack(b_pack), jnp.stack(g_pack), jnp.stack(be_pack)],
        axis=0).astype(jnp.float32)                       # (3*n_layers, C)

    # GroupNorm pair projector (2 channels per group), built once on the host.
    gidx = jnp.arange(c) // 2
    pmat = (gidx[:, None] == gidx[None, :]).astype(jnp.float32)

    # Ping-pong VMEM buffers sized for the largest padded intermediate input.
    if n_layers > 1:
        buf_len = max(li + 2 * pd for (li, _, _, _, pd) in cfgs[1:])
    else:
        buf_len = 8
    buf_len = -(-buf_len // 8) * 8

    kernel = functools.partial(_fused_encoder_kernel, kernel_cfgs)
    out_nlc = pl.pallas_call(
        kernel,
        out_shape=jax.ShapeDtypeStruct((n, l_final, c), jnp.float32),
        grid=(n,),
        in_specs=[
            pl.BlockSpec((None, l0_buf, c), lambda i: (i, 0, 0)),
            pl.BlockSpec((n_layers, k_max * c, c), lambda i: (0, 0, 0)),
            pl.BlockSpec((3 * n_layers, c), lambda i: (0, 0)),
            pl.BlockSpec((c, c), lambda i: (0, 0)),
        ],
        out_specs=pl.BlockSpec((None, l_final, c), lambda i: (i, 0, 0)),
        scratch_shapes=[
            pltpu.VMEM((buf_len, c), jnp.float32),
            pltpu.VMEM((buf_len, c), jnp.float32),
        ],
        compiler_params=pltpu.CompilerParams(
            dimension_semantics=("parallel",)),
    )(h, w_pack, aff_pack, pmat)

    return jnp.transpose(out_nlc, (0, 2, 1))              # NLC -> NCL


# ----------------------------------------------------------------------------
# Parameter construction (shapes match the PyTorch module) and reference.
# ----------------------------------------------------------------------------
def make_params(key, in_features, encoder_h, enc_width, enc_downsample):
    """Deterministic synthetic parameters (even widths bumped to odd, as in the module)."""
    enc_width = [e if e % 2 else e + 1 for e in enc_width]
    params = []
    cin = in_features
    for width, stride in zip(enc_width, enc_downsample):
        key, kw, kb, kg, kbe = jax.random.split(key, 5)
        w = 0.1 * jax.random.normal(kw, (encoder_h, cin, width), jnp.float32)
        b = 0.1 * jax.random.normal(kb, (encoder_h,), jnp.float32)
        gamma = 1.0 + 0.05 * jax.random.normal(kg, (encoder_h,), jnp.float32)
        beta = 0.05 * jax.random.normal(kbe, (encoder_h,), jnp.float32)
        params.append(dict(w=w, b=b, gamma=gamma, beta=beta,
                           width=width, stride=stride))
        cin = encoder_h
    return params


def reference_forward(x_ncl, params):
    """Pure-JAX reference for correctness checking."""
    h = x_ncl
    for p in params:
        k, stride = p["width"], p["stride"]
        pad = k // 2
        h = lax.conv_general_dilated(
            h, p["w"], (stride,), [(pad, pad)],
            dimension_numbers=("NCH", "OIH", "NCH")) + p["b"][None, :, None]
        n, c, l = h.shape
        hg = h.reshape(n, c // 2, 2 * l)
        mean = hg.mean(-1, keepdims=True)
        var = ((hg - mean) ** 2).mean(-1, keepdims=True)
        hn = ((hg - mean) / jnp.sqrt(var + 1e-5)).reshape(n, c, l)
        h = hn * p["gamma"][None, :, None] + p["beta"][None, :, None]
        h = 0.5 * h * (1.0 + lax.erf(h / jnp.sqrt(2.0)))
    return h


if __name__ == "__main__":
    # Small shapes consistent with the module: 4 input channels, encoder_h=32,
    # 96 time samples -> encoded lengths 32,16,8,4,2,1 through the 6 blocks.
    in_features = 4
    encoder_h = 32
    seq_len = 96
    batch = 2
    enc_width = (3, 2, 2, 2, 2, 2)
    enc_downsample = (3, 2, 2, 2, 2, 2)

    key = jax.random.PRNGKey(0)
    key, kx = jax.random.split(key)
    x = jax.random.normal(kx, (batch, in_features, seq_len), jnp.float32)

    params = make_params(key, in_features, encoder_h, enc_width, enc_downsample)

    out = jax.block_until_ready(conv_encoder_bendr_forward(x, params))
    ref = jax.block_until_ready(reference_forward(x, params))

    assert out.shape == (batch, encoder_h, 1), out.shape
    max_err = float(jnp.max(jnp.abs(out - ref)))
    assert jnp.allclose(out, ref, rtol=1e-4, atol=1e-4), max_err

    print("KERNEL_OK")
</pallas_src>

<mosaic_0001>
module attributes {stable_mosaic.version = 11 : i64} {
  func.func @_fused_encoder_kernel(%arg0: i32, %arg1: memref<1x104x32xf32, #tpu.memory_space<vmem>>, %arg2: memref<6x96x32xf32, #tpu.memory_space<vmem>>, %arg3: memref<18x32xf32, #tpu.memory_space<vmem>>, %arg4: memref<32x32xf32, #tpu.memory_space<vmem>>, %arg5: memref<1x1x32xf32, #tpu.memory_space<vmem>>, %arg6: memref<40x32xf32, #tpu.memory_space<vmem>>, %arg7: memref<40x32xf32, #tpu.memory_space<vmem>>) attributes {dimension_semantics = [#tpu.dimension_semantics<parallel>], iteration_bounds = array<i64: 2>, scalar_prefetch = 0 : i64, scratch_operands = 2 : i64, tpu.core_type = #tpu.core_type<tc>, window_params = [{transform_indices = @transform_0, window_bounds = array<i64: 1, 104, 32>}, {pipeline_mode = #tpu.pipeline_mode<synchronous>, transform_indices = @transform_1, window_bounds = array<i64: 6, 96, 32>}, {pipeline_mode = #tpu.pipeline_mode<synchronous>, transform_indices = @transform_2, window_bounds = array<i64: 18, 32>}, {pipeline_mode = #tpu.pipeline_mode<synchronous>, transform_indices = @transform_3, window_bounds = array<i64: 32, 32>}, {transform_indices = @transform_4, window_bounds = array<i64: 1, 1, 32>}]} {
    %c0 = arith.constant 0 : index
    %c0_0 = arith.constant 0 : index
    %0 = vector.load %arg4[%c0, %c0_0] : memref<32x32xf32, #tpu.memory_space<vmem>>, vector<32x32xf32>
    %c0_1 = arith.constant 0 : index
    %c0_2 = arith.constant 0 : index
    %c0_3 = arith.constant 0 : index
    %1 = vector.load %arg2[%c0_1, %c0_2, %c0_3] : memref<6x96x32xf32, #tpu.memory_space<vmem>>, vector<1x96x32xf32>
    %2 = vector.shape_cast %1 : vector<1x96x32xf32> to vector<96x32xf32>
    %c0_4 = arith.constant 0 : index
    %c0_5 = arith.constant 0 : index
    %3 = vector.load %arg3[%c0_4, %c0_5] : memref<18x32xf32, #tpu.memory_space<vmem>>, vector<1x32xf32>
    %c6 = arith.constant 6 : index
    %c0_6 = arith.constant 0 : index
    %4 = vector.load %arg3[%c6, %c0_6] : memref<18x32xf32, #tpu.memory_space<vmem>>, vector<1x32xf32>
    %c12 = arith.constant 12 : index
    %c0_7 = arith.constant 0 : index
    %5 = vector.load %arg3[%c12, %c0_7] : memref<18x32xf32, #tpu.memory_space<vmem>>, vector<1x32xf32>
    %cst = arith.constant 0.000000e+00 : f32
    %6 = vector.broadcast %cst : f32 to vector<32x32xf32>
    %c0_8 = arith.constant 0 : index
    %c0_9 = arith.constant 0 : index
    %c0_10 = arith.constant 0 : index
    %7 = tpu.strided_load %arg1[%c0_8, %c0_9, %c0_10] {strides = array<i32: 1, 3, 1>} : memref<1x104x32xf32, #tpu.memory_space<vmem>>, vector<1x32x32xf32>
    %8 = vector.shape_cast %7 : vector<1x32x32xf32> to vector<32x32xf32>
    %9 = vector.extract_strided_slice %2 {offsets = [0, 0], sizes = [32, 32], strides = [1, 1]} : vector<96x32xf32> to vector<32x32xf32>
    %cst_11 = arith.constant dense<0.000000e+00> : vector<32x32xf32>
    %10 = tpu.matmul %8, %9, %cst_11 {dimension_numbers = #tpu.dot_dimension_numbers<[1], [0], [0], [1], [0, 0, 1, 1], [], []>} : vector<32x32xf32>, vector<32x32xf32>, vector<32x32xf32> -> vector<32x32xf32>
    %11 = arith.addf %6, %10 : vector<32x32xf32>
    %c0_12 = arith.constant 0 : index
    %c1 = arith.constant 1 : index
    %c0_13 = arith.constant 0 : index
    %12 = tpu.strided_load %arg1[%c0_12, %c1, %c0_13] {strides = array<i32: 1, 3, 1>} : memref<1x104x32xf32, #tpu.memory_space<vmem>>, vector<1x32x32xf32>
    %13 = vector.shape_cast %12 : vector<1x32x32xf32> to vector<32x32xf32>
    %14 = vector.extract_strided_slice %2 {offsets = [32, 0], sizes = [32, 32], strides = [1, 1]} : vector<96x32xf32> to vector<32x32xf32>
    %cst_14 = arith.constant dense<0.000000e+00> : vector<32x32xf32>
    %15 = tpu.matmul %13, %14, %cst_14 {dimension_numbers = #tpu.dot_dimension_numbers<[1], [0], [0], [1], [0, 0, 1, 1], [], []>} : vector<32x32xf32>, vector<32x32xf32>, vector<32x32xf32> -> vector<32x32xf32>
    %16 = arith.addf %11, %15 : vector<32x32xf32>
    %c0_15 = arith.constant 0 : index
    %c2 = arith.constant 2 : index
    %c0_16 = arith.constant 0 : index
    %17 = tpu.strided_load %arg1[%c0_15, %c2, %c0_16] {strides = array<i32: 1, 3, 1>} : memref<1x104x32xf32, #tpu.memory_space<vmem>>, vector<1x32x32xf32>
    %18 = vector.shape_cast %17 : vector<1x32x32xf32> to vector<32x32xf32>
    %19 = vector.extract_strided_slice %2 {offsets = [64, 0], sizes = [32, 32], strides = [1, 1]} : vector<96x32xf32> to vector<32x32xf32>
    %cst_17 = arith.constant dense<0.000000e+00> : vector<32x32xf32>
    %20 = tpu.matmul %18, %19, %cst_17 {dimension_numbers = #tpu.dot_dimension_numbers<[1], [0], [0], [1], [0, 0, 1, 1], [], []>} : vector<32x32xf32>, vector<32x32xf32>, vector<32x32xf32> -> vector<32x32xf32>
    %21 = arith.addf %16, %20 : vector<32x32xf32>
    %22 = vector.broadcast %3 : vector<1x32xf32> to vector<32x32xf32>
    %23 = arith.addf %21, %22 : vector<32x32xf32>
    %cst_18 = arith.constant dense<0.000000e+00> : vector<32xf32>
    %24 = vector.multi_reduction <add>, %23, %cst_18 [0] : vector<32x32xf32> to vector<32xf32>
    %25 = vector.shape_cast %24 : vector<32xf32> to vector<1x32xf32>
    %cst_19 = arith.constant dense<0.000000e+00> : vector<1x32xf32>
    %26 = tpu.matmul %25, %0, %cst_19 {dimension_numbers = #tpu.dot_dimension_numbers<[1], [0], [0], [1], [0, 0, 1, 1], [], []>} : vector<1x32xf32>, vector<32x32xf32>, vector<1x32xf32> -> vector<1x32xf32>
    %cst_20 = arith.constant 1.562500e-02 : f32
    %27 = vector.broadcast %cst_20 : f32 to vector<1x32xf32>
    %28 = arith.mulf %26, %27 : vector<1x32xf32>
    %29 = vector.broadcast %28 : vector<1x32xf32> to vector<32x32xf32>
    %30 = arith.subf %23, %29 : vector<32x32xf32>
    %31 = arith.mulf %30, %30 : vector<32x32xf32>
    %cst_21 = arith.constant dense<0.000000e+00> : vector<32xf32>
    %32 = vector.multi_reduction <add>, %31, %cst_21 [0] : vector<32x32xf32> to vector<32xf32>
    %33 = vector.shape_cast %32 : vector<32xf32> to vector<1x32xf32>
    %cst_22 = arith.constant dense<0.000000e+00> : vector<1x32xf32>
    %34 = tpu.matmul %33, %0, %cst_22 {dimension_numbers = #tpu.dot_dimension_numbers<[1], [0], [0], [1], [0, 0, 1, 1], [], []>} : vector<1x32xf32>, vector<32x32xf32>, vector<1x32xf32> -> vector<1x32xf32>
    %cst_23 = arith.constant 1.562500e-02 : f32
    %35 = vector.broadcast %cst_23 : f32 to vector<1x32xf32>
    %36 = arith.mulf %34, %35 : vector<1x32xf32>
    %cst_24 = arith.constant 9.99999974E-6 : f32
    %37 = vector.broadcast %cst_24 : f32 to vector<1x32xf32>
    %38 = arith.addf %36, %37 : vector<1x32xf32>
    %39 = math.rsqrt %38 : vector<1x32xf32>
    %40 = vector.broadcast %39 : vector<1x32xf32> to vector<32x32xf32>
    %41 = arith.mulf %30, %40 : vector<32x32xf32>
    %42 = vector.broadcast %4 : vector<1x32xf32> to vector<32x32xf32>
    %43 = arith.mulf %41, %42 : vector<32x32xf32>
    %44 = vector.broadcast %5 : vector<1x32xf32> to vector<32x32xf32>
    %45 = arith.addf %43, %44 : vector<32x32xf32>
    %cst_25 = arith.constant 5.000000e-01 : f32
    %46 = vector.broadcast %cst_25 : f32 to vector<32x32xf32>
    %47 = arith.mulf %46, %45 : vector<32x32xf32>
    %cst_26 = arith.constant 0.707106769 : f32
    %48 = vector.broadcast %cst_26 : f32 to vector<32x32xf32>
    %49 = arith.mulf %45, %48 : vector<32x32xf32>
    %50 = math.erf %49 : vector<32x32xf32>
    %cst_27 = arith.constant 1.000000e+00 : f32
    %51 = vector.broadcast %cst_27 : f32 to vector<32x32xf32>
    %52 = arith.addf %51, %50 : vector<32x32xf32>
    %53 = arith.mulf %47, %52 : vector<32x32xf32>
    %cst_28 = arith.constant 0.000000e+00 : f32
    %54 = vector.broadcast %cst_28 : f32 to vector<1x32xf32>
    %c0_29 = arith.constant 0 : index
    %c0_30 = arith.constant 0 : index
    %55 = vector.load %arg6[%c0_29, %c0_30] : memref<40x32xf32, #tpu.memory_space<vmem>>, vector<1x32xf32>
    tpu.vector_store %arg6[%c0_29, %c0_30], %54 {strides = array<i32>} : memref<40x32xf32, #tpu.memory_space<vmem>>, vector<1x32xf32>,
    %cst_31 = arith.constant 0.000000e+00 : f32
    %56 = vector.broadcast %cst_31 : f32 to vector<1x32xf32>
    %c33 = arith.constant 33 : index
    %c0_32 = arith.constant 0 : index
    %57 = vector.load %arg6[%c33, %c0_32] : memref<40x32xf32, #tpu.memory_space<vmem>>, vector<1x32xf32>
    tpu.vector_store %arg6[%c33, %c0_32], %56 {strides = array<i32>} : memref<40x32xf32, #tpu.memory_space<vmem>>, vector<1x32xf32>,
    %c1_33 = arith.constant 1 : index
    %c0_34 = arith.constant 0 : index
    %58 = vector.load %arg6[%c1_33, %c0_34] : memref<40x32xf32, #tpu.memory_space<vmem>>, vector<32x32xf32>
    tpu.vector_store %arg6[%c1_33, %c0_34], %53 {strides = array<i32>} : memref<40x32xf32, #tpu.memory_space<vmem>>, vector<32x32xf32>,
    %c1_35 = arith.constant 1 : index
    %c0_36 = arith.constant 0 : index
    %c0_37 = arith.constant 0 : index
    %59 = vector.load %arg2[%c1_35, %c0_36, %c0_37] : memref<6x96x32xf32, #tpu.memory_space<vmem>>, vector<1x96x32xf32>
    %60 = vector.shape_cast %59 : vector<1x96x32xf32> to vector<96x32xf32>
    %c1_38 = arith.constant 1 : index
    %c0_39 = arith.constant 0 : index
    %61 = vector.load %arg3[%c1_38, %c0_39] : memref<18x32xf32, #tpu.memory_space<vmem>>, vector<1x32xf32>
    %c7 = arith.constant 7 : index
    %c0_40 = arith.constant 0 : index
    %62 = vector.load %arg3[%c7, %c0_40] : memref<18x32xf32, #tpu.memory_space<vmem>>, vector<1x32xf32>
    %c13 = arith.constant 13 : index
    %c0_41 = arith.constant 0 : index
    %63 = vector.load %arg3[%c13, %c0_41] : memref<18x32xf32, #tpu.memory_space<vmem>>, vector<1x32xf32>
    %cst_42 = arith.constant 0.000000e+00 : f32
    %64 = vector.broadcast %cst_42 : f32 to vector<16x32xf32>
    %c0_43 = arith.constant 0 : index
    %c0_44 = arith.constant 0 : index
    %65 = tpu.strided_load %arg6[%c0_43, %c0_44] {strides = array<i32: 2, 1>} : memref<40x32xf32, #tpu.memory_space<vmem>>, vector<16x32xf32>
    %66 = vector.extract_strided_slice %60 {offsets = [0, 0], sizes = [32, 32], strides = [1, 1]} : vector<96x32xf32> to vector<32x32xf32>
    %cst_45 = arith.constant dense<0.000000e+00> : vector<16x32xf32>
    %67 = tpu.matmul %65, %66, %cst_45 {dimension_numbers = #tpu.dot_dimension_numbers<[1], [0], [0], [1], [0, 0, 1, 1], [], []>} : vector<16x32xf32>, vector<32x32xf32>, vector<16x32xf32> -> vector<16x32xf32>
    %68 = arith.addf %64, %67 : vector<16x32xf32>
    %c1_46 = arith.constant 1 : index
    %c0_47 = arith.constant 0 : index
    %69 = tpu.strided_load %arg6[%c1_46, %c0_47] {strides = array<i32: 2, 1>} : memref<40x32xf32, #tpu.memory_space<vmem>>, vector<16x32xf32>
    %70 = vector.extract_strided_slice %60 {offsets = [32, 0], sizes = [32, 32], strides = [1, 1]} : vector<96x32xf32> to vector<32x32xf32>
    %cst_48 = arith.constant dense<0.000000e+00> : vector<16x32xf32>
    %71 = tpu.matmul %69, %70, %cst_48 {dimension_numbers = #tpu.dot_dimension_numbers<[1], [0], [0], [1], [0, 0, 1, 1], [], []>} : vector<16x32xf32>, vector<32x32xf32>, vector<16x32xf32> -> vector<16x32xf32>
    %72 = arith.addf %68, %71 : vector<16x32xf32>
    %c2_49 = arith.constant 2 : index
    %c0_50 = arith.constant 0 : index
    %73 = tpu.strided_load %arg6[%c2_49, %c0_50] {strides = array<i32: 2, 1>} : memref<40x32xf32, #tpu.memory_space<vmem>>, vector<16x32xf32>
    %74 = vector.extract_strided_slice %60 {offsets = [64, 0], sizes = [32, 32], strides = [1, 1]} : vector<96x32xf32> to vector<32x32xf32>
    %cst_51 = arith.constant dense<0.000000e+00> : vector<16x32xf32>
    %75 = tpu.matmul %73, %74, %cst_51 {dimension_numbers = #tpu.dot_dimension_numbers<[1], [0], [0], [1], [0, 0, 1, 1], [], []>} : vector<16x32xf32>, vector<32x32xf32>, vector<16x32xf32> -> vector<16x32xf32>
    %76 = arith.addf %72, %75 : vector<16x32xf32>
    %77 = vector.broadcast %61 : vector<1x32xf32> to vector<16x32xf32>
    %78 = arith.addf %76, %77 : vector<16x32xf32>
    %cst_52 = arith.constant dense<0.000000e+00> : vector<32xf32>
    %79 = vector.multi_reduction <add>, %78, %cst_52 [0] : vector<16x32xf32> to vector<32xf32>
    %80 = vector.shape_cast %79 : vector<32xf32> to vector<1x32xf32>
    %cst_53 = arith.constant dense<0.000000e+00> : vector<1x32xf32>
    %81 = tpu.matmul %80, %0, %cst_53 {dimension_numbers = #tpu.dot_dimension_numbers<[1], [0], [0], [1], [0, 0, 1, 1], [], []>} : vector<1x32xf32>, vector<32x32xf32>, vector<1x32xf32> -> vector<1x32xf32>
    %cst_54 = arith.constant 3.125000e-02 : f32
    %82 = vector.broadcast %cst_54 : f32 to vector<1x32xf32>
    %83 = arith.mulf %81, %82 : vector<1x32xf32>
    %84 = vector.broadcast %83 : vector<1x32xf32> to vector<16x32xf32>
    %85 = arith.subf %78, %84 : vector<16x32xf32>
    %86 = arith.mulf %85, %85 : vector<16x32xf32>
    %cst_55 = arith.constant dense<0.000000e+00> : vector<32xf32>
    %87 = vector.multi_reduction <add>, %86, %cst_55 [0] : vector<16x32xf32> to vector<32xf32>
    %88 = vector.shape_cast %87 : vector<32xf32> to vector<1x32xf32>
    %cst_56 = arith.constant dense<0.000000e+00> : vector<1x32xf32>
    %89 = tpu.matmul %88, %0, %cst_56 {dimension_numbers = #tpu.dot_dimension_numbers<[1], [0], [0], [1], [0, 0, 1, 1], [], []>} : vector<1x32xf32>, vector<32x32xf32>, vector<1x32xf32> -> vector<1x32xf32>
    %cst_57 = arith.constant 3.125000e-02 : f32
    %90 = vector.broadcast %cst_57 : f32 to vector<1x32xf32>
    %91 = arith.mulf %89, %90 : vector<1x32xf32>
    %cst_58 = arith.constant 9.99999974E-6 : f32
    %92 = vector.broadcast %cst_58 : f32 to vector<1x32xf32>
    %93 = arith.addf %91, %92 : vector<1x32xf32>
    %94 = math.rsqrt %93 : vector<1x32xf32>
    %95 = vector.broadcast %94 : vector<1x32xf32> to vector<16x32xf32>
    %96 = arith.mulf %85, %95 : vector<16x32xf32>
    %97 = vector.broadcast %62 : vector<1x32xf32> to vector<16x32xf32>
    %98 = arith.mulf %96, %97 : vector<16x32xf32>
    %99 = vector.broadcast %63 : vector<1x32xf32> to vector<16x32xf32>
    %100 = arith.addf %98, %99 : vector<16x32xf32>
    %cst_59 = arith.constant 5.000000e-01 : f32
    %101 = vector.broadcast %cst_59 : f32 to vector<16x32xf32>
    %102 = arith.mulf %101, %100 : vector<16x32xf32>
    %cst_60 = arith.constant 0.707106769 : f32
    %103 = vector.broadcast %cst_60 : f32 to vector<16x32xf32>
    %104 = arith.mulf %100, %103 : vector<16x32xf32>
    %105 = math.erf %104 : vector<16x32xf32>
    %cst_61 = arith.constant 1.000000e+00 : f32
    %106 = vector.broadcast %cst_61 : f32 to vector<16x32xf32>
    %107 = arith.addf %106, %105 : vector<16x32xf32>
    %108 = arith.mulf %102, %107 : vector<16x32xf32>
    %cst_62 = arith.constant 0.000000e+00 : f32
    %109 = vector.broadcast %cst_62 : f32 to vector<1x32xf32>
    %c0_63 = arith.constant 0 : index
    %c0_64 = arith.constant 0 : index
    %110 = vector.load %arg7[%c0_63, %c0_64] : memref<40x32xf32, #tpu.memory_space<vmem>>, vector<1x32xf32>
    tpu.vector_store %arg7[%c0_63, %c0_64], %109 {strides = array<i32>} : memref<40x32xf32, #tpu.memory_space<vmem>>, vector<1x32xf32>,
    %cst_65 = arith.constant 0.000000e+00 : f32
    %111 = vector.broadcast %cst_65 : f32 to vector<1x32xf32>
    %c17 = arith.constant 17 : index
    %c0_66 = arith.constant 0 : index
    %112 = vector.load %arg7[%c17, %c0_66] : memref<40x32xf32, #tpu.memory_space<vmem>>, vector<1x32xf32>
    tpu.vector_store %arg7[%c17, %c0_66], %111 {strides = array<i32>} : memref<40x32xf32, #tpu.memory_space<vmem>>, vector<1x32xf32>,
    %c1_67 = arith.constant 1 : index
    %c0_68 = arith.constant 0 : index
    %113 = vector.load %arg7[%c1_67, %c0_68] : memref<40x32xf32, #tpu.memory_space<vmem>>, vector<16x32xf32>
    tpu.vector_store %arg7[%c1_67, %c0_68], %108 {strides = array<i32>} : memref<40x32xf32, #tpu.memory_space<vmem>>, vector<16x32xf32>,
    %c2_69 = arith.constant 2 : index
    %c0_70 = arith.constant 0 : index
    %c0_71 = arith.constant 0 : index
    %114 = vector.load %arg2[%c2_69, %c0_70, %c0_71] : memref<6x96x32xf32, #tpu.memory_space<vmem>>, vector<1x96x32xf32>
    %115 = vector.shape_cast %114 : vector<1x96x32xf32> to vector<96x32xf32>
    %c2_72 = arith.constant 2 : index
    %c0_73 = arith.constant 0 : index
    %116 = vector.load %arg3[%c2_72, %c0_73] : memref<18x32xf32, #tpu.memory_space<vmem>>, vector<1x32xf32>
    %c8 = arith.constant 8 : index
    %c0_74 = arith.constant 0 : index
    %117 = vector.load %arg3[%c8, %c0_74] : memref<18x32xf32, #tpu.memory_space<vmem>>, vector<1x32xf32>
    %c14 = arith.constant 14 : index
    %c0_75 = arith.constant 0 : index
    %118 = vector.load %arg3[%c14, %c0_75] : memref<18x32xf32, #tpu.memory_space<vmem>>, vector<1x32xf32>
    %cst_76 = arith.constant 0.000000e+00 : f32
    %119 = vector.broadcast %cst_76 : f32 to vector<8x32xf32>
    %c0_77 = arith.constant 0 : index
    %c0_78 = arith.constant 0 : index
    %120 = tpu.strided_load %arg7[%c0_77, %c0_78] {strides = array<i32: 2, 1>} : memref<40x32xf32, #tpu.memory_space<vmem>>, vector<8x32xf32>
    %121 = vector.extract_strided_slice %115 {offsets = [0, 0], sizes = [32, 32], strides = [1, 1]} : vector<96x32xf32> to vector<32x32xf32>
    %cst_79 = arith.constant dense<0.000000e+00> : vector<8x32xf32>
    %122 = tpu.matmul %120, %121, %cst_79 {dimension_numbers = #tpu.dot_dimension_numbers<[1], [0], [0], [1], [0, 0, 1, 1], [], []>} : vector<8x32xf32>, vector<32x32xf32>, vector<8x32xf32> -> vector<8x32xf32>
    %123 = arith.addf %119, %122 : vector<8x32xf32>
    %c1_80 = arith.constant 1 : index
    %c0_81 = arith.constant 0 : index
    %124 = tpu.strided_load %arg7[%c1_80, %c0_81] {strides = array<i32: 2, 1>} : memref<40x32xf32, #tpu.memory_space<vmem>>, vector<8x32xf32>
    %125 = vector.extract_strided_slice %115 {offsets = [32, 0], sizes = [32, 32], strides = [1, 1]} : vector<96x32xf32> to vector<32x32xf32>
    %cst_82 = arith.constant dense<0.000000e+00> : vector<8x32xf32>
    %126 = tpu.matmul %124, %125, %cst_82 {dimension_numbers = #tpu.dot_dimension_numbers<[1], [0], [0], [1], [0, 0, 1, 1], [], []>} : vector<8x32xf32>, vector<32x32xf32>, vector<8x32xf32> -> vector<8x32xf32>
    %127 = arith.addf %123, %126 : vector<8x32xf32>
    %c2_83 = arith.constant 2 : index
    %c0_84 = arith.constant 0 : index
    %128 = tpu.strided_load %arg7[%c2_83, %c0_84] {strides = array<i32: 2, 1>} : memref<40x32xf32, #tpu.memory_space<vmem>>, vector<8x32xf32>
    %129 = vector.extract_strided_slice %115 {offsets = [64, 0], sizes = [32, 32], strides = [1, 1]} : vector<96x32xf32> to vector<32x32xf32>
    %cst_85 = arith.constant dense<0.000000e+00> : vector<8x32xf32>
    %130 = tpu.matmul %128, %129, %cst_85 {dimension_numbers = #tpu.dot_dimension_numbers<[1], [0], [0], [1], [0, 0, 1, 1], [], []>} : vector<8x32xf32>, vector<32x32xf32>, vector<8x32xf32> -> vector<8x32xf32>
    %131 = arith.addf %127, %130 : vector<8x32xf32>
    %132 = vector.broadcast %116 : vector<1x32xf32> to vector<8x32xf32>
    %133 = arith.addf %131, %132 : vector<8x32xf32>
    %cst_86 = arith.constant dense<0.000000e+00> : vector<32xf32>
    %134 = vector.multi_reduction <add>, %133, %cst_86 [0] : vector<8x32xf32> to vector<32xf32>
    %135 = vector.shape_cast %134 : vector<32xf32> to vector<1x32xf32>
    %cst_87 = arith.constant dense<0.000000e+00> : vector<1x32xf32>
    %136 = tpu.matmul %135, %0, %cst_87 {dimension_numbers = #tpu.dot_dimension_numbers<[1], [0], [0], [1], [0, 0, 1, 1], [], []>} : vector<1x32xf32>, vector<32x32xf32>, vector<1x32xf32> -> vector<1x32xf32>
    %cst_88 = arith.constant 6.250000e-02 : f32
    %137 = vector.broadcast %cst_88 : f32 to vector<1x32xf32>
    %138 = arith.mulf %136, %137 : vector<1x32xf32>
    %139 = vector.broadcast %138 : vector<1x32xf32> to vector<8x32xf32>
    %140 = arith.subf %133, %139 : vector<8x32xf32>
    %141 = arith.mulf %140, %140 : vector<8x32xf32>
    %cst_89 = arith.constant dense<0.000000e+00> : vector<32xf32>
    %142 = vector.multi_reduction <add>, %141, %cst_89 [0] : vector<8x32xf32> to vector<32xf32>
    %143 = vector.shape_cast %142 : vector<32xf32> to vector<1x32xf32>
    %cst_90 = arith.constant dense<0.000000e+00> : vector<1x32xf32>
    %144 = tpu.matmul %143, %0, %cst_90 {dimension_numbers = #tpu.dot_dimension_numbers<[1], [0], [0], [1], [0, 0, 1, 1], [], []>} : vector<1x32xf32>, vector<32x32xf32>, vector<1x32xf32> -> vector<1x32xf32>
    %cst_91 = arith.constant 6.250000e-02 : f32
    %145 = vector.broadcast %cst_91 : f32 to vector<1x32xf32>
    %146 = arith.mulf %144, %145 : vector<1x32xf32>
    %cst_92 = arith.constant 9.99999974E-6 : f32
    %147 = vector.broadcast %cst_92 : f32 to vector<1x32xf32>
    %148 = arith.addf %146, %147 : vector<1x32xf32>
    %149 = math.rsqrt %148 : vector<1x32xf32>
    %150 = vector.broadcast %149 : vector<1x32xf32> to vector<8x32xf32>
    %151 = arith.mulf %140, %150 : vector<8x32xf32>
    %152 = vector.broadcast %117 : vector<1x32xf32> to vector<8x32xf32>
    %153 = arith.mulf %151, %152 : vector<8x32xf32>
    %154 = vector.broadcast %118 : vector<1x32xf32> to vector<8x32xf32>
    %155 = arith.addf %153, %154 : vector<8x32xf32>
    %cst_93 = arith.constant 5.000000e-01 : f32
    %156 = vector.broadcast %cst_93 : f32 to vector<8x32xf32>
    %157 = arith.mulf %156, %155 : vector<8x32xf32>
    %cst_94 = arith.constant 0.707106769 : f32
    %158 = vector.broadcast %cst_94 : f32 to vector<8x32xf32>
    %159 = arith.mulf %155, %158 : vector<8x32xf32>
    %160 = math.erf %159 : vector<8x32xf32>
    %cst_95 = arith.constant 1.000000e+00 : f32
    %161 = vector.broadcast %cst_95 : f32 to vector<8x32xf32>
    %162 = arith.addf %161, %160 : vector<8x32xf32>
    %163 = arith.mulf %157, %162 : vector<8x32xf32>
    %cst_96 = arith.constant 0.000000e+00 : f32
    %164 = vector.broadcast %cst_96 : f32 to vector<1x32xf32>
    %c0_97 = arith.constant 0 : index
    %c0_98 = arith.constant 0 : index
    %165 = vector.load %arg6[%c0_97, %c0_98] : memref<40x32xf32, #tpu.memory_space<vmem>>, vector<1x32xf32>
    tpu.vector_store %arg6[%c0_97, %c0_98], %164 {strides = array<i32>} : memref<40x32xf32, #tpu.memory_space<vmem>>, vector<1x32xf32>,
    %cst_99 = arith.constant 0.000000e+00 : f32
    %166 = vector.broadcast %cst_99 : f32 to vector<1x32xf32>
    %c9 = arith.constant 9 : index
    %c0_100 = arith.constant 0 : index
    %167 = vector.load %arg6[%c9, %c0_100] : memref<40x32xf32, #tpu.memory_space<vmem>>, vector<1x32xf32>
    tpu.vector_store %arg6[%c9, %c0_100], %166 {strides = array<i32>} : memref<40x32xf32, #tpu.memory_space<vmem>>, vector<1x32xf32>,
    %c1_101 = arith.constant 1 : index
    %c0_102 = arith.constant 0 : index
    %168 = vector.load %arg6[%c1_101, %c0_102] : memref<40x32xf32, #tpu.memory_space<vmem>>, vector<8x32xf32>
    tpu.vector_store %arg6[%c1_101, %c0_102], %163 {strides = array<i32>} : memref<40x32xf32, #tpu.memory_space<vmem>>, vector<8x32xf32>,
    %c3 = arith.constant 3 : index
    %c0_103 = arith.constant 0 : index
    %c0_104 = arith.constant 0 : index
    %169 = vector.load %arg2[%c3, %c0_103, %c0_104] : memref<6x96x32xf32, #tpu.memory_space<vmem>>, vector<1x96x32xf32>
    %170 = vector.shape_cast %169 : vector<1x96x32xf32> to vector<96x32xf32>
    %c3_105 = arith.constant 3 : index
    %c0_106 = arith.constant 0 : index
    %171 = vector.load %arg3[%c3_105, %c0_106] : memref<18x32xf32, #tpu.memory_space<vmem>>, vector<1x32xf32>
    %c9_107 = arith.constant 9 : index
    %c0_108 = arith.constant 0 : index
    %172 = vector.load %arg3[%c9_107, %c0_108] : memref<18x32xf32, #tpu.memory_space<vmem>>, vector<1x32xf32>
    %c15 = arith.constant 15 : index
    %c0_109 = arith.constant 0 : index
    %173 = vector.load %arg3[%c15, %c0_109] : memref<18x32xf32, #tpu.memory_space<vmem>>, vector<1x32xf32>
    %cst_110 = arith.constant 0.000000e+00 : f32
    %174 = vector.broadcast %cst_110 : f32 to vector<4x32xf32>
    %c0_111 = arith.constant 0 : index
    %c0_112 = arith.constant 0 : index
    %175 = tpu.strided_load %arg6[%c0_111, %c0_112] {strides = array<i32: 2, 1>} : memref<40x32xf32, #tpu.memory_space<vmem>>, vector<4x32xf32>
    %176 = vector.extract_strided_slice %170 {offsets = [0, 0], sizes = [32, 32], strides = [1, 1]} : vector<96x32xf32> to vector<32x32xf32>
    %cst_113 = arith.constant dense<0.000000e+00> : vector<4x32xf32>
    %177 = tpu.matmul %175, %176, %cst_113 {dimension_numbers = #tpu.dot_dimension_numbers<[1], [0], [0], [1], [0, 0, 1, 1], [], []>} : vector<4x32xf32>, vector<32x32xf32>, vector<4x32xf32> -> vector<4x32xf32>
    %178 = arith.addf %174, %177 : vector<4x32xf32>
    %c1_114 = arith.constant 1 : index
    %c0_115 = arith.constant 0 : index
    %179 = tpu.strided_load %arg6[%c1_114, %c0_115] {strides = array<i32: 2, 1>} : memref<40x32xf32, #tpu.memory_space<vmem>>, vector<4x32xf32>
    %180 = vector.extract_strided_slice %170 {offsets = [32, 0], sizes = [32, 32], strides = [1, 1]} : vector<96x32xf32> to vector<32x32xf32>
    %cst_116 = arith.constant dense<0.000000e+00> : vector<4x32xf32>
    %181 = tpu.matmul %179, %180, %cst_116 {dimension_numbers = #tpu.dot_dimension_numbers<[1], [0], [0], [1], [0, 0, 1, 1], [], []>} : vector<4x32xf32>, vector<32x32xf32>, vector<4x32xf32> -> vector<4x32xf32>
    %182 = arith.addf %178, %181 : vector<4x32xf32>
    %c2_117 = arith.constant 2 : index
    %c0_118 = arith.constant 0 : index
    %183 = tpu.strided_load %arg6[%c2_117, %c0_118] {strides = array<i32: 2, 1>} : memref<40x32xf32, #tpu.memory_space<vmem>>, vector<4x32xf32>
    %184 = vector.extract_strided_slice %170 {offsets = [64, 0], sizes = [32, 32], strides = [1, 1]} : vector<96x32xf32> to vector<32x32xf32>
    %cst_119 = arith.constant dense<0.000000e+00> : vector<4x32xf32>
    %185 = tpu.matmul %183, %184, %cst_119 {dimension_numbers = #tpu.dot_dimension_numbers<[1], [0], [0], [1], [0, 0, 1, 1], [], []>} : vector<4x32xf32>, vector<32x32xf32>, vector<4x32xf32> -> vector<4x32xf32>
    %186 = arith.addf %182, %185 : vector<4x32xf32>
    %187 = vector.broadcast %171 : vector<1x32xf32> to vector<4x32xf32>
    %188 = arith.addf %186, %187 : vector<4x32xf32>
    %cst_120 = arith.constant dense<0.000000e+00> : vector<32xf32>
    %189 = vector.multi_reduction <add>, %188, %cst_120 [0] : vector<4x32xf32> to vector<32xf32>
    %190 = vector.shape_cast %189 : vector<32xf32> to vector<1x32xf32>
    %cst_121 = arith.constant dense<0.000000e+00> : vector<1x32xf32>
    %191 = tpu.matmul %190, %0, %cst_121 {dimension_numbers = #tpu.dot_dimension_numbers<[1], [0], [0], [1], [0, 0, 1, 1], [], []>} : vector<1x32xf32>, vector<32x32xf32>, vector<1x32xf32> -> vector<1x32xf32>
    %cst_122 = arith.constant 1.250000e-01 : f32
    %192 = vector.broadcast %cst_122 : f32 to vector<1x32xf32>
    %193 = arith.mulf %191, %192 : vector<1x32xf32>
    %194 = vector.broadcast %193 : vector<1x32xf32> to vector<4x32xf32>
    %195 = arith.subf %188, %194 : vector<4x32xf32>
    %196 = arith.mulf %195, %195 : vector<4x32xf32>
    %cst_123 = arith.constant dense<0.000000e+00> : vector<32xf32>
    %197 = vector.multi_reduction <add>, %196, %cst_123 [0] : vector<4x32xf32> to vector<32xf32>
    %198 = vector.shape_cast %197 : vector<32xf32> to vector<1x32xf32>
    %cst_124 = arith.constant dense<0.000000e+00> : vector<1x32xf32>
    %199 = tpu.matmul %198, %0, %cst_124 {dimension_numbers = #tpu.dot_dimension_numbers<[1], [0], [0], [1], [0, 0, 1, 1], [], []>} : vector<1x32xf32>, vector<32x32xf32>, vector<1x32xf32> -> vector<1x32xf32>
    %cst_125 = arith.constant 1.250000e-01 : f32
    %200 = vector.broadcast %cst_125 : f32 to vector<1x32xf32>
    %201 = arith.mulf %199, %200 : vector<1x32xf32>
    %cst_126 = arith.constant 9.99999974E-6 : f32
    %202 = vector.broadcast %cst_126 : f32 to vector<1x32xf32>
    %203 = arith.addf %201, %202 : vector<1x32xf32>
    %204 = math.rsqrt %203 : vector<1x32xf32>
    %205 = vector.broadcast %204 : vector<1x32xf32> to vector<4x32xf32>
    %206 = arith.mulf %195, %205 : vector<4x32xf32>
    %207 = vector.broadcast %172 : vector<1x32xf32> to vector<4x32xf32>
    %208 = arith.mulf %206, %207 : vector<4x32xf32>
    %209 = vector.broadcast %173 : vector<1x32xf32> to vector<4x32xf32>
    %210 = arith.addf %208, %209 : vector<4x32xf32>
    %cst_127 = arith.constant 5.000000e-01 : f32
    %211 = vector.broadcast %cst_127 : f32 to vector<4x32xf32>
    %212 = arith.mulf %211, %210 : vector<4x32xf32>
    %cst_128 = arith.constant 0.707106769 : f32
    %213 = vector.broadcast %cst_128 : f32 to vector<4x32xf32>
    %214 = arith.mulf %210, %213 : vector<4x32xf32>
    %215 = math.erf %214 : vector<4x32xf32>
    %cst_129 = arith.constant 1.000000e+00 : f32
    %216 = vector.broadcast %cst_129 : f32 to vector<4x32xf32>
    %217 = arith.addf %216, %215 : vector<4x32xf32>
    %218 = arith.mulf %212, %217 : vector<4x32xf32>
    %cst_130 = arith.constant 0.000000e+00 : f32
    %219 = vector.broadcast %cst_130 : f32 to vector<1x32xf32>
    %c0_131 = arith.constant 0 : index
    %c0_132 = arith.constant 0 : index
    %220 = vector.load %arg7[%c0_131, %c0_132] : memref<40x32xf32, #tpu.memory_space<vmem>>, vector<1x32xf32>
    tpu.vector_store %arg7[%c0_131, %c0_132], %219 {strides = array<i32>} : memref<40x32xf32, #tpu.memory_space<vmem>>, vector<1x32xf32>,
    %cst_133 = arith.constant 0.000000e+00 : f32
    %221 = vector.broadcast %cst_133 : f32 to vector<1x32xf32>
    %c5 = arith.constant 5 : index
    %c0_134 = arith.constant 0 : index
    %222 = vector.load %arg7[%c5, %c0_134] : memref<40x32xf32, #tpu.memory_space<vmem>>, vector<1x32xf32>
    tpu.vector_store %arg7[%c5, %c0_134], %221 {strides = array<i32>} : memref<40x32xf32, #tpu.memory_space<vmem>>, vector<1x32xf32>,
    %c1_135 = arith.constant 1 : index
    %c0_136 = arith.constant 0 : index
    %223 = vector.load %arg7[%c1_135, %c0_136] : memref<40x32xf32, #tpu.memory_space<vmem>>, vector<4x32xf32>
    tpu.vector_store %arg7[%c1_135, %c0_136], %218 {strides = array<i32>} : memref<40x32xf32, #tpu.memory_space<vmem>>, vector<4x32xf32>,
    %c4 = arith.constant 4 : index
    %c0_137 = arith.constant 0 : index
    %c0_138 = arith.constant 0 : index
    %224 = vector.load %arg2[%c4, %c0_137, %c0_138] : memref<6x96x32xf32, #tpu.memory_space<vmem>>, vector<1x96x32xf32>
    %225 = vector.shape_cast %224 : vector<1x96x32xf32> to vector<96x32xf32>
    %c4_139 = arith.constant 4 : index
    %c0_140 = arith.constant 0 : index
    %226 = vector.load %arg3[%c4_139, %c0_140] : memref<18x32xf32, #tpu.memory_space<vmem>>, vector<1x32xf32>
    %c10 = arith.constant 10 : index
    %c0_141 = arith.constant 0 : index
    %227 = vector.load %arg3[%c10, %c0_141] : memref<18x32xf32, #tpu.memory_space<vmem>>, vector<1x32xf32>
    %c16 = arith.constant 16 : index
    %c0_142 = arith.constant 0 : index
    %228 = vector.load %arg3[%c16, %c0_142] : memref<18x32xf32, #tpu.memory_space<vmem>>, vector<1x32xf32>
    %cst_143 = arith.constant 0.000000e+00 : f32
    %229 = vector.broadcast %cst_143 : f32 to vector<2x32xf32>
    %c0_144 = arith.constant 0 : index
    %c0_145 = arith.constant 0 : index
    %230 = tpu.strided_load %arg7[%c0_144, %c0_145] {strides = array<i32: 2, 1>} : memref<40x32xf32, #tpu.memory_space<vmem>>, vector<2x32xf32>
    %231 = vector.extract_strided_slice %225 {offsets = [0, 0], sizes = [32, 32], strides = [1, 1]} : vector<96x32xf32> to vector<32x32xf32>
    %cst_146 = arith.constant dense<0.000000e+00> : vector<2x32xf32>
    %232 = tpu.matmul %230, %231, %cst_146 {dimension_numbers = #tpu.dot_dimension_numbers<[1], [0], [0], [1], [0, 0, 1, 1], [], []>} : vector<2x32xf32>, vector<32x32xf32>, vector<2x32xf32> -> vector<2x32xf32>
    %233 = arith.addf %229, %232 : vector<2x32xf32>
    %c1_147 = arith.constant 1 : index
    %c0_148 = arith.constant 0 : index
    %234 = tpu.strided_load %arg7[%c1_147, %c0_148] {strides = array<i32: 2, 1>} : memref<40x32xf32, #tpu.memory_space<vmem>>, vector<2x32xf32>
    %235 = vector.extract_strided_slice %225 {offsets = [32, 0], sizes = [32, 32], strides = [1, 1]} : vector<96x32xf32> to vector<32x32xf32>
    %cst_149 = arith.constant dense<0.000000e+00> : vector<2x32xf32>
    %236 = tpu.matmul %234, %235, %cst_149 {dimension_numbers = #tpu.dot_dimension_numbers<[1], [0], [0], [1], [0, 0, 1, 1], [], []>} : vector<2x32xf32>, vector<32x32xf32>, vector<2x32xf32> -> vector<2x32xf32>
    %237 = arith.addf %233, %236 : vector<2x32xf32>
    %c2_150 = arith.constant 2 : index
    %c0_151 = arith.constant 0 : index
    %238 = tpu.strided_load %arg7[%c2_150, %c0_151] {strides = array<i32: 2, 1>} : memref<40x32xf32, #tpu.memory_space<vmem>>, vector<2x32xf32>
    %239 = vector.extract_strided_slice %225 {offsets = [64, 0], sizes = [32, 32], strides = [1, 1]} : vector<96x32xf32> to vector<32x32xf32>
    %cst_152 = arith.constant dense<0.000000e+00> : vector<2x32xf32>
    %240 = tpu.matmul %238, %239, %cst_152 {dimension_numbers = #tpu.dot_dimension_numbers<[1], [0], [0], [1], [0, 0, 1, 1], [], []>} : vector<2x32xf32>, vector<32x32xf32>, vector<2x32xf32> -> vector<2x32xf32>
    %241 = arith.addf %237, %240 : vector<2x32xf32>
    %242 = vector.broadcast %226 : vector<1x32xf32> to vector<2x32xf32>
    %243 = arith.addf %241, %242 : vector<2x32xf32>
    %cst_153 = arith.constant dense<0.000000e+00> : vector<32xf32>
    %244 = vector.multi_reduction <add>, %243, %cst_153 [0] : vector<2x32xf32> to vector<32xf32>
    %245 = vector.shape_cast %244 : vector<32xf32> to vector<1x32xf32>
    %cst_154 = arith.constant dense<0.000000e+00> : vector<1x32xf32>
    %246 = tpu.matmul %245, %0, %cst_154 {dimension_numbers = #tpu.dot_dimension_numbers<[1], [0], [0], [1], [0, 0, 1, 1], [], []>} : vector<1x32xf32>, vector<32x32xf32>, vector<1x32xf32> -> vector<1x32xf32>
    %cst_155 = arith.constant 2.500000e-01 : f32
    %247 = vector.broadcast %cst_155 : f32 to vector<1x32xf32>
    %248 = arith.mulf %246, %247 : vector<1x32xf32>
    %249 = vector.broadcast %248 : vector<1x32xf32> to vector<2x32xf32>
    %250 = arith.subf %243, %249 : vector<2x32xf32>
    %251 = arith.mulf %250, %250 : vector<2x32xf32>
    %cst_156 = arith.constant dense<0.000000e+00> : vector<32xf32>
    %252 = vector.multi_reduction <add>, %251, %cst_156 [0] : vector<2x32xf32> to vector<32xf32>
    %253 = vector.shape_cast %252 : vector<32xf32> to vector<1x32xf32>
    %cst_157 = arith.constant dense<0.000000e+00> : vector<1x32xf32>
    %254 = tpu.matmul %253, %0, %cst_157 {dimension_numbers = #tpu.dot_dimension_numbers<[1], [0], [0], [1], [0, 0, 1, 1], [], []>} : vector<1x32xf32>, vector<32x32xf32>, vector<1x32xf32> -> vector<1x32xf32>
    %cst_158 = arith.constant 2.500000e-01 : f32
    %255 = vector.broadcast %cst_158 : f32 to vector<1x32xf32>
    %256 = arith.mulf %254, %255 : vector<1x32xf32>
    %cst_159 = arith.constant 9.99999974E-6 : f32
    %257 = vector.broadcast %cst_159 : f32 to vector<1x32xf32>
    %258 = arith.addf %256, %257 : vector<1x32xf32>
    %259 = math.rsqrt %258 : vector<1x32xf32>
    %260 = vector.broadcast %259 : vector<1x32xf32> to vector<2x32xf32>
    %261 = arith.mulf %250, %260 : vector<2x32xf32>
    %262 = vector.broadcast %227 : vector<1x32xf32> to vector<2x32xf32>
    %263 = arith.mulf %261, %262 : vector<2x32xf32>
    %264 = vector.broadcast %228 : vector<1x32xf32> to vector<2x32xf32>
    %265 = arith.addf %263, %264 : vector<2x32xf32>
    %cst_160 = arith.constant 5.000000e-01 : f32
    %266 = vector.broadcast %cst_160 : f32 to vector<2x32xf32>
    %267 = arith.mulf %266, %265 : vector<2x32xf32>
    %cst_161 = arith.constant 0.707106769 : f32
    %268 = vector.broadcast %cst_161 : f32 to vector<2x32xf32>
    %269 = arith.mulf %265, %268 : vector<2x32xf32>
    %270 = math.erf %269 : vector<2x32xf32>
    %cst_162 = arith.constant 1.000000e+00 : f32
    %271 = vector.broadcast %cst_162 : f32 to vector<2x32xf32>
    %272 = arith.addf %271, %270 : vector<2x32xf32>
    %273 = arith.mulf %267, %272 : vector<2x32xf32>
    %cst_163 = arith.constant 0.000000e+00 : f32
    %274 = vector.broadcast %cst_163 : f32 to vector<1x32xf32>
    %c0_164 = arith.constant 0 : index
    %c0_165 = arith.constant 0 : index
    %275 = vector.load %arg6[%c0_164, %c0_165] : memref<40x32xf32, #tpu.memory_space<vmem>>, vector<1x32xf32>
    tpu.vector_store %arg6[%c0_164, %c0_165], %274 {strides = array<i32>} : memref<40x32xf32, #tpu.memory_space<vmem>>, vector<1x32xf32>,
    %cst_166 = arith.constant 0.000000e+00 : f32
    %276 = vector.broadcast %cst_166 : f32 to vector<1x32xf32>
    %c3_167 = arith.constant 3 : index
    %c0_168 = arith.constant 0 : index
    %277 = vector.load %arg6[%c3_167, %c0_168] : memref<40x32xf32, #tpu.memory_space<vmem>>, vector<1x32xf32>
    tpu.vector_store %arg6[%c3_167, %c0_168], %276 {strides = array<i32>} : memref<40x32xf32, #tpu.memory_space<vmem>>, vector<1x32xf32>,
    %c1_169 = arith.constant 1 : index
    %c0_170 = arith.constant 0 : index
    %278 = vector.load %arg6[%c1_169, %c0_170] : memref<40x32xf32, #tpu.memory_space<vmem>>, vector<2x32xf32>
    tpu.vector_store %arg6[%c1_169, %c0_170], %273 {strides = array<i32>} : memref<40x32xf32, #tpu.memory_space<vmem>>, vector<2x32xf32>,
    %c5_171 = arith.constant 5 : index
    %c0_172 = arith.constant 0 : index
    %c0_173 = arith.constant 0 : index
    %279 = vector.load %arg2[%c5_171, %c0_172, %c0_173] : memref<6x96x32xf32, #tpu.memory_space<vmem>>, vector<1x96x32xf32>
    %280 = vector.shape_cast %279 : vector<1x96x32xf32> to vector<96x32xf32>
    %c5_174 = arith.constant 5 : index
    %c0_175 = arith.constant 0 : index
    %281 = vector.load %arg3[%c5_174, %c0_175] : memref<18x32xf32, #tpu.memory_space<vmem>>, vector<1x32xf32>
    %c11 = arith.constant 11 : index
    %c0_176 = arith.constant 0 : index
    %282 = vector.load %arg3[%c11, %c0_176] : memref<18x32xf32, #tpu.memory_space<vmem>>, vector<1x32xf32>
    %c17_177 = arith.constant 17 : index
    %c0_178 = arith.constant 0 : index
    %283 = vector.load %arg3[%c17_177, %c0_178] : memref<18x32xf32, #tpu.memory_space<vmem>>, vector<1x32xf32>
    %cst_179 = arith.constant 0.000000e+00 : f32
    %284 = vector.broadcast %cst_179 : f32 to vector<1x32xf32>
    %c0_180 = arith.constant 0 : index
    %c0_181 = arith.constant 0 : index
    %285 = vector.load %arg6[%c0_180, %c0_181] : memref<40x32xf32, #tpu.memory_space<vmem>>, vector<1x32xf32>
    %286 = vector.extract_strided_slice %280 {offsets = [0, 0], sizes = [32, 32], strides = [1, 1]} : vector<96x32xf32> to vector<32x32xf32>
    %cst_182 = arith.constant dense<0.000000e+00> : vector<1x32xf32>
    %287 = tpu.matmul %285, %286, %cst_182 {dimension_numbers = #tpu.dot_dimension_numbers<[1], [0], [0], [1], [0, 0, 1, 1], [], []>} : vector<1x32xf32>, vector<32x32xf32>, vector<1x32xf32> -> vector<1x32xf32>
    %288 = arith.addf %284, %287 : vector<1x32xf32>
    %c1_183 = arith.constant 1 : index
    %c0_184 = arith.constant 0 : index
    %289 = vector.load %arg6[%c1_183, %c0_184] : memref<40x32xf32, #tpu.memory_space<vmem>>, vector<1x32xf32>
    %290 = vector.extract_strided_slice %280 {offsets = [32, 0], sizes = [32, 32], strides = [1, 1]} : vector<96x32xf32> to vector<32x32xf32>
    %cst_185 = arith.constant dense<0.000000e+00> : vector<1x32xf32>
    %291 = tpu.matmul %289, %290, %cst_185 {dimension_numbers = #tpu.dot_dimension_numbers<[1], [0], [0], [1], [0, 0, 1, 1], [], []>} : vector<1x32xf32>, vector<32x32xf32>, vector<1x32xf32> -> vector<1x32xf32>
    %292 = arith.addf %288, %291 : vector<1x32xf32>
    %c2_186 = arith.constant 2 : index
    %c0_187 = arith.constant 0 : index
    %293 = vector.load %arg6[%c2_186, %c0_187] : memref<40x32xf32, #tpu.memory_space<vmem>>, vector<1x32xf32>
    %294 = vector.extract_strided_slice %280 {offsets = [64, 0], sizes = [32, 32], strides = [1, 1]} : vector<96x32xf32> to vector<32x32xf32>
    %cst_188 = arith.constant dense<0.000000e+00> : vector<1x32xf32>
    %295 = tpu.matmul %293, %294, %cst_188 {dimension_numbers = #tpu.dot_dimension_numbers<[1], [0], [0], [1], [0, 0, 1, 1], [], []>} : vector<1x32xf32>, vector<32x32xf32>, vector<1x32xf32> -> vector<1x32xf32>
    %296 = arith.addf %292, %295 : vector<1x32xf32>
    %297 = arith.addf %296, %281 : vector<1x32xf32>
    %cst_189 = arith.constant dense<0.000000e+00> : vector<32xf32>
    %298 = vector.multi_reduction <add>, %297, %cst_189 [0] : vector<1x32xf32> to vector<32xf32>
    %299 = vector.shape_cast %298 : vector<32xf32> to vector<1x32xf32>
    %cst_190 = arith.constant dense<0.000000e+00> : vector<1x32xf32>
    %300 = tpu.matmul %299, %0, %cst_190 {dimension_numbers = #tpu.dot_dimension_numbers<[1], [0], [0], [1], [0, 0, 1, 1], [], []>} : vector<1x32xf32>, vector<32x32xf32>, vector<1x32xf32> -> vector<1x32xf32>
    %cst_191 = arith.constant 5.000000e-01 : f32
    %301 = vector.broadcast %cst_191 : f32 to vector<1x32xf32>
    %302 = arith.mulf %300, %301 : vector<1x32xf32>
    %303 = arith.subf %297, %302 : vector<1x32xf32>
    %304 = arith.mulf %303, %303 : vector<1x32xf32>
    %cst_192 = arith.constant dense<0.000000e+00> : vector<32xf32>
    %305 = vector.multi_reduction <add>, %304, %cst_192 [0] : vector<1x32xf32> to vector<32xf32>
    %306 = vector.shape_cast %305 : vector<32xf32> to vector<1x32xf32>
    %cst_193 = arith.constant dense<0.000000e+00> : vector<1x32xf32>
    %307 = tpu.matmul %306, %0, %cst_193 {dimension_numbers = #tpu.dot_dimension_numbers<[1], [0], [0], [1], [0, 0, 1, 1], [], []>} : vector<1x32xf32>, vector<32x32xf32>, vector<1x32xf32> -> vector<1x32xf32>
    %cst_194 = arith.constant 5.000000e-01 : f32
    %308 = vector.broadcast %cst_194 : f32 to vector<1x32xf32>
    %309 = arith.mulf %307, %308 : vector<1x32xf32>
    %cst_195 = arith.constant 9.99999974E-6 : f32
    %310 = vector.broadcast %cst_195 : f32 to vector<1x32xf32>
    %311 = arith.addf %309, %310 : vector<1x32xf32>
    %312 = math.rsqrt %311 : vector<1x32xf32>
    %313 = arith.mulf %303, %312 : vector<1x32xf32>
    %314 = arith.mulf %313, %282 : vector<1x32xf32>
    %315 = arith.addf %314, %283 : vector<1x32xf32>
    %cst_196 = arith.constant 5.000000e-01 : f32
    %316 = vector.broadcast %cst_196 : f32 to vector<1x32xf32>
    %317 = arith.mulf %316, %315 : vector<1x32xf32>
    %cst_197 = arith.constant 0.707106769 : f32
    %318 = vector.broadcast %cst_197 : f32 to vector<1x32xf32>
    %319 = arith.mulf %315, %318 : vector<1x32xf32>
    %320 = math.erf %319 : vector<1x32xf32>
    %cst_198 = arith.constant 1.000000e+00 : f32
    %321 = vector.broadcast %cst_198 : f32 to vector<1x32xf32>
    %322 = arith.addf %321, %320 : vector<1x32xf32>
    %323 = arith.mulf %317, %322 : vector<1x32xf32>
    %c0_199 = arith.constant 0 : index
    %c0_200 = arith.constant 0 : index
    %c0_201 = arith.constant 0 : index
    %324 = vector.load %arg5[%c0_199, %c0_200, %c0_201] : memref<1x1x32xf32, #tpu.memory_space<vmem>>, vector<1x1x32xf32>
    %325 = vector.shape_cast %324 : vector<1x1x32xf32> to vector<1x32xf32>
    %326 = vector.shape_cast %323 : vector<1x32xf32> to vector<1x1x32xf32>
    tpu.vector_store %arg5[%c0_199, %c0_200, %c0_201], %326 {strides = array<i32>} : memref<1x1x32xf32, #tpu.memory_space<vmem>>, vector<1x1x32xf32>,
    return
  }
  func.func @transform_0(%arg0: i32) -> (i32, i32, i32) {
    %c0_i32 = arith.constant 0 : i32
    %c0_i32_0 = arith.constant 0 : i32
    %c0_i32_1 = arith.constant 0 : i32
    return %arg0, %c0_i32, %c0_i32_0 : i32, i32, i32
  }
  func.func @transform_1(%arg0: i32) -> (i32, i32, i32) {
    %c0_i32 = arith.constant 0 : i32
    %c0_i32_0 = arith.constant 0 : i32
    %c0_i32_1 = arith.constant 0 : i32
    %c0_i32_2 = arith.constant 0 : i32
    return %c0_i32, %c0_i32_0, %c0_i32_1 : i32, i32, i32
  }
  func.func @transform_2(%arg0: i32) -> (i32, i32) {
    %c0_i32 = arith.constant 0 : i32
    %c0_i32_0 = arith.constant 0 : i32
    %c0_i32_1 = arith.constant 0 : i32
    return %c0_i32, %c0_i32_0 : i32, i32
  }
  func.func @transform_3(%arg0: i32) -> (i32, i32) {
    %c0_i32 = arith.constant 0 : i32
    %c0_i32_0 = arith.constant 0 : i32
    %c0_i32_1 = arith.constant 0 : i32
    return %c0_i32, %c0_i32_0 : i32, i32
  }
  func.func @transform_4(%arg0: i32) -> (i32, i32, i32) {
    %c0_i32 = arith.constant 0 : i32
    %c0_i32_0 = arith.constant 0 : i32
    %c0_i32_1 = arith.constant 0 : i32
    return %arg0, %c0_i32, %c0_i32_0 : i32, i32, i32
  }
}

</mosaic_0001>

<llo_original>
// kernel: tpu_custom_call.1
$region0: #{tpu_custom_call.1}
  #allocation0 [shape = 'u32[]', space=smem, size = 0x4, offset = 0x4, fixed_abs, tag = 'smem constant byte address 0x4 - core index']
  #allocation1 [shape = 'u32[144,128]{1,0:T(1,128)}', space=vmem, size = 0x12000, scoped, tag = 'internal scratch']
  #allocation2 [shape = 'f32[40,32]{1,0:T(8,128)}', space=vmem, size = 0x5000, scoped, tag = 'scratch operand']
  #allocation3 [shape = 'f32[40,32]{1,0:T(8,128)}', space=vmem, size = 0x5000, scoped, tag = 'scratch operand']
  %s0 = inlined_call_operand.vmem [shape: f32[2,104,32], index: 0, kind: input, shape index: {}]
  %s1 = inlined_call_operand.vmem [shape: f32[6,96,32], index: 1, kind: input, shape index: {}]
  %s2 = inlined_call_operand.vmem [shape: f32[18,32], index: 2, kind: input, shape index: {}]
  %s3 = inlined_call_operand.vmem [shape: f32[32,32], index: 3, kind: input, shape index: {}]
  %s4 = inlined_call_operand.hbm [shape: f32[2,1,32], index: 4, kind: output, shape index: {}]
  %s5 = sld [smem:[#allocation0]]
  $region49: #{tpu_custom_call.1} parent=0
    _
  %s7 = ssub.s32 1, %s5
  %s8 = scalar_select 0, %s7, %s5
  $region1: #{tpu_custom_call.1} parent=0
    #allocation4 [shape = 'u8[1024]{0}', space=vmem, size = 0x400, scoped, tag = 'output window, operand 0']
    #allocation5 [shape = 's32[2]{0}', space=sflag, size = 0x8, scoped, tag = 'scoped memory for tpu_custom_call.1']
    %9 = vsyncpa [#allocation5], 0
    %s10 = scalar_lea.sflag [#allocation5], 1
    %11 = vsyncpa %s10, 0
    loop: start=0, step=1, limit=4
    $region2: #{tpu_custom_call.1} parent=1 // loop_pre_header
      _
    $region3: #{tpu_custom_call.1} parent=1 // loop_header
      %s13 = sphi 0, %s17
      %p14 = scmp.ge.s32.totalorder %s13, 4
      %s23 = sphi 0, %s25
      %s26 = sphi 0, %s23
      %s27 = sphi 0, %s26
      %s43 = sphi 0, %s27
      %s47 = sphi 0, %s47
      %s49 = sphi 0, %s47
      %s50 = sphi 0, %s49
      %s64 = sphi 0, %s50
      %s68 = sphi 0, %s68
      %s70 = sphi 0, %s68
      %s71 = sphi 0, %s70
      %s85 = sphi 0, %s71
      %s89 = sphi 0, %s89
      %s91 = sphi 0, %s89
      %s92 = sphi 0, %s91
      %s106 = sphi 0, %s92
      %s112 = sphi 0, %s114
      %s115 = sphi 0, %s112
      %s116 = sphi 0, %s115
      %s132 = sphi 0, %s116
    $region4: #{tpu_custom_call.1} parent=1 // loop_header_branch
      %16 = sbr.rel (%p14) target = $region8
    $region5: #{tpu_custom_call.1} parent=1 // loop_body
      %s18 = ssub.s32 %s13, 1
      %s19 = ssub.s32 %s13, 2
      %s20 = sadd.s32 %s13, 1
      %s21 = ssub.s32 %s13, %s20
      %p22 = scmp.eq.s32.totalorder %s21, 0
      %s24 = sadd.s32 %s23, 1
      %s25 = scalar_select %p22, %s23, %s24
      %p28 = pneg %p22
      %p29 = scmp.eq.s32.totalorder %s13, 1
      %p30 = por %p28, %p29
      %p31 = scmp.ne.s32.totalorder %s23, %s26
      %p32 = scmp.eq.s32.totalorder %s13, 0
      %p33 = por %p31, %p32
      %p34 = scmp.ne.s32.totalorder %s23, %s26
      %p35 = scmp.eq.s32.totalorder %s18, 1
      %p36 = por %p34, %p35
      %p37 = scmp.ne.s32.totalorder %s26, %s27
      %p38 = scmp.eq.s32.totalorder %s18, 0
      %p39 = por %p37, %p38
      %p40 = scmp.ne.s32.totalorder %s26, %s27
      %p41 = scmp.eq.s32.totalorder %s19, 1
      %p42 = por %p40, %p41
      %p44 = scmp.ne.s32.totalorder %s27, %s43
      %p45 = scmp.eq.s32.totalorder %s19, 0
      %p46 = por %p44, %p45
      %s48 = sadd.s32 %s47, 1
      %p51 = scmp.eq.s32.totalorder %s13, 1
      %p52 = scmp.ne.s32.totalorder %s47, %s49
      %p53 = scmp.eq.s32.totalorder %s13, 0
      %p54 = por %p52, %p53
      %p55 = scmp.ne.s32.totalorder %s47, %s49
      %p56 = scmp.eq.s32.totalorder %s18, 1
      %p57 = por %p55, %p56
      %p58 = scmp.ne.s32.totalorder %s49, %s50
      %p59 = scmp.eq.s32.totalorder %s18, 0
      %p60 = por %p58, %p59
      %p61 = scmp.ne.s32.totalorder %s49, %s50
      %p62 = scmp.eq.s32.totalorder %s19, 1
      %p63 = por %p61, %p62
      %p65 = scmp.ne.s32.totalorder %s50, %s64
      %p66 = scmp.eq.s32.totalorder %s19, 0
      %p67 = por %p65, %p66
      %s69 = sadd.s32 %s68, 1
      %p72 = scmp.eq.s32.totalorder %s13, 1
      %p73 = scmp.ne.s32.totalorder %s68, %s70
      %p74 = scmp.eq.s32.totalorder %s13, 0
      %p75 = por %p73, %p74
      %p76 = scmp.ne.s32.totalorder %s68, %s70
      %p77 = scmp.eq.s32.totalorder %s18, 1
      %p78 = por %p76, %p77
      %p79 = scmp.ne.s32.totalorder %s70, %s71
      %p80 = scmp.eq.s32.totalorder %s18, 0
      %p81 = por %p79, %p80
      %p82 = scmp.ne.s32.totalorder %s70, %s71
      %p83 = scmp.eq.s32.totalorder %s19, 1
      %p84 = por %p82, %p83
      %p86 = scmp.ne.s32.totalorder %s71, %s85
      %p87 = scmp.eq.s32.totalorder %s19, 0
      %p88 = por %p86, %p87
      %s90 = sadd.s32 %s89, 1
      %p93 = scmp.eq.s32.totalorder %s13, 1
      %p94 = scmp.ne.s32.totalorder %s89, %s91
      %p95 = scmp.eq.s32.totalorder %s13, 0
      %p96 = por %p94, %p95
      %p97 = scmp.ne.s32.totalorder %s89, %s91
      %p98 = scmp.eq.s32.totalorder %s18, 1
      %p99 = por %p97, %p98
      %p100 = scmp.ne.s32.totalorder %s91, %s92
      %p101 = scmp.eq.s32.totalorder %s18, 0
      %p102 = por %p100, %p101
      %p103 = scmp.ne.s32.totalorder %s91, %s92
      %p104 = scmp.eq.s32.totalorder %s19, 1
      %p105 = por %p103, %p104
      %p107 = scmp.ne.s32.totalorder %s92, %s106
      %p108 = scmp.eq.s32.totalorder %s19, 0
      %p109 = por %p107, %p108
      %s110 = ssub.s32 %s13, %s20
      %p111 = scmp.eq.s32.totalorder %s110, 0
      %s113 = sadd.s32 %s112, 1
      %s114 = scalar_select %p111, %s112, %s113
      %p117 = pneg %p111
      %p118 = scmp.eq.s32.totalorder %s13, 1
      %p119 = por %p117, %p118
      %p120 = scmp.ne.s32.totalorder %s112, %s115
      %p121 = scmp.eq.s32.totalorder %s13, 0
      %p122 = por %p120, %p121
      %p123 = scmp.ne.s32.totalorder %s112, %s115
      %p124 = scmp.eq.s32.totalorder %s18, 1
      %p125 = por %p123, %p124
      %p126 = scmp.ne.s32.totalorder %s115, %s116
      %p127 = scmp.eq.s32.totalorder %s18, 0
      %p128 = por %p126, %p127
      %p129 = scmp.ne.s32.totalorder %s115, %s116
      %p130 = scmp.eq.s32.totalorder %s19, 1
      %p131 = por %p129, %p130
      %p133 = scmp.ne.s32.totalorder %s116, %s132
      %p134 = scmp.eq.s32.totalorder %s19, 0
      %p135 = por %p133, %p134
      %p136 = scmp.le.s32.totalorder 1, %s13
      %p137 = scmp.lt.s32.totalorder %s13, 3
      %p138 = pnand %p136, %p137
      %p139 = pneg %p138
      // Predicated region
      $region9: #{tpu_custom_call.1} parent=5 // pred_check
        _
      $region10: #{tpu_custom_call.1} parent=5 // pred_check_branch
        %141 = sbr.rel (%p138) target = $region12
      $region11: #{tpu_custom_call.1} parent=5 // pred_region
        %s142 = ssub.s32 %s13, 1
        // Predicated region
        $region13: #{tpu_custom_call.1} parent=11 // pred_check
          %p143 = pneg %p60
        $region14: #{tpu_custom_call.1} parent=11 // pred_check_branch
          %145 = sbr.rel (%p143) target = $region16
        $region15: #{tpu_custom_call.1} parent=11 // pred_region
          _
        $region16: #{tpu_custom_call.1} parent=11 // pred_fallthru
          _
        // Predicated region
        $region17: #{tpu_custom_call.1} parent=11 // pred_check
          %p146 = pneg %p81
        $region18: #{tpu_custom_call.1} parent=11 // pred_check_branch
          %148 = sbr.rel (%p146) target = $region20
        $region19: #{tpu_custom_call.1} parent=11 // pred_region
          _
        $region20: #{tpu_custom_call.1} parent=11 // pred_fallthru
          _
        // Predicated region
        $region21: #{tpu_custom_call.1} parent=11 // pred_check
          %p149 = pneg %p102
        $region22: #{tpu_custom_call.1} parent=11 // pred_check_branch
          %151 = sbr.rel (%p149) target = $region24
        $region23: #{tpu_custom_call.1} parent=11 // pred_region
          _
        $region24: #{tpu_custom_call.1} parent=11 // pred_fallthru
          _
      $region12: #{tpu_custom_call.1} parent=5 // pred_fallthru
        _
      %p152 = scmp.lt.s32.totalorder %s13, 2
      // Predicated region
      $region25: #{tpu_custom_call.1} parent=5 // pred_check
        %p153 = pneg %p152
      $region26: #{tpu_custom_call.1} parent=5 // pred_check_branch
        %155 = sbr.rel (%p153) target = $region28
      $region27: #{tpu_custom_call.1} parent=5 // pred_region
        // Predicated region
        $region29: #{tpu_custom_call.1} parent=27 // pred_check
          %p156 = pneg %p33
        $region30: #{tpu_custom_call.1} parent=27 // pred_check_branch
          %158 = sbr.rel (%p156) target = $region32
        $region31: #{tpu_custom_call.1} parent=27 // pred_region
          %p159 = scmp.lt.s32.totalorder %s13, 1
          %s160 = scalar_select %p159, %s13, 1
          %s161 = smul.addr %s160, 13
          %s162 = smul.addr %s161, 8
          %s163 = scalar_lea.vmem %s0, %s162
        $region32: #{tpu_custom_call.1} parent=27 // pred_fallthru
          _
      $region28: #{tpu_custom_call.1} parent=5 // pred_fallthru
        _
      %p164 = scmp.le.s32.totalorder 1, %s13
      %p165 = scmp.lt.s32.totalorder %s13, 3
      %p166 = pnand %p164, %p165
      %p167 = pneg %p166
      // Predicated region
      $region33: #{tpu_custom_call.1} parent=5 // pred_check
        _
      $region34: #{tpu_custom_call.1} parent=5 // pred_check_branch
        %169 = sbr.rel (%p166) target = $region36
      $region35: #{tpu_custom_call.1} parent=5 // pred_region
        %s170 = ssub.s32 %s13, 1
        %p171 = scmp.lt.s32.totalorder %s18, 1
        %s172 = scalar_select %p171, %s18, 1
        %s173 = smul.addr %s172, 13
        %s174 = smul.addr %s173, 8
        %s175 = scalar_lea.vmem %s0, %s174
        %p176 = pneg %p39
        %p177 = pneg %p36
        %p178 = pneg %p60
        %p179 = pneg %p57
        %p180 = pneg %p81
        %p181 = pneg %p78
        %p182 = pneg %p102
        %p183 = pneg %p99
        %p184 = pneg %p128
        %p185 = pneg %p125
        %s186 = sand.u32 %s115, 1
        %s187 = scalar_lea.sflag [#allocation5], %s186
        %s188 = sand.u32 %s115, 1
        %s189 = scalar_lea.vmem [#allocation4], %s188
        %p190 = scmp.lt.s32.totalorder %s18, 1
        %s191 = scalar_select %p190, %s18, 1
        %s192 = smul.addr %s191, 13
        %s193 = smul.addr %s192, 8
        %s194 = scalar_lea.vmem %s0, %s193
        %v195 = vld [vmem:[%s3] sm:$0xff]
        %v196 = vld [vmem:[%s3 + $0x8] sm:$0xff]
        %v197 = vld [vmem:[%s3 + $0x10] sm:$0xff]
        %v198 = vld [vmem:[%s3 + $0x18] sm:$0xff]
        %v199 = vld [vmem:[%s1] sm:$0xff]
        %v200 = vld [vmem:[%s1 + $0x8] sm:$0xff]
        %v201 = vld [vmem:[%s1 + $0x10] sm:$0xff]
        %v202 = vld [vmem:[%s1 + $0x18] sm:$0xff]
        %v203 = vld [vmem:[%s1 + $0x20] sm:$0xff]
        %v204 = vld [vmem:[%s1 + $0x28] sm:$0xff]
        %v205 = vld [vmem:[%s1 + $0x30] sm:$0xff]
        %v206 = vld [vmem:[%s1 + $0x38] sm:$0xff]
        %v207 = vld [vmem:[%s1 + $0x40] sm:$0xff]
        %v208 = vld [vmem:[%s1 + $0x48] sm:$0xff]
        %v209 = vld [vmem:[%s1 + $0x50] sm:$0xff]
        %v210 = vld [vmem:[%s1 + $0x58] sm:$0xff]
        %v211 = vld [vmem:[%s2] sm:$0x1]
        %v212 = vld [vmem:[%s2 + $0x6] sm:$0x1]
        %v213 = vld [vmem:[%s2 + $0xc] sm:$0x1]
        %v214 = vld [vmem:[%s194] ss:$3 sm:$0xff]
        %s215 = scalar_lea.vmem %s194, 24
        %v216 = vld [vmem:[%s215] ss:$3 sm:$0xff]
        %s217 = scalar_lea.vmem %s194, 48
        %v218 = vld [vmem:[%s217] ss:$3 sm:$0xff]
        %s219 = scalar_lea.vmem %s194, 72
        %v220 = vld [vmem:[%s219] ss:$3 sm:$0xff]
        %s221 = scalar_lea.vmem %s194, 1
        %v222 = vld [vmem:[%s221] ss:$3 sm:$0xff]
        %s223 = scalar_lea.vmem %s194, 25
        %v224 = vld [vmem:[%s223] ss:$3 sm:$0xff]
        %s225 = scalar_lea.vmem %s194, 49
        %v226 = vld [vmem:[%s225] ss:$3 sm:$0xff]
        %s227 = scalar_lea.vmem %s194, 73
        %v228 = vld [vmem:[%s227] ss:$3 sm:$0xff]
        %vm229 = vcmask 261120
        %v231 = vsel %vm229, %v222, 0
        %v234 = vsel %vm229, %v224, 0
        %v237 = vsel %vm229, %v226, 0
        %v240 = vsel %vm229, %v228, 0
        %242 = vmatprep.subr.mxu0 0.0
        %243 = vmatpush1.msra.mxu0 %v203
        %244 = vmatprep.subr.mxu0 0.0
        %245 = vmatpush1.msra.mxu0 %v204
        %246 = vmatprep.subr.mxu0 0.0
        %247 = vmatpush1.msra.mxu0 %v205
        %248 = vmatprep.subr.mxu0 0.0
        %249 = vmatpush1.msra.mxu0 %v206
        %250 = vmatprep.subr.mxu0 0.0
        %251 = vmatpush1.msra.mxu0 0.0
        %252 = vmatprep.subr.mxu0 0.0
        %253 = vmatpush1.msra.mxu0 0.0
        %254 = vmatprep.subr.mxu0 0.0
        %255 = vmatpush1.msra.mxu0 0.0
        %256 = vmatprep.subr.mxu0 0.0
        %257 = vmatpush1.msra.mxu0 0.0
        %258 = vmatprep.subr.mxu0 0.0
        %259 = vmatpush1.msra.mxu0 0.0
        %260 = vmatprep.subr.mxu0 0.0
        %261 = vmatpush1.msra.mxu0 0.0
        %262 = vmatprep.subr.mxu0 0.0
        %263 = vmatpush1.msra.mxu0 0.0
        %264 = vmatprep.subr.mxu0 0.0
        %265 = vmatpush1.msra.mxu0 0.0
        %266 = vmatprep.subr.mxu0 0.0
        %267 = vmatpush1.msra.mxu0 0.0
        %268 = vmatprep.subr.mxu0 0.0
        %269 = vmatpush1.msra.mxu0 0.0
        %270 = vmatprep.subr.mxu0 0.0
        %271 = vmatpush1.msra.mxu0 0.0
        %272 = vmatprep.subr.mxu0 0.0
        %273 = vmatpush1.msra.mxu0 0.0
        %274 = vmatprep.subr.mxu0 0.0
        %275 = vmatpush1.msra.mxu0 0.0
        %276 = vmatprep.subr.mxu0 0.0
        %277 = vmatpush1.msra.mxu0 0.0
        %278 = vmatprep.subr.mxu0 0.0
        %279 = vmatpush1.msra.mxu0 0.0
        %280 = vmatprep.subr.mxu0 0.0
        %281 = vmatpush1.msra.mxu0 0.0
        %282 = vmatprep.subr.mxu0 0.0
        %283 = vmatpush1.msra.mxu0 0.0
        %284 = vmatprep.subr.mxu0 0.0
        %285 = vmatpush1.msra.mxu0 0.0
        %286 = vmatprep.subr.mxu0 0.0
        %287 = vmatpush1.msra.mxu0 0.0
        %288 = vmatprep.subr.mxu0 0.0
        %289 = vmatpush1.msra.mxu0 0.0
        %290 = vmatprep.subr.mxu0 0.0
        %291 = vmatpush1.msra.mxu0 0.0
        %292 = vmatprep.subr.mxu0 0.0
        %293 = vmatpush1.msra.mxu0 0.0
        %294 = vmatprep.subr.mxu0 0.0
        %295 = vmatpush1.msra.mxu0 0.0
        %296 = vmatprep.subr.mxu0 0.0
        %297 = vmatpush1.msra.mxu0 0.0
        %298 = vmatprep.subr.mxu0 0.0
        %299 = vmatpush1.msra.mxu0 0.0
        %300 = vmatprep.subr.mxu0 0.0
        %301 = vmatpush1.msra.mxu0 0.0
        %302 = vmatprep.subr.mxu0 0.0
        %303 = vmatpush1.msra.mxu0 0.0
        %304 = vmatprep.subr.mxu0 0.0
        %305 = vmatpush1.msra.mxu0 0.0
        %306 = vmatprep.mubr.f32.mxu0 0.0
        %307 = vmatmul.mubr.f32.gmra.mrb[0].mxu0 %v231
        %v308 = vpop.f32.mrb[0].mxu0
        %v309 = vadd.f32 0.0, %v308
        %v310 = vpop.f32.mrb[0].mxu0
        %311 = vmatprep.mubr.f32.mxu0 0.0
        %312 = vmatmul.mubr.f32.gmra.mrb[0].mxu0 %v234
        %v313 = vpop.f32.mrb[0].mxu0
        %v314 = vadd.f32 0.0, %v313
        %v315 = vpop.f32.mrb[0].mxu0
        %316 = vmatprep.mubr.f32.mxu0 0.0
        %317 = vmatmul.mubr.f32.gmra.mrb[0].mxu0 %v237
        %v318 = vpop.f32.mrb[0].mxu0
        %v319 = vadd.f32 0.0, %v318
        %v320 = vpop.f32.mrb[0].mxu0
        %321 = vmatprep.mubr.f32.mxu0 0.0
        %322 = vmatmul.mubr.f32.gmra.mrb[0].mxu0 %v240
        %v323 = vpop.f32.mrb[0].mxu0
        %v324 = vadd.f32 0.0, %v323
        %v325 = vpop.f32.mrb[0].mxu0
        %326 = vdwg.mxu0
        %v328 = vsel %vm229, %v214, 0
        %v331 = vsel %vm229, %v216, 0
        %v334 = vsel %vm229, %v218, 0
        %v337 = vsel %vm229, %v220, 0
        %339 = vmatprep.subr.mxu0 0.0
        %340 = vmatpush1.msra.mxu0 %v199
        %341 = vmatprep.subr.mxu0 0.0
        %342 = vmatpush1.msra.mxu0 %v200
        %343 = vmatprep.subr.mxu0 0.0
        %344 = vmatpush1.msra.mxu0 %v201
        %345 = vmatprep.subr.mxu0 0.0
        %346 = vmatpush1.msra.mxu0 %v202
        %347 = vmatprep.subr.mxu0 0.0
        %348 = vmatpush1.msra.mxu0 0.0
        %349 = vmatprep.subr.mxu0 0.0
        %350 = vmatpush1.msra.mxu0 0.0
        %351 = vmatprep.subr.mxu0 0.0
        %352 = vmatpush1.msra.mxu0 0.0
        %353 = vmatprep.subr.mxu0 0.0
        %354 = vmatpush1.msra.mxu0 0.0
        %355 = vmatprep.subr.mxu0 0.0
        %356 = vmatpush1.msra.mxu0 0.0
        %357 = vmatprep.subr.mxu0 0.0
        %358 = vmatpush1.msra.mxu0 0.0
        %359 = vmatprep.subr.mxu0 0.0
        %360 = vmatpush1.msra.mxu0 0.0
        %361 = vmatprep.subr.mxu0 0.0
        %362 = vmatpush1.msra.mxu0 0.0
        %363 = vmatprep.subr.mxu0 0.0
        %364 = vmatpush1.msra.mxu0 0.0
        %365 = vmatprep.subr.mxu0 0.0
        %366 = vmatpush1.msra.mxu0 0.0
        %367 = vmatprep.subr.mxu0 0.0
        %368 = vmatpush1.msra.mxu0 0.0
        %369 = vmatprep.subr.mxu0 0.0
        %370 = vmatpush1.msra.mxu0 0.0
        %371 = vmatprep.subr.mxu0 0.0
        %372 = vmatpush1.msra.mxu0 0.0
        %373 = vmatprep.subr.mxu0 0.0
        %374 = vmatpush1.msra.mxu0 0.0
        %375 = vmatprep.subr.mxu0 0.0
        %376 = vmatpush1.msra.mxu0 0.0
        %377 = vmatprep.subr.mxu0 0.0
        %378 = vmatpush1.msra.mxu0 0.0
        %379 = vmatprep.subr.mxu0 0.0
        %380 = vmatpush1.msra.mxu0 0.0
        %381 = vmatprep.subr.mxu0 0.0
        %382 = vmatpush1.msra.mxu0 0.0
        %383 = vmatprep.subr.mxu0 0.0
        %384 = vmatpush1.msra.mxu0 0.0
        %385 = vmatprep.subr.mxu0 0.0
        %386 = vmatpush1.msra.mxu0 0.0
        %387 = vmatprep.subr.mxu0 0.0
        %388 = vmatpush1.msra.mxu0 0.0
        %389 = vmatprep.subr.mxu0 0.0
        %390 = vmatpush1.msra.mxu0 0.0
        %391 = vmatprep.subr.mxu0 0.0
        %392 = vmatpush1.msra.mxu0 0.0
        %393 = vmatprep.subr.mxu0 0.0
        %394 = vmatpush1.msra.mxu0 0.0
        %395 = vmatprep.subr.mxu0 0.0
        %396 = vmatpush1.msra.mxu0 0.0
        %397 = vmatprep.subr.mxu0 0.0
        %398 = vmatpush1.msra.mxu0 0.0
        %399 = vmatprep.subr.mxu0 0.0
        %400 = vmatpush1.msra.mxu0 0.0
        %401 = vmatprep.subr.mxu0 0.0
        %402 = vmatpush1.msra.mxu0 0.0
        %403 = vmatprep.mubr.f32.mxu0 0.0
        %404 = vmatmul.mubr.f32.gmra.mrb[0].mxu0 %v328
        %v405 = vpop.f32.mrb[0].mxu0
        %v406 = vadd.f32 %v309, %v405
        %v407 = vpop.f32.mrb[0].mxu0
        %408 = vmatprep.mubr.f32.mxu0 0.0
        %409 = vmatmul.mubr.f32.gmra.mrb[0].mxu0 %v331
        %v410 = vpop.f32.mrb[0].mxu0
        %v411 = vadd.f32 %v314, %v410
        %v412 = vpop.f32.mrb[0].mxu0
        %413 = vmatprep.mubr.f32.mxu0 0.0
        %414 = vmatmul.mubr.f32.gmra.mrb[0].mxu0 %v334
        %v415 = vpop.f32.mrb[0].mxu0
        %v416 = vadd.f32 %v319, %v415
        %v417 = vpop.f32.mrb[0].mxu0
        %418 = vmatprep.mubr.f32.mxu0 0.0
        %419 = vmatmul.mubr.f32.gmra.mrb[0].mxu0 %v337
        %v420 = vpop.f32.mrb[0].mxu0
        %v421 = vadd.f32 %v324, %v420
        %v422 = vpop.f32.mrb[0].mxu0
        %423 = vdwg.mxu0
        %s424 = scalar_lea.vmem %s194, 2
        %v425 = vld [vmem:[%s424] ss:$3 sm:$0xff]
        %s426 = scalar_lea.vmem %s194, 26
        %v427 = vld [vmem:[%s426] ss:$3 sm:$0xff]
        %s428 = scalar_lea.vmem %s194, 50
        %v429 = vld [vmem:[%s428] ss:$3 sm:$0xff]
        %s430 = scalar_lea.vmem %s194, 74
        %v431 = vld [vmem:[%s430] ss:$3 sm:$0xff]
        %v433 = vsel %vm229, %v425, 0
        %v436 = vsel %vm229, %v427, 0
        %v439 = vsel %vm229, %v429, 0
        %v442 = vsel %vm229, %v431, 0
        %444 = vmatprep.subr.mxu0 0.0
        %445 = vmatpush1.msra.mxu0 %v207
        %446 = vmatprep.subr.mxu0 0.0
        %447 = vmatpush1.msra.mxu0 %v208
        %448 = vmatprep.subr.mxu0 0.0
        %449 = vmatpush1.msra.mxu0 %v209
        %450 = vmatprep.subr.mxu0 0.0
        %451 = vmatpush1.msra.mxu0 %v210
        %452 = vmatprep.subr.mxu0 0.0
        %453 = vmatpush1.msra.mxu0 0.0
        %454 = vmatprep.subr.mxu0 0.0
        %455 = vmatpush1.msra.mxu0 0.0
        %456 = vmatprep.subr.mxu0 0.0
        %457 = vmatpush1.msra.mxu0 0.0
        %458 = vmatprep.subr.mxu0 0.0
        %459 = vmatpush1.msra.mxu0 0.0
        %460 = vmatprep.subr.mxu0 0.0
        %461 = vmatpush1.msra.mxu0 0.0
        %462 = vmatprep.subr.mxu0 0.0
        %463 = vmatpush1.msra.mxu0 0.0
        %464 = vmatprep.subr.mxu0 0.0
        %465 = vmatpush1.msra.mxu0 0.0
        %466 = vmatprep.subr.mxu0 0.0
        %467 = vmatpush1.msra.mxu0 0.0
        %468 = vmatprep.subr.mxu0 0.0
        %469 = vmatpush1.msra.mxu0 0.0
        %470 = vmatprep.subr.mxu0 0.0
        %471 = vmatpush1.msra.mxu0 0.0
        %472 = vmatprep.subr.mxu0 0.0
        %473 = vmatpush1.msra.mxu0 0.0
        %474 = vmatprep.subr.mxu0 0.0
        %475 = vmatpush1.msra.mxu0 0.0
        %476 = vmatprep.subr.mxu0 0.0
        %477 = vmatpush1.msra.mxu0 0.0
        %478 = vmatprep.subr.mxu0 0.0
        %479 = vmatpush1.msra.mxu0 0.0
        %480 = vmatprep.subr.mxu0 0.0
        %481 = vmatpush1.msra.mxu0 0.0
        %482 = vmatprep.subr.mxu0 0.0
        %483 = vmatpush1.msra.mxu0 0.0
        %484 = vmatprep.subr.mxu0 0.0
        %485 = vmatpush1.msra.mxu0 0.0
        %486 = vmatprep.subr.mxu0 0.0
        %487 = vmatpush1.msra.mxu0 0.0
        %488 = vmatprep.subr.mxu0 0.0
        %489 = vmatpush1.msra.mxu0 0.0
        %490 = vmatprep.subr.mxu0 0.0
        %491 = vmatpush1.msra.mxu0 0.0
        %492 = vmatprep.subr.mxu0 0.0
        %493 = vmatpush1.msra.mxu0 0.0
        %494 = vmatprep.subr.mxu0 0.0
        %495 = vmatpush1.msra.mxu0 0.0
        %496 = vmatprep.subr.mxu0 0.0
        %497 = vmatpush1.msra.mxu0 0.0
        %498 = vmatprep.subr.mxu0 0.0
        %499 = vmatpush1.msra.mxu0 0.0
        %500 = vmatprep.subr.mxu0 0.0
        %501 = vmatpush1.msra.mxu0 0.0
        %502 = vmatprep.subr.mxu0 0.0
        %503 = vmatpush1.msra.mxu0 0.0
        %504 = vmatprep.subr.mxu0 0.0
        %505 = vmatpush1.msra.mxu0 0.0
        %506 = vmatprep.subr.mxu0 0.0
        %507 = vmatpush1.msra.mxu0 0.0
        %508 = vmatprep.mubr.f32.mxu0 0.0
        %509 = vmatmul.mubr.f32.gmra.mrb[0].mxu0 %v433
        %v510 = vpop.f32.mrb[0].mxu0
        %v511 = vadd.f32 0.0, %v510
        %v512 = vpop.f32.mrb[0].mxu0
        %513 = vmatprep.mubr.f32.mxu0 0.0
        %514 = vmatmul.mubr.f32.gmra.mrb[0].mxu0 %v436
        %v515 = vpop.f32.mrb[0].mxu0
        %v516 = vadd.f32 0.0, %v515
        %v517 = vpop.f32.mrb[0].mxu0
        %518 = vmatprep.mubr.f32.mxu0 0.0
        %519 = vmatmul.mubr.f32.gmra.mrb[0].mxu0 %v439
        %v520 = vpop.f32.mrb[0].mxu0
        %v521 = vadd.f32 0.0, %v520
        %v522 = vpop.f32.mrb[0].mxu0
        %523 = vmatprep.mubr.f32.mxu0 0.0
        %524 = vmatmul.mubr.f32.gmra.mrb[0].mxu0 %v442
        %v525 = vpop.f32.mrb[0].mxu0
        %v526 = vadd.f32 0.0, %v525
        %v527 = vpop.f32.mrb[0].mxu0
        %528 = vdwg.mxu0
        %v529 = vadd.f32 %v406, %v511
        %v530 = vadd.f32 %v411, %v516
        %v531 = vadd.f32 %v416, %v521
        %v532 = vadd.f32 %v421, %v526
        %v533 = vlaneseq
        %v534 = vshrl.u32 %v533, 7
        %v535 = vsub.s32 0, %v534
        %v536 = vrot.slane %v211, %v535
        %v537 = vadd.f32 %v529, %v536
        %v538 = vadd.f32 %v530, %v536
        %v539 = vadd.f32 %v531, %v536
        %v540 = vadd.f32 %v532, %v536
        %v541 = vsel %vm229, %v537, 0.0
        %v542 = vsel %vm229, %v538, 0.0
        %v543 = vadd.f32 %v541, %v542
        %v544 = vsel %vm229, %v539, 0.0
        %v545 = vadd.f32 %v543, %v544
        %v546 = vsel %vm229, %v540, 0.0
        %v547 = vadd.f32 %v545, %v546
        %v548 = vrot.slane %v547, 4
        %v549 = vadd.f32 %v547, %v548
        %v550 = vrot.slane %v549, 2
        %v551 = vadd.f32 %v549, %v550
        %v552 = vrot.slane %v551, 1
        %v553 = vadd.f32 %v551, %v552
        %v555 = vsel %vm229, %v553, 0
        %557 = vmatprep.subr.mxu0 0.0
        %558 = vmatpush1.msra.mxu0 %v195
        %559 = vmatprep.subr.mxu0 0.0
        %560 = vmatpush1.msra.mxu0 %v196
        %561 = vmatprep.subr.mxu0 0.0
        %562 = vmatpush1.msra.mxu0 %v197
        %563 = vmatprep.subr.mxu0 0.0
        %564 = vmatpush1.msra.mxu0 %v198
        %565 = vmatprep.subr.mxu0 0.0
        %566 = vmatpush1.msra.mxu0 0.0
        %567 = vmatprep.subr.mxu0 0.0
        %568 = vmatpush1.msra.mxu0 0.0
        %569 = vmatprep.subr.mxu0 0.0
        %570 = vmatpush1.msra.mxu0 0.0
        %571 = vmatprep.subr.mxu0 0.0
        %572 = vmatpush1.msra.mxu0 0.0
        %573 = vmatprep.subr.mxu0 0.0
        %574 = vmatpush1.msra.mxu0 0.0
        %575 = vmatprep.subr.mxu0 0.0
        %576 = vmatpush1.msra.mxu0 0.0
        %577 = vmatprep.subr.mxu0 0.0
        %578 = vmatpush1.msra.mxu0 0.0
        %579 = vmatprep.subr.mxu0 0.0
        %580 = vmatpush1.msra.mxu0 0.0
        %581 = vmatprep.subr.mxu0 0.0
        %582 = vmatpush1.msra.mxu0 0.0
        %583 = vmatprep.subr.mxu0 0.0
        %584 = vmatpush1.msra.mxu0 0.0
        %585 = vmatprep.subr.mxu0 0.0
        %586 = vmatpush1.msra.mxu0 0.0
        %587 = vmatprep.subr.mxu0 0.0
        %588 = vmatpush1.msra.mxu0 0.0
        %589 = vmatprep.subr.mxu0 0.0
        %590 = vmatpush1.msra.mxu0 0.0
        %591 = vmatprep.subr.mxu0 0.0
        %592 = vmatpush1.msra.mxu0 0.0
        %593 = vmatprep.subr.mxu0 0.0
        %594 = vmatpush1.msra.mxu0 0.0
        %595 = vmatprep.subr.mxu0 0.0
        %596 = vmatpush1.msra.mxu0 0.0
        %597 = vmatprep.subr.mxu0 0.0
        %598 = vmatpush1.msra.mxu0 0.0
        %599 = vmatprep.subr.mxu0 0.0
        %600 = vmatpush1.msra.mxu0 0.0
        %601 = vmatprep.subr.mxu0 0.0
        %602 = vmatpush1.msra.mxu0 0.0
        %603 = vmatprep.subr.mxu0 0.0
        %604 = vmatpush1.msra.mxu0 0.0
        %605 = vmatprep.subr.mxu0 0.0
        %606 = vmatpush1.msra.mxu0 0.0
        %607 = vmatprep.subr.mxu0 0.0
        %608 = vmatpush1.msra.mxu0 0.0
        %609 = vmatprep.subr.mxu0 0.0
        %610 = vmatpush1.msra.mxu0 0.0
        %611 = vmatprep.subr.mxu0 0.0
        %612 = vmatpush1.msra.mxu0 0.0
        %613 = vmatprep.subr.mxu0 0.0
        %614 = vmatpush1.msra.mxu0 0.0
        %615 = vmatprep.subr.mxu0 0.0
        %616 = vmatpush1.msra.mxu0 0.0
        %617 = vmatprep.subr.mxu0 0.0
        %618 = vmatpush1.msra.mxu0 0.0
        %619 = vmatprep.subr.mxu0 0.0
        %620 = vmatpush1.msra.mxu0 0.0
        %621 = vmatprep.mubr.f32.mxu0 0.0
        %622 = vmatmul.mubr.f32.gmra.mrb[0].mxu0 %v555
        %v623 = vpop.f32.mrb[0].mxu0
        %v624 = vadd.f32 0.0, %v623
        %v625 = vpop.f32.mrb[0].mxu0
        %626 = vdwg.mxu0
        %v627 = vmul.f32 %v624, 0.015625
        %v628 = vlaneseq
        %v629 = vshrl.u32 %v628, 7
        %v630 = vsub.s32 0, %v629
        %v631 = vrot.slane %v627, %v630
        %v632 = vsub.f32 %v537, %v631
        %v633 = vsub.f32 %v538, %v631
        %v634 = vsub.f32 %v539, %v631
        %v635 = vsub.f32 %v540, %v631
        %v636 = vmul.f32 %v632, %v632
        %v637 = vmul.f32 %v633, %v633
        %v638 = vmul.f32 %v634, %v634
        %v639 = vmul.f32 %v635, %v635
        %v640 = vsel %vm229, %v636, 0.0
        %v641 = vsel %vm229, %v637, 0.0
        %v642 = vadd.f32 %v640, %v641
        %v643 = vsel %vm229, %v638, 0.0
        %v644 = vadd.f32 %v642, %v643
        %v645 = vsel %vm229, %v639, 0.0
        %v646 = vadd.f32 %v644, %v645
        %v647 = vrot.slane %v646, 4
        %v648 = vadd.f32 %v646, %v647
        %v649 = vrot.slane %v648, 2
        %v650 = vadd.f32 %v648, %v649
        %v651 = vrot.slane %v650, 1
        %v652 = vadd.f32 %v650, %v651
        %v654 = vsel %vm229, %v652, 0
        %656 = vmatprep.subr.mxu0 0.0
        %657 = vmatpush1.msra.mxu0 %v195
        %658 = vmatprep.subr.mxu0 0.0
        %659 = vmatpush1.msra.mxu0 %v196
        %660 = vmatprep.subr.mxu0 0.0
        %661 = vmatpush1.msra.mxu0 %v197
        %662 = vmatprep.subr.mxu0 0.0
        %663 = vmatpush1.msra.mxu0 %v198
        %664 = vmatprep.subr.mxu0 0.0
        %665 = vmatpush1.msra.mxu0 0.0
        %666 = vmatprep.subr.mxu0 0.0
        %667 = vmatpush1.msra.mxu0 0.0
        %668 = vmatprep.subr.mxu0 0.0
        %669 = vmatpush1.msra.mxu0 0.0
        %670 = vmatprep.subr.mxu0 0.0
        %671 = vmatpush1.msra.mxu0 0.0
        %672 = vmatprep.subr.mxu0 0.0
        %673 = vmatpush1.msra.mxu0 0.0
        %674 = vmatprep.subr.mxu0 0.0
        %675 = vmatpush1.msra.mxu0 0.0
        %676 = vmatprep.subr.mxu0 0.0
        %677 = vmatpush1.msra.mxu0 0.0
        %678 = vmatprep.subr.mxu0 0.0
        %679 = vmatpush1.msra.mxu0 0.0
        %680 = vmatprep.subr.mxu0 0.0
        %681 = vmatpush1.msra.mxu0 0.0
        %682 = vmatprep.subr.mxu0 0.0
        %683 = vmatpush1.msra.mxu0 0.0
        %684 = vmatprep.subr.mxu0 0.0
        %685 = vmatpush1.msra.mxu0 0.0
        %686 = vmatprep.subr.mxu0 0.0
        %687 = vmatpush1.msra.mxu0 0.0
        %688 = vmatprep.subr.mxu0 0.0
        %689 = vmatpush1.msra.mxu0 0.0
        %690 = vmatprep.subr.mxu0 0.0
        %691 = vmatpush1.msra.mxu0 0.0
        %692 = vmatprep.subr.mxu0 0.0
        %693 = vmatpush1.msra.mxu0 0.0
        %694 = vmatprep.subr.mxu0 0.0
        %695 = vmatpush1.msra.mxu0 0.0
        %696 = vmatprep.subr.mxu0 0.0
        %697 = vmatpush1.msra.mxu0 0.0
        %698 = vmatprep.subr.mxu0 0.0
        %699 = vmatpush1.msra.mxu0 0.0
        %700 = vmatprep.subr.mxu0 0.0
        %701 = vmatpush1.msra.mxu0 0.0
        %702 = vmatprep.subr.mxu0 0.0
        %703 = vmatpush1.msra.mxu0 0.0
        %704 = vmatprep.subr.mxu0 0.0
        %705 = vmatpush1.msra.mxu0 0.0
        %706 = vmatprep.subr.mxu0 0.0
        %707 = vmatpush1.msra.mxu0 0.0
        %708 = vmatprep.subr.mxu0 0.0
        %709 = vmatpush1.msra.mxu0 0.0
        %710 = vmatprep.subr.mxu0 0.0
        %711 = vmatpush1.msra.mxu0 0.0
        %712 = vmatprep.subr.mxu0 0.0
        %713 = vmatpush1.msra.mxu0 0.0
        %714 = vmatprep.subr.mxu0 0.0
        %715 = vmatpush1.msra.mxu0 0.0
        %716 = vmatprep.subr.mxu0 0.0
        %717 = vmatpush1.msra.mxu0 0.0
        %718 = vmatprep.subr.mxu0 0.0
        %719 = vmatpush1.msra.mxu0 0.0
        %720 = vmatprep.mubr.f32.mxu0 0.0
        %721 = vmatmul.mubr.f32.gmra.mrb[0].mxu0 %v654
        %v722 = vpop.f32.mrb[0].mxu0
        %v723 = vadd.f32 0.0, %v722
        %v724 = vpop.f32.mrb[0].mxu0
        %725 = vdwg.mxu0
        %v726 = vmul.f32 %v723, 0.015625
        %v727 = vadd.f32 %v726, 1e-05
        %v728 = vrsqrt.pop %v727
        %v729 = vlaneseq
        %v730 = vshrl.u32 %v729, 7
        %v731 = vsub.s32 0, %v730
        %v732 = vrot.slane %v728, %v731
        %v733 = vmul.f32 %v632, %v732
        %v734 = vmul.f32 %v633, %v732
        %v735 = vmul.f32 %v634, %v732
        %v736 = vmul.f32 %v635, %v732
        %v737 = vlaneseq
        %v738 = vshrl.u32 %v737, 7
        %v739 = vsub.s32 0, %v738
        %v740 = vrot.slane %v212, %v739
        %v741 = vmul.f32 %v733, %v740
        %v742 = vmul.f32 %v734, %v740
        %v743 = vmul.f32 %v735, %v740
        %v744 = vmul.f32 %v736, %v740
        %v745 = vlaneseq
        %v746 = vshrl.u32 %v745, 7
        %v747 = vsub.s32 0, %v746
        %v748 = vrot.slane %v213, %v747
        %v749 = vadd.f32 %v741, %v748
        %v750 = vadd.f32 %v742, %v748
        %v751 = vadd.f32 %v743, %v748
        %v752 = vadd.f32 %v744, %v748
        %v753 = vmul.f32 %v749, 0.5
        %v754 = vmul.f32 %v750, 0.5
        %v755 = vmul.f32 %v751, 0.5
        %v756 = vmul.f32 %v752, 0.5
        %v757 = vmul.f32 %v749, 0.70710677
        %v758 = vmul.f32 %v750, 0.70710677
        %v759 = vmul.f32 %v751, 0.70710677
        %v760 = vmul.f32 %v752, 0.70710677
        %v761 = verf.f32.pop %v757
        %v762 = verf.f32.pop %v758
        %v763 = verf.f32.pop %v759
        %v764 = verf.f32.pop %v760
        %v765 = vadd.f32 %v761, 1.0
        %v766 = vadd.f32 %v762, 1.0
        %v767 = vadd.f32 %v763, 1.0
        %v768 = vadd.f32 %v764, 1.0
        %v769 = vmul.f32 %v753, %v765
        %v770 = vmul.f32 %v754, %v766
        %v771 = vmul.f32 %v755, %v767
        %v772 = vmul.f32 %v756, %v768
        %vm773 = vcmask 253952
        %774 = vst.msk [vmem:[#allocation2] sm:$0x1] %vm773, 0.0
        %775 = vst.msk [vmem:[#allocation2 + $0x21] sm:$0x1] %vm773, 0.0
        %776 = vst.msk [vmem:[#allocation2 + $0x1] sm:$0xff] %vm229, %v769
        %777 = vst.msk [vmem:[#allocation2 + $0x9] sm:$0xff] %vm229, %v770
        %778 = vst.msk [vmem:[#allocation2 + $0x11] sm:$0xff] %vm229, %v771
        %779 = vst.msk [vmem:[#allocation2 + $0x19] sm:$0xff] %vm229, %v772
        %s780 = scalar_lea.vmem %s1, 96
        %v781 = vld [vmem:[%s780] sm:$0xff]
        %v782 = vld [vmem:[%s780 + $0x8] sm:$0xff]
        %v783 = vld [vmem:[%s780 + $0x10] sm:$0xff]
        %v784 = vld [vmem:[%s780 + $0x18] sm:$0xff]
        %v785 = vld [vmem:[%s780 + $0x20] sm:$0xff]
        %v786 = vld [vmem:[%s780 + $0x28] sm:$0xff]
        %v787 = vld [vmem:[%s780 + $0x30] sm:$0xff]
        %v788 = vld [vmem:[%s780 + $0x38] sm:$0xff]
        %v789 = vld [vmem:[%s780 + $0x40] sm:$0xff]
        %v790 = vld [vmem:[%s780 + $0x48] sm:$0xff]
        %v791 = vld [vmem:[%s780 + $0x50] sm:$0xff]
        %v792 = vld [vmem:[%s780 + $0x58] sm:$0xff]
        %v793 = vld [vmem:[%s2 + $0x1] sm:$0x1]
        %v794 = vld [vmem:[%s2 + $0x7] sm:$0x1]
        %v795 = vld [vmem:[%s2 + $0xd] sm:$0x1]
        %v796 = vld [vmem:[#allocation2] ss:$2 sm:$0xff]
        %s797 = scalar_lea.vmem [#allocation2], 16
        %v798 = vld [vmem:[%s797] ss:$2 sm:$0xff]
        %s799 = scalar_lea.vmem [#allocation2], 1
        %v800 = vld [vmem:[%s799] ss:$2 sm:$0xff]
        %s801 = scalar_lea.vmem [#allocation2], 17
        %v802 = vld [vmem:[%s801] ss:$2 sm:$0xff]
        %v804 = vsel %vm229, %v800, 0
        %v807 = vsel %vm229, %v802, 0
        %809 = vmatprep.subr.mxu0 0.0
        %810 = vmatpush1.msra.mxu0 %v785
        %811 = vmatprep.subr.mxu0 0.0
        %812 = vmatpush1.msra.mxu0 %v786
        %813 = vmatprep.subr.mxu0 0.0
        %814 = vmatpush1.msra.mxu0 %v787
        %815 = vmatprep.subr.mxu0 0.0
        %816 = vmatpush1.msra.mxu0 %v788
        %817 = vmatprep.subr.mxu0 0.0
        %818 = vmatpush1.msra.mxu0 0.0
        %819 = vmatprep.subr.mxu0 0.0
        %820 = vmatpush1.msra.mxu0 0.0
        %821 = vmatprep.subr.mxu0 0.0
        %822 = vmatpush1.msra.mxu0 0.0
        %823 = vmatprep.subr.mxu0 0.0
        %824 = vmatpush1.msra.mxu0 0.0
        %825 = vmatprep.subr.mxu0 0.0
        %826 = vmatpush1.msra.mxu0 0.0
        %827 = vmatprep.subr.mxu0 0.0
        %828 = vmatpush1.msra.mxu0 0.0
        %829 = vmatprep.subr.mxu0 0.0
        %830 = vmatpush1.msra.mxu0 0.0
        %831 = vmatprep.subr.mxu0 0.0
        %832 = vmatpush1.msra.mxu0 0.0
        %833 = vmatprep.subr.mxu0 0.0
        %834 = vmatpush1.msra.mxu0 0.0
        %835 = vmatprep.subr.mxu0 0.0
        %836 = vmatpush1.msra.mxu0 0.0
        %837 = vmatprep.subr.mxu0 0.0
        %838 = vmatpush1.msra.mxu0 0.0
        %839 = vmatprep.subr.mxu0 0.0
        %840 = vmatpush1.msra.mxu0 0.0
        %841 = vmatprep.subr.mxu0 0.0
        %842 = vmatpush1.msra.mxu0 0.0
        %843 = vmatprep.subr.mxu0 0.0
        %844 = vmatpush1.msra.mxu0 0.0
        %845 = vmatprep.subr.mxu0 0.0
        %846 = vmatpush1.msra.mxu0 0.0
        %847 = vmatprep.subr.mxu0 0.0
        %848 = vmatpush1.msra.mxu0 0.0
        %849 = vmatprep.subr.mxu0 0.0
        %850 = vmatpush1.msra.mxu0 0.0
        %851 = vmatprep.subr.mxu0 0.0
        %852 = vmatpush1.msra.mxu0 0.0
        %853 = vmatprep.subr.mxu0 0.0
        %854 = vmatpush1.msra.mxu0 0.0
        %855 = vmatprep.subr.mxu0 0.0
        %856 = vmatpush1.msra.mxu0 0.0
        %857 = vmatprep.subr.mxu0 0.0
        %858 = vmatpush1.msra.mxu0 0.0
        %859 = vmatprep.subr.mxu0 0.0
        %860 = vmatpush1.msra.mxu0 0.0
        %861 = vmatprep.subr.mxu0 0.0
        %862 = vmatpush1.msra.mxu0 0.0
        %863 = vmatprep.subr.mxu0 0.0
        %864 = vmatpush1.msra.mxu0 0.0
        %865 = vmatprep.subr.mxu0 0.0
        %866 = vmatpush1.msra.mxu0 0.0
        %867 = vmatprep.subr.mxu0 0.0
        %868 = vmatpush1.msra.mxu0 0.0
        %869 = vmatprep.subr.mxu0 0.0
        %870 = vmatpush1.msra.mxu0 0.0
        %871 = vmatprep.subr.mxu0 0.0
        %872 = vmatpush1.msra.mxu0 0.0
        %873 = vmatprep.mubr.f32.mxu0 0.0
        %874 = vmatmul.mubr.f32.gmra.mrb[0].mxu0 %v804
        %v875 = vpop.f32.mrb[0].mxu0
        %v876 = vadd.f32 0.0, %v875
        %v877 = vpop.f32.mrb[0].mxu0
        %878 = vmatprep.mubr.f32.mxu0 0.0
        %879 = vmatmul.mubr.f32.gmra.mrb[0].mxu0 %v807
        %v880 = vpop.f32.mrb[0].mxu0
        %v881 = vadd.f32 0.0, %v880
        %v882 = vpop.f32.mrb[0].mxu0
        %883 = vdwg.mxu0
        %v885 = vsel %vm229, %v796, 0
        %v888 = vsel %vm229, %v798, 0
        %890 = vmatprep.subr.mxu0 0.0
        %891 = vmatpush1.msra.mxu0 %v781
        %892 = vmatprep.subr.mxu0 0.0
        %893 = vmatpush1.msra.mxu0 %v782
        %894 = vmatprep.subr.mxu0 0.0
        %895 = vmatpush1.msra.mxu0 %v783
        %896 = vmatprep.subr.mxu0 0.0
        %897 = vmatpush1.msra.mxu0 %v784
        %898 = vmatprep.subr.mxu0 0.0
        %899 = vmatpush1.msra.mxu0 0.0
        %900 = vmatprep.subr.mxu0 0.0
        %901 = vmatpush1.msra.mxu0 0.0
        %902 = vmatprep.subr.mxu0 0.0
        %903 = vmatpush1.msra.mxu0 0.0
        %904 = vmatprep.subr.mxu0 0.0
        %905 = vmatpush1.msra.mxu0 0.0
        %906 = vmatprep.subr.mxu0 0.0
        %907 = vmatpush1.msra.mxu0 0.0
        %908 = vmatprep.subr.mxu0 0.0
        %909 = vmatpush1.msra.mxu0 0.0
        %910 = vmatprep.subr.mxu0 0.0
        %911 = vmatpush1.msra.mxu0 0.0
        %912 = vmatprep.subr.mxu0 0.0
        %913 = vmatpush1.msra.mxu0 0.0
        %914 = vmatprep.subr.mxu0 0.0
        %915 = vmatpush1.msra.mxu0 0.0
        %916 = vmatprep.subr.mxu0 0.0
        %917 = vmatpush1.msra.mxu0 0.0
        %918 = vmatprep.subr.mxu0 0.0
        %919 = vmatpush1.msra.mxu0 0.0
        %920 = vmatprep.subr.mxu0 0.0
        %921 = vmatpush1.msra.mxu0 0.0
        %922 = vmatprep.subr.mxu0 0.0
        %923 = vmatpush1.msra.mxu0 0.0
        %924 = vmatprep.subr.mxu0 0.0
        %925 = vmatpush1.msra.mxu0 0.0
        %926 = vmatprep.subr.mxu0 0.0
        %927 = vmatpush1.msra.mxu0 0.0
        %928 = vmatprep.subr.mxu0 0.0
        %929 = vmatpush1.msra.mxu0 0.0
        %930 = vmatprep.subr.mxu0 0.0
        %931 = vmatpush1.msra.mxu0 0.0
        %932 = vmatprep.subr.mxu0 0.0
        %933 = vmatpush1.msra.mxu0 0.0
        %934 = vmatprep.subr.mxu0 0.0
        %935 = vmatpush1.msra.mxu0 0.0
        %936 = vmatprep.subr.mxu0 0.0
        %937 = vmatpush1.msra.mxu0 0.0
        %938 = vmatprep.subr.mxu0 0.0
        %939 = vmatpush1.msra.mxu0 0.0
        %940 = vmatprep.subr.mxu0 0.0
        %941 = vmatpush1.msra.mxu0 0.0
        %942 = vmatprep.subr.mxu0 0.0
        %943 = vmatpush1.msra.mxu0 0.0
        %944 = vmatprep.subr.mxu0 0.0
        %945 = vmatpush1.msra.mxu0 0.0
        %946 = vmatprep.subr.mxu0 0.0
        %947 = vmatpush1.msra.mxu0 0.0
        %948 = vmatprep.subr.mxu0 0.0
        %949 = vmatpush1.msra.mxu0 0.0
        %950 = vmatprep.subr.mxu0 0.0
        %951 = vmatpush1.msra.mxu0 0.0
        %952 = vmatprep.subr.mxu0 0.0
        %953 = vmatpush1.msra.mxu0 0.0
        %954 = vmatprep.mubr.f32.mxu0 0.0
        %955 = vmatmul.mubr.f32.gmra.mrb[0].mxu0 %v885
        %v956 = vpop.f32.mrb[0].mxu0
        %v957 = vadd.f32 %v876, %v956
        %v958 = vpop.f32.mrb[0].mxu0
        %959 = vmatprep.mubr.f32.mxu0 0.0
        %960 = vmatmul.mubr.f32.gmra.mrb[0].mxu0 %v888
        %v961 = vpop.f32.mrb[0].mxu0
        %v962 = vadd.f32 %v881, %v961
        %v963 = vpop.f32.mrb[0].mxu0
        %964 = vdwg.mxu0
        %s965 = scalar_lea.vmem [#allocation2], 2
        %v966 = vld [vmem:[%s965] ss:$2 sm:$0xff]
        %s967 = scalar_lea.vmem [#allocation2], 18
        %v968 = vld [vmem:[%s967] ss:$2 sm:$0xff]
        %v970 = vsel %vm229, %v966, 0
        %v973 = vsel %vm229, %v968, 0
        %975 = vmatprep.subr.mxu0 0.0
        %976 = vmatpush1.msra.mxu0 %v789
        %977 = vmatprep.subr.mxu0 0.0
        %978 = vmatpush1.msra.mxu0 %v790
        %979 = vmatprep.subr.mxu0 0.0
        %980 = vmatpush1.msra.mxu0 %v791
        %981 = vmatprep.subr.mxu0 0.0
        %982 = vmatpush1.msra.mxu0 %v792
        %983 = vmatprep.subr.mxu0 0.0
        %984 = vmatpush1.msra.mxu0 0.0
        %985 = vmatprep.subr.mxu0 0.0
        %986 = vmatpush1.msra.mxu0 0.0
        %987 = vmatprep.subr.mxu0 0.0
        %988 = vmatpush1.msra.mxu0 0.0
        %989 = vmatprep.subr.mxu0 0.0
        %990 = vmatpush1.msra.mxu0 0.0
        %991 = vmatprep.subr.mxu0 0.0
        %992 = vmatpush1.msra.mxu0 0.0
        %993 = vmatprep.subr.mxu0 0.0
        %994 = vmatpush1.msra.mxu0 0.0
        %995 = vmatprep.subr.mxu0 0.0
        %996 = vmatpush1.msra.mxu0 0.0
        %997 = vmatprep.subr.mxu0 0.0
        %998 = vmatpush1.msra.mxu0 0.0
        %999 = vmatprep.subr.mxu0 0.0
        %1000 = vmatpush1.msra.mxu0 0.0
        %1001 = vmatprep.subr.mxu0 0.0
        %1002 = vmatpush1.msra.mxu0 0.0
        %1003 = vmatprep.subr.mxu0 0.0
        %1004 = vmatpush1.msra.mxu0 0.0
        %1005 = vmatprep.subr.mxu0 0.0
        %1006 = vmatpush1.msra.mxu0 0.0
        %1007 = vmatprep.subr.mxu0 0.0
        %1008 = vmatpush1.msra.mxu0 0.0
        %1009 = vmatprep.subr.mxu0 0.0
        %1010 = vmatpush1.msra.mxu0 0.0
        %1011 = vmatprep.subr.mxu0 0.0
        %1012 = vmatpush1.msra.mxu0 0.0
        %1013 = vmatprep.subr.mxu0 0.0
        %1014 = vmatpush1.msra.mxu0 0.0
        %1015 = vmatprep.subr.mxu0 0.0
        %1016 = vmatpush1.msra.mxu0 0.0
        %1017 = vmatprep.subr.mxu0 0.0
        %1018 = vmatpush1.msra.mxu0 0.0
        %1019 = vmatprep.subr.mxu0 0.0
        %1020 = vmatpush1.msra.mxu0 0.0
        %1021 = vmatprep.subr.mxu0 0.0
        %1022 = vmatpush1.msra.mxu0 0.0
        %1023 = vmatprep.subr.mxu0 0.0
        %1024 = vmatpush1.msra.mxu0 0.0
        %1025 = vmatprep.subr.mxu0 0.0
        %1026 = vmatpush1.msra.mxu0 0.0
        %1027 = vmatprep.subr.mxu0 0.0
        %1028 = vmatpush1.msra.mxu0 0.0
        %1029 = vmatprep.subr.mxu0 0.0
        %1030 = vmatpush1.msra.mxu0 0.0
        %1031 = vmatprep.subr.mxu0 0.0
        %1032 = vmatpush1.msra.mxu0 0.0
        %1033 = vmatprep.subr.mxu0 0.0
        %1034 = vmatpush1.msra.mxu0 0.0
        %1035 = vmatprep.subr.mxu0 0.0
        %1036 = vmatpush1.msra.mxu0 0.0
        %1037 = vmatprep.subr.mxu0 0.0
        %1038 = vmatpush1.msra.mxu0 0.0
        %1039 = vmatprep.mubr.f32.mxu0 0.0
        %1040 = vmatmul.mubr.f32.gmra.mrb[0].mxu0 %v970
        %v1041 = vpop.f32.mrb[0].mxu0
        %v1042 = vadd.f32 0.0, %v1041
        %v1043 = vpop.f32.mrb[0].mxu0
        %1044 = vmatprep.mubr.f32.mxu0 0.0
        %1045 = vmatmul.mubr.f32.gmra.mrb[0].mxu0 %v973
        %v1046 = vpop.f32.mrb[0].mxu0
        %v1047 = vadd.f32 0.0, %v1046
        %v1048 = vpop.f32.mrb[0].mxu0
        %1049 = vdwg.mxu0
        %v1050 = vadd.f32 %v957, %v1042
        %v1051 = vadd.f32 %v962, %v1047
        %v1052 = vlaneseq
        %v1053 = vshrl.u32 %v1052, 7
        %v1054 = vsub.s32 0, %v1053
        %v1055 = vrot.slane %v793, %v1054
        %v1056 = vadd.f32 %v1050, %v1055
        %v1057 = vadd.f32 %v1051, %v1055
        %v1058 = vsel %vm229, %v1056, 0.0
        %v1059 = vsel %vm229, %v1057, 0.0
        %v1060 = vadd.f32 %v1058, %v1059
        %v1061 = vrot.slane %v1060, 4
        %v1062 = vadd.f32 %v1060, %v1061
        %v1063 = vrot.slane %v1062, 2
        %v1064 = vadd.f32 %v1062, %v1063
        %v1065 = vrot.slane %v1064, 1
        %v1066 = vadd.f32 %v1064, %v1065
        %v1068 = vsel %vm229, %v1066, 0
        %1070 = vmatprep.subr.mxu0 0.0
        %1071 = vmatpush1.msra.mxu0 %v195
        %1072 = vmatprep.subr.mxu0 0.0
        %1073 = vmatpush1.msra.mxu0 %v196
        %1074 = vmatprep.subr.mxu0 0.0
        %1075 = vmatpush1.msra.mxu0 %v197
        %1076 = vmatprep.subr.mxu0 0.0
        %1077 = vmatpush1.msra.mxu0 %v198
        %1078 = vmatprep.subr.mxu0 0.0
        %1079 = vmatpush1.msra.mxu0 0.0
        %1080 = vmatprep.subr.mxu0 0.0
        %1081 = vmatpush1.msra.mxu0 0.0
        %1082 = vmatprep.subr.mxu0 0.0
        %1083 = vmatpush1.msra.mxu0 0.0
        %1084 = vmatprep.subr.mxu0 0.0
        %1085 = vmatpush1.msra.mxu0 0.0
        %1086 = vmatprep.subr.mxu0 0.0
        %1087 = vmatpush1.msra.mxu0 0.0
        %1088 = vmatprep.subr.mxu0 0.0
        %1089 = vmatpush1.msra.mxu0 0.0
        %1090 = vmatprep.subr.mxu0 0.0
        %1091 = vmatpush1.msra.mxu0 0.0
        %1092 = vmatprep.subr.mxu0 0.0
        %1093 = vmatpush1.msra.mxu0 0.0
        %1094 = vmatprep.subr.mxu0 0.0
        %1095 = vmatpush1.msra.mxu0 0.0
        %1096 = vmatprep.subr.mxu0 0.0
        %1097 = vmatpush1.msra.mxu0 0.0
        %1098 = vmatprep.subr.mxu0 0.0
        %1099 = vmatpush1.msra.mxu0 0.0
        %1100 = vmatprep.subr.mxu0 0.0
        %1101 = vmatpush1.msra.mxu0 0.0
        %1102 = vmatprep.subr.mxu0 0.0
        %1103 = vmatpush1.msra.mxu0 0.0
        %1104 = vmatprep.subr.mxu0 0.0
        %1105 = vmatpush1.msra.mxu0 0.0
        %1106 = vmatprep.subr.mxu0 0.0
        %1107 = vmatpush1.msra.mxu0 0.0
        %1108 = vmatprep.subr.mxu0 0.0
        %1109 = vmatpush1.msra.mxu0 0.0
        %1110 = vmatprep.subr.mxu0 0.0
        %1111 = vmatpush1.msra.mxu0 0.0
        %1112 = vmatprep.subr.mxu0 0.0
        %1113 = vmatpush1.msra.mxu0 0.0
        %1114 = vmatprep.subr.mxu0 0.0
        %1115 = vmatpush1.msra.mxu0 0.0
        %1116 = vmatprep.subr.mxu0 0.0
        %1117 = vmatpush1.msra.mxu0 0.0
        %1118 = vmatprep.subr.mxu0 0.0
        %1119 = vmatpush1.msra.mxu0 0.0
        %1120 = vmatprep.subr.mxu0 0.0
        %1121 = vmatpush1.msra.mxu0 0.0
        %1122 = vmatprep.subr.mxu0 0.0
        %1123 = vmatpush1.msra.mxu0 0.0
        %1124 = vmatprep.subr.mxu0 0.0
        %1125 = vmatpush1.msra.mxu0 0.0
        %1126 = vmatprep.subr.mxu0 0.0
        %1127 = vmatpush1.msra.mxu0 0.0
        %1128 = vmatprep.subr.mxu0 0.0
        %1129 = vmatpush1.msra.mxu0 0.0
        %1130 = vmatprep.subr.mxu0 0.0
        %1131 = vmatpush1.msra.mxu0 0.0
        %1132 = vmatprep.subr.mxu0 0.0
        %1133 = vmatpush1.msra.mxu0 0.0
        %1134 = vmatprep.mubr.f32.mxu0 0.0
        %1135 = vmatmul.mubr.f32.gmra.mrb[0].mxu0 %v1068
        %v1136 = vpop.f32.mrb[0].mxu0
        %v1137 = vadd.f32 0.0, %v1136
        %v1138 = vpop.f32.mrb[0].mxu0
        %1139 = vdwg.mxu0
        %v1140 = vmul.f32 %v1137, 0.03125
        %v1141 = vlaneseq
        %v1142 = vshrl.u32 %v1141, 7
        %v1143 = vsub.s32 0, %v1142
        %v1144 = vrot.slane %v1140, %v1143
        %v1145 = vsub.f32 %v1056, %v1144
        %v1146 = vsub.f32 %v1057, %v1144
        %v1147 = vmul.f32 %v1145, %v1145
        %v1148 = vmul.f32 %v1146, %v1146
        %v1149 = vsel %vm229, %v1147, 0.0
        %v1150 = vsel %vm229, %v1148, 0.0
        %v1151 = vadd.f32 %v1149, %v1150
        %v1152 = vrot.slane %v1151, 4
        %v1153 = vadd.f32 %v1151, %v1152
        %v1154 = vrot.slane %v1153, 2
        %v1155 = vadd.f32 %v1153, %v1154
        %v1156 = vrot.slane %v1155, 1
        %v1157 = vadd.f32 %v1155, %v1156
        %v1159 = vsel %vm229, %v1157, 0
        %1161 = vmatprep.subr.mxu0 0.0
        %1162 = vmatpush1.msra.mxu0 %v195
        %1163 = vmatprep.subr.mxu0 0.0
        %1164 = vmatpush1.msra.mxu0 %v196
        %1165 = vmatprep.subr.mxu0 0.0
        %1166 = vmatpush1.msra.mxu0 %v197
        %1167 = vmatprep.subr.mxu0 0.0
        %1168 = vmatpush1.msra.mxu0 %v198
        %1169 = vmatprep.subr.mxu0 0.0
        %1170 = vmatpush1.msra.mxu0 0.0
        %1171 = vmatprep.subr.mxu0 0.0
        %1172 = vmatpush1.msra.mxu0 0.0
        %1173 = vmatprep.subr.mxu0 0.0
        %1174 = vmatpush1.msra.mxu0 0.0
        %1175 = vmatprep.subr.mxu0 0.0
        %1176 = vmatpush1.msra.mxu0 0.0
        %1177 = vmatprep.subr.mxu0 0.0
        %1178 = vmatpush1.msra.mxu0 0.0
        %1179 = vmatprep.subr.mxu0 0.0
        %1180 = vmatpush1.msra.mxu0 0.0
        %1181 = vmatprep.subr.mxu0 0.0
        %1182 = vmatpush1.msra.mxu0 0.0
        %1183 = vmatprep.subr.mxu0 0.0
        %1184 = vmatpush1.msra.mxu0 0.0
        %1185 = vmatprep.subr.mxu0 0.0
        %1186 = vmatpush1.msra.mxu0 0.0
        %1187 = vmatprep.subr.mxu0 0.0
        %1188 = vmatpush1.msra.mxu0 0.0
        %1189 = vmatprep.subr.mxu0 0.0
        %1190 = vmatpush1.msra.mxu0 0.0
        %1191 = vmatprep.subr.mxu0 0.0
        %1192 = vmatpush1.msra.mxu0 0.0
        %1193 = vmatprep.subr.mxu0 0.0
        %1194 = vmatpush1.msra.mxu0 0.0
        %1195 = vmatprep.subr.mxu0 0.0
        %1196 = vmatpush1.msra.mxu0 0.0
        %1197 = vmatprep.subr.mxu0 0.0
        %1198 = vmatpush1.msra.mxu0 0.0
        %1199 = vmatprep.subr.mxu0 0.0
        %1200 = vmatpush1.msra.mxu0 0.0
        %1201 = vmatprep.subr.mxu0 0.0
        %1202 = vmatpush1.msra.mxu0 0.0
        %1203 = vmatprep.subr.mxu0 0.0
        %1204 = vmatpush1.msra.mxu0 0.0
        %1205 = vmatprep.subr.mxu0 0.0
        %1206 = vmatpush1.msra.mxu0 0.0
        %1207 = vmatprep.subr.mxu0 0.0
        %1208 = vmatpush1.msra.mxu0 0.0
        %1209 = vmatprep.subr.mxu0 0.0
        %1210 = vmatpush1.msra.mxu0 0.0
        %1211 = vmatprep.subr.mxu0 0.0
        %1212 = vmatpush1.msra.mxu0 0.0
        %1213 = vmatprep.subr.mxu0 0.0
        %1214 = vmatpush1.msra.mxu0 0.0
        %1215 = vmatprep.subr.mxu0 0.0
        %1216 = vmatpush1.msra.mxu0 0.0
        %1217 = vmatprep.subr.mxu0 0.0
        %1218 = vmatpush1.msra.mxu0 0.0
        %1219 = vmatprep.subr.mxu0 0.0
        %1220 = vmatpush1.msra.mxu0 0.0
        %1221 = vmatprep.subr.mxu0 0.0
        %1222 = vmatpush1.msra.mxu0 0.0
        %1223 = vmatprep.subr.mxu0 0.0
        %1224 = vmatpush1.msra.mxu0 0.0
        %1225 = vmatprep.mubr.f32.mxu0 0.0
        %1226 = vmatmul.mubr.f32.gmra.mrb[0].mxu0 %v1159
        %v1227 = vpop.f32.mrb[0].mxu0
        %v1228 = vadd.f32 0.0, %v1227
        %v1229 = vpop.f32.mrb[0].mxu0
        %1230 = vdwg.mxu0
        %v1231 = vmul.f32 %v1228, 0.03125
        %v1232 = vadd.f32 %v1231, 1e-05
        %v1233 = vrsqrt.pop %v1232
        %v1234 = vlaneseq
        %v1235 = vshrl.u32 %v1234, 7
        %v1236 = vsub.s32 0, %v1235
        %v1237 = vrot.slane %v1233, %v1236
        %v1238 = vmul.f32 %v1145, %v1237
        %v1239 = vmul.f32 %v1146, %v1237
        %v1240 = vlaneseq
        %v1241 = vshrl.u32 %v1240, 7
        %v1242 = vsub.s32 0, %v1241
        %v1243 = vrot.slane %v794, %v1242
        %v1244 = vmul.f32 %v1238, %v1243
        %v1245 = vmul.f32 %v1239, %v1243
        %v1246 = vlaneseq
        %v1247 = vshrl.u32 %v1246, 7
        %v1248 = vsub.s32 0, %v1247
        %v1249 = vrot.slane %v795, %v1248
        %v1250 = vadd.f32 %v1244, %v1249
        %v1251 = vadd.f32 %v1245, %v1249
        %v1252 = vmul.f32 %v1250, 0.5
        %v1253 = vmul.f32 %v1251, 0.5
        %v1254 = vmul.f32 %v1250, 0.70710677
        %v1255 = vmul.f32 %v1251, 0.70710677
        %v1256 = verf.f32.pop %v1254
        %v1257 = verf.f32.pop %v1255
        %v1258 = vadd.f32 %v1256, 1.0
        %v1259 = vadd.f32 %v1257, 1.0
        %v1260 = vmul.f32 %v1252, %v1258
        %v1261 = vmul.f32 %v1253, %v1259
        %1262 = vst.msk [vmem:[#allocation3] sm:$0x1] %vm773, 0.0
        %1263 = vst.msk [vmem:[#allocation3 + $0x11] sm:$0x1] %vm773, 0.0
        %1264 = vst.msk [vmem:[#allocation3 + $0x1] sm:$0xff] %vm229, %v1260
        %1265 = vst.msk [vmem:[#allocation3 + $0x9] sm:$0xff] %vm229, %v1261
        %s1266 = scalar_lea.vmem %s1, 192
        %v1267 = vld [vmem:[%s1266] sm:$0xff]
        %v1268 = vld [vmem:[%s1266 + $0x8] sm:$0xff]
        %v1269 = vld [vmem:[%s1266 + $0x10] sm:$0xff]
        %v1270 = vld [vmem:[%s1266 + $0x18] sm:$0xff]
        %v1271 = vld [vmem:[%s1266 + $0x20] sm:$0xff]
        %v1272 = vld [vmem:[%s1266 + $0x28] sm:$0xff]
        %v1273 = vld [vmem:[%s1266 + $0x30] sm:$0xff]
        %v1274 = vld [vmem:[%s1266 + $0x38] sm:$0xff]
        %v1275 = vld [vmem:[%s1266 + $0x40] sm:$0xff]
        %v1276 = vld [vmem:[%s1266 + $0x48] sm:$0xff]
        %v1277 = vld [vmem:[%s1266 + $0x50] sm:$0xff]
        %v1278 = vld [vmem:[%s1266 + $0x58] sm:$0xff]
        %v1279 = vld [vmem:[%s2 + $0x2] sm:$0x1]
        %v1280 = vld [vmem:[%s2 + $0x8] sm:$0x1]
        %v1281 = vld [vmem:[%s2 + $0xe] sm:$0x1]
        %v1282 = vld [vmem:[#allocation3] ss:$2 sm:$0xff]
        %s1283 = scalar_lea.vmem [#allocation3], 1
        %v1284 = vld [vmem:[%s1283] ss:$2 sm:$0xff]
        %v1286 = vsel %vm229, %v1284, 0
        %1288 = vmatprep.subr.mxu0 0.0
        %1289 = vmatpush1.msra.mxu0 %v1271
        %1290 = vmatprep.subr.mxu0 0.0
        %1291 = vmatpush1.msra.mxu0 %v1272
        %1292 = vmatprep.subr.mxu0 0.0
        %1293 = vmatpush1.msra.mxu0 %v1273
        %1294 = vmatprep.subr.mxu0 0.0
        %1295 = vmatpush1.msra.mxu0 %v1274
        %1296 = vmatprep.subr.mxu0 0.0
        %1297 = vmatpush1.msra.mxu0 0.0
        %1298 = vmatprep.subr.mxu0 0.0
        %1299 = vmatpush1.msra.mxu0 0.0
        %1300 = vmatprep.subr.mxu0 0.0
        %1301 = vmatpush1.msra.mxu0 0.0
        %1302 = vmatprep.subr.mxu0 0.0
        %1303 = vmatpush1.msra.mxu0 0.0
        %1304 = vmatprep.subr.mxu0 0.0
        %1305 = vmatpush1.msra.mxu0 0.0
        %1306 = vmatprep.subr.mxu0 0.0
        %1307 = vmatpush1.msra.mxu0 0.0
        %1308 = vmatprep.subr.mxu0 0.0
        %1309 = vmatpush1.msra.mxu0 0.0
        %1310 = vmatprep.subr.mxu0 0.0
        %1311 = vmatpush1.msra.mxu0 0.0
        %1312 = vmatprep.subr.mxu0 0.0
        %1313 = vmatpush1.msra.mxu0 0.0
        %1314 = vmatprep.subr.mxu0 0.0
        %1315 = vmatpush1.msra.mxu0 0.0
        %1316 = vmatprep.subr.mxu0 0.0
        %1317 = vmatpush1.msra.mxu0 0.0
        %1318 = vmatprep.subr.mxu0 0.0
        %1319 = vmatpush1.msra.mxu0 0.0
        %1320 = vmatprep.subr.mxu0 0.0
        %1321 = vmatpush1.msra.mxu0 0.0
        %1322 = vmatprep.subr.mxu0 0.0
        %1323 = vmatpush1.msra.mxu0 0.0
        %1324 = vmatprep.subr.mxu0 0.0
        %1325 = vmatpush1.msra.mxu0 0.0
        %1326 = vmatprep.subr.mxu0 0.0
        %1327 = vmatpush1.msra.mxu0 0.0
        %1328 = vmatprep.subr.mxu0 0.0
        %1329 = vmatpush1.msra.mxu0 0.0
        %1330 = vmatprep.subr.mxu0 0.0
        %1331 = vmatpush1.msra.mxu0 0.0
        %1332 = vmatprep.subr.mxu0 0.0
        %1333 = vmatpush1.msra.mxu0 0.0
        %1334 = vmatprep.subr.mxu0 0.0
        %1335 = vmatpush1.msra.mxu0 0.0
        %1336 = vmatprep.subr.mxu0 0.0
        %1337 = vmatpush1.msra.mxu0 0.0
        %1338 = vmatprep.subr.mxu0 0.0
        %1339 = vmatpush1.msra.mxu0 0.0
        %1340 = vmatprep.subr.mxu0 0.0
        %1341 = vmatpush1.msra.mxu0 0.0
        %1342 = vmatprep.subr.mxu0 0.0
        %1343 = vmatpush1.msra.mxu0 0.0
        %1344 = vmatprep.subr.mxu0 0.0
        %1345 = vmatpush1.msra.mxu0 0.0
        %1346 = vmatprep.subr.mxu0 0.0
        %1347 = vmatpush1.msra.mxu0 0.0
        %1348 = vmatprep.subr.mxu0 0.0
        %1349 = vmatpush1.msra.mxu0 0.0
        %1350 = vmatprep.subr.mxu0 0.0
        %1351 = vmatpush1.msra.mxu0 0.0
        %1352 = vmatprep.mubr.f32.mxu0 0.0
        %1353 = vmatmul.mubr.f32.gmra.mrb[0].mxu0 %v1286
        %v1354 = vpop.f32.mrb[0].mxu0
        %v1355 = vadd.f32 0.0, %v1354
        %v1356 = vpop.f32.mrb[0].mxu0
        %1357 = vdwg.mxu0
        %v1359 = vsel %vm229, %v1282, 0
        %1361 = vmatprep.subr.mxu0 0.0
        %1362 = vmatpush1.msra.mxu0 %v1267
        %1363 = vmatprep.subr.mxu0 0.0
        %1364 = vmatpush1.msra.mxu0 %v1268
        %1365 = vmatprep.subr.mxu0 0.0
        %1366 = vmatpush1.msra.mxu0 %v1269
        %1367 = vmatprep.subr.mxu0 0.0
        %1368 = vmatpush1.msra.mxu0 %v1270
        %1369 = vmatprep.subr.mxu0 0.0
        %1370 = vmatpush1.msra.mxu0 0.0
        %1371 = vmatprep.subr.mxu0 0.0
        %1372 = vmatpush1.msra.mxu0 0.0
        %1373 = vmatprep.subr.mxu0 0.0
        %1374 = vmatpush1.msra.mxu0 0.0
        %1375 = vmatprep.subr.mxu0 0.0
        %1376 = vmatpush1.msra.mxu0 0.0
        %1377 = vmatprep.subr.mxu0 0.0
        %1378 = vmatpush1.msra.mxu0 0.0
        %1379 = vmatprep.subr.mxu0 0.0
        %1380 = vmatpush1.msra.mxu0 0.0
        %1381 = vmatprep.subr.mxu0 0.0
        %1382 = vmatpush1.msra.mxu0 0.0
        %1383 = vmatprep.subr.mxu0 0.0
        %1384 = vmatpush1.msra.mxu0 0.0
        %1385 = vmatprep.subr.mxu0 0.0
        %1386 = vmatpush1.msra.mxu0 0.0
        %1387 = vmatprep.subr.mxu0 0.0
        %1388 = vmatpush1.msra.mxu0 0.0
        %1389 = vmatprep.subr.mxu0 0.0
        %1390 = vmatpush1.msra.mxu0 0.0
        %1391 = vmatprep.subr.mxu0 0.0
        %1392 = vmatpush1.msra.mxu0 0.0
        %1393 = vmatprep.subr.mxu0 0.0
        %1394 = vmatpush1.msra.mxu0 0.0
        %1395 = vmatprep.subr.mxu0 0.0
        %1396 = vmatpush1.msra.mxu0 0.0
        %1397 = vmatprep.subr.mxu0 0.0
        %1398 = vmatpush1.msra.mxu0 0.0
        %1399 = vmatprep.subr.mxu0 0.0
        %1400 = vmatpush1.msra.mxu0 0.0
        %1401 = vmatprep.subr.mxu0 0.0
        %1402 = vmatpush1.msra.mxu0 0.0
        %1403 = vmatprep.subr.mxu0 0.0
        %1404 = vmatpush1.msra.mxu0 0.0
        %1405 = vmatprep.subr.mxu0 0.0
        %1406 = vmatpush1.msra.mxu0 0.0
        %1407 = vmatprep.subr.mxu0 0.0
        %1408 = vmatpush1.msra.mxu0 0.0
        %1409 = vmatprep.subr.mxu0 0.0
        %1410 = vmatpush1.msra.mxu0 0.0
        %1411 = vmatprep.subr.mxu0 0.0
        %1412 = vmatpush1.msra.mxu0 0.0
        %1413 = vmatprep.subr.mxu0 0.0
        %1414 = vmatpush1.msra.mxu0 0.0
        %1415 = vmatprep.subr.mxu0 0.0
        %1416 = vmatpush1.msra.mxu0 0.0
        %1417 = vmatprep.subr.mxu0 0.0
        %1418 = vmatpush1.msra.mxu0 0.0
        %1419 = vmatprep.subr.mxu0 0.0
        %1420 = vmatpush1.msra.mxu0 0.0
        %1421 = vmatprep.subr.mxu0 0.0
        %1422 = vmatpush1.msra.mxu0 0.0
        %1423 = vmatprep.subr.mxu0 0.0
        %1424 = vmatpush1.msra.mxu0 0.0
        %1425 = vmatprep.mubr.f32.mxu0 0.0
        %1426 = vmatmul.mubr.f32.gmra.mrb[0].mxu0 %v1359
        %v1427 = vpop.f32.mrb[0].mxu0
        %v1428 = vadd.f32 %v1355, %v1427
        %v1429 = vpop.f32.mrb[0].mxu0
        %1430 = vdwg.mxu0
        %s1431 = scalar_lea.vmem [#allocation3], 2
        %v1432 = vld [vmem:[%s1431] ss:$2 sm:$0xff]
        %v1434 = vsel %vm229, %v1432, 0
        %1436 = vmatprep.subr.mxu0 0.0
        %1437 = vmatpush1.msra.mxu0 %v1275
        %1438 = vmatprep.subr.mxu0 0.0
        %1439 = vmatpush1.msra.mxu0 %v1276
        %1440 = vmatprep.subr.mxu0 0.0
        %1441 = vmatpush1.msra.mxu0 %v1277
        %1442 = vmatprep.subr.mxu0 0.0
        %1443 = vmatpush1.msra.mxu0 %v1278
        %1444 = vmatprep.subr.mxu0 0.0
        %1445 = vmatpush1.msra.mxu0 0.0
        %1446 = vmatprep.subr.mxu0 0.0
        %1447 = vmatpush1.msra.mxu0 0.0
        %1448 = vmatprep.subr.mxu0 0.0
        %1449 = vmatpush1.msra.mxu0 0.0
        %1450 = vmatprep.subr.mxu0 0.0
        %1451 = vmatpush1.msra.mxu0 0.0
        %1452 = vmatprep.subr.mxu0 0.0
        %1453 = vmatpush1.msra.mxu0 0.0
        %1454 = vmatprep.subr.mxu0 0.0
        %1455 = vmatpush1.msra.mxu0 0.0
        %1456 = vmatprep.subr.mxu0 0.0
        %1457 = vmatpush1.msra.mxu0 0.0
        %1458 = vmatprep.subr.mxu0 0.0
        %1459 = vmatpush1.msra.mxu0 0.0
        %1460 = vmatprep.subr.mxu0 0.0
        %1461 = vmatpush1.msra.mxu0 0.0
        %1462 = vmatprep.subr.mxu0 0.0
        %1463 = vmatpush1.msra.mxu0 0.0
        %1464 = vmatprep.subr.mxu0 0.0
        %1465 = vmatpush1.msra.mxu0 0.0
        %1466 = vmatprep.subr.mxu0 0.0
        %1467 = vmatpush1.msra.mxu0 0.0
        %1468 = vmatprep.subr.mxu0 0.0
        %1469 = vmatpush1.msra.mxu0 0.0
        %1470 = vmatprep.subr.mxu0 0.0
        %1471 = vmatpush1.msra.mxu0 0.0
        %1472 = vmatprep.subr.mxu0 0.0
        %1473 = vmatpush1.msra.mxu0 0.0
        %1474 = vmatprep.subr.mxu0 0.0
        %1475 = vmatpush1.msra.mxu0 0.0
        %1476 = vmatprep.subr.mxu0 0.0
        %1477 = vmatpush1.msra.mxu0 0.0
        %1478 = vmatprep.subr.mxu0 0.0
        %1479 = vmatpush1.msra.mxu0 0.0
        %1480 = vmatprep.subr.mxu0 0.0
        %1481 = vmatpush1.msra.mxu0 0.0
        %1482 = vmatprep.subr.mxu0 0.0
        %1483 = vmatpush1.msra.mxu0 0.0
        %1484 = vmatprep.subr.mxu0 0.0
        %1485 = vmatpush1.msra.mxu0 0.0
        %1486 = vmatprep.subr.mxu0 0.0
        %1487 = vmatpush1.msra.mxu0 0.0
        %1488 = vmatprep.subr.mxu0 0.0
        %1489 = vmatpush1.msra.mxu0 0.0
        %1490 = vmatprep.subr.mxu0 0.0
        %1491 = vmatpush1.msra.mxu0 0.0
        %1492 = vmatprep.subr.mxu0 0.0
        %1493 = vmatpush1.msra.mxu0 0.0
        %1494 = vmatprep.subr.mxu0 0.0
        %1495 = vmatpush1.msra.mxu0 0.0
        %1496 = vmatprep.subr.mxu0 0.0
        %1497 = vmatpush1.msra.mxu0 0.0
        %1498 = vmatprep.subr.mxu0 0.0
        %1499 = vmatpush1.msra.mxu0 0.0
        %1500 = vmatprep.mubr.f32.mxu0 0.0
        %1501 = vmatmul.mubr.f32.gmra.mrb[0].mxu0 %v1434
        %v1502 = vpop.f32.mrb[0].mxu0
        %v1503 = vadd.f32 0.0, %v1502
        %v1504 = vpop.f32.mrb[0].mxu0
        %1505 = vdwg.mxu0
        %v1506 = vadd.f32 %v1428, %v1503
        %v1507 = vlaneseq
        %v1508 = vshrl.u32 %v1507, 7
        %v1509 = vsub.s32 0, %v1508
        %v1510 = vrot.slane %v1279, %v1509
        %v1511 = vadd.f32 %v1506, %v1510
        %v1512 = vsel %vm229, %v1511, 0.0
        %v1513 = vrot.slane %v1512, 4
        %v1514 = vadd.f32 %v1512, %v1513
        %v1515 = vrot.slane %v1514, 2
        %v1516 = vadd.f32 %v1514, %v1515
        %v1517 = vrot.slane %v1516, 1
        %v1518 = vadd.f32 %v1516, %v1517
        %v1520 = vsel %vm229, %v1518, 0
        %1522 = vmatprep.subr.mxu0 0.0
        %1523 = vmatpush1.msra.mxu0 %v195
        %1524 = vmatprep.subr.mxu0 0.0
        %1525 = vmatpush1.msra.mxu0 %v196
        %1526 = vmatprep.subr.mxu0 0.0
        %1527 = vmatpush1.msra.mxu0 %v197
        %1528 = vmatprep.subr.mxu0 0.0
        %1529 = vmatpush1.msra.mxu0 %v198
        %1530 = vmatprep.subr.mxu0 0.0
        %1531 = vmatpush1.msra.mxu0 0.0
        %1532 = vmatprep.subr.mxu0 0.0
        %1533 = vmatpush1.msra.mxu0 0.0
        %1534 = vmatprep.subr.mxu0 0.0
        %1535 = vmatpush1.msra.mxu0 0.0
        %1536 = vmatprep.subr.mxu0 0.0
        %1537 = vmatpush1.msra.mxu0 0.0
        %1538 = vmatprep.subr.mxu0 0.0
        %1539 = vmatpush1.msra.mxu0 0.0
        %1540 = vmatprep.subr.mxu0 0.0
        %1541 = vmatpush1.msra.mxu0 0.0
        %1542 = vmatprep.subr.mxu0 0.0
        %1543 = vmatpush1.msra.mxu0 0.0
        %1544 = vmatprep.subr.mxu0 0.0
        %1545 = vmatpush1.msra.mxu0 0.0
        %1546 = vmatprep.subr.mxu0 0.0
        %1547 = vmatpush1.msra.mxu0 0.0
        %1548 = vmatprep.subr.mxu0 0.0
        %1549 = vmatpush1.msra.mxu0 0.0
        %1550 = vmatprep.subr.mxu0 0.0
        %1551 = vmatpush1.msra.mxu0 0.0
        %1552 = vmatprep.subr.mxu0 0.0
        %1553 = vmatpush1.msra.mxu0 0.0
        %1554 = vmatprep.subr.mxu0 0.0
        %1555 = vmatpush1.msra.mxu0 0.0
        %1556 = vmatprep.subr.mxu0 0.0
        %1557 = vmatpush1.msra.mxu0 0.0
        %1558 = vmatprep.subr.mxu0 0.0
        %1559 = vmatpush1.msra.mxu0 0.0
        %1560 = vmatprep.subr.mxu0 0.0
        %1561 = vmatpush1.msra.mxu0 0.0
        %1562 = vmatprep.subr.mxu0 0.0
        %1563 = vmatpush1.msra.mxu0 0.0
        %1564 = vmatprep.subr.mxu0 0.0
        %1565 = vmatpush1.msra.mxu0 0.0
        %1566 = vmatprep.subr.mxu0 0.0
        %1567 = vmatpush1.msra.mxu0 0.0
        %1568 = vmatprep.subr.mxu0 0.0
        %1569 = vmatpush1.msra.mxu0 0.0
        %1570 = vmatprep.subr.mxu0 0.0
        %1571 = vmatpush1.msra.mxu0 0.0
        %1572 = vmatprep.subr.mxu0 0.0
        %1573 = vmatpush1.msra.mxu0 0.0
        %1574 = vmatprep.subr.mxu0 0.0
        %1575 = vmatpush1.msra.mxu0 0.0
        %1576 = vmatprep.subr.mxu0 0.0
        %1577 = vmatpush1.msra.mxu0 0.0
        %1578 = vmatprep.subr.mxu0 0.0
        %1579 = vmatpush1.msra.mxu0 0.0
        %1580 = vmatprep.subr.mxu0 0.0
        %1581 = vmatpush1.msra.mxu0 0.0
        %1582 = vmatprep.subr.mxu0 0.0
        %1583 = vmatpush1.msra.mxu0 0.0
        %1584 = vmatprep.subr.mxu0 0.0
        %1585 = vmatpush1.msra.mxu0 0.0
        %1586 = vmatprep.mubr.f32.mxu0 0.0
        %1587 = vmatmul.mubr.f32.gmra.mrb[0].mxu0 %v1520
        %v1588 = vpop.f32.mrb[0].mxu0
        %v1589 = vadd.f32 0.0, %v1588
        %v1590 = vpop.f32.mrb[0].mxu0
        %1591 = vdwg.mxu0
        %v1592 = vmul.f32 %v1589, 0.0625
        %v1593 = vlaneseq
        %v1594 = vshrl.u32 %v1593, 7
        %v1595 = vsub.s32 0, %v1594
        %v1596 = vrot.slane %v1592, %v1595
        %v1597 = vsub.f32 %v1511, %v1596
        %v1598 = vmul.f32 %v1597, %v1597
        %v1599 = vsel %vm229, %v1598, 0.0
        %v1600 = vrot.slane %v1599, 4
        %v1601 = vadd.f32 %v1599, %v1600
        %v1602 = vrot.slane %v1601, 2
        %v1603 = vadd.f32 %v1601, %v1602
        %v1604 = vrot.slane %v1603, 1
        %v1605 = vadd.f32 %v1603, %v1604
        %v1607 = vsel %vm229, %v1605, 0
        %1609 = vmatprep.subr.mxu0 0.0
        %1610 = vmatpush1.msra.mxu0 %v195
        %1611 = vmatprep.subr.mxu0 0.0
        %1612 = vmatpush1.msra.mxu0 %v196
        %1613 = vmatprep.subr.mxu0 0.0
        %1614 = vmatpush1.msra.mxu0 %v197
        %1615 = vmatprep.subr.mxu0 0.0
        %1616 = vmatpush1.msra.mxu0 %v198
        %1617 = vmatprep.subr.mxu0 0.0
        %1618 = vmatpush1.msra.mxu0 0.0
        %1619 = vmatprep.subr.mxu0 0.0
        %1620 = vmatpush1.msra.mxu0 0.0
        %1621 = vmatprep.subr.mxu0 0.0
        %1622 = vmatpush1.msra.mxu0 0.0
        %1623 = vmatprep.subr.mxu0 0.0
        %1624 = vmatpush1.msra.mxu0 0.0
        %1625 = vmatprep.subr.mxu0 0.0
        %1626 = vmatpush1.msra.mxu0 0.0
        %1627 = vmatprep.subr.mxu0 0.0
        %1628 = vmatpush1.msra.mxu0 0.0
        %1629 = vmatprep.subr.mxu0 0.0
        %1630 = vmatpush1.msra.mxu0 0.0
        %1631 = vmatprep.subr.mxu0 0.0
        %1632 = vmatpush1.msra.mxu0 0.0
        %1633 = vmatprep.subr.mxu0 0.0
        %1634 = vmatpush1.msra.mxu0 0.0
        %1635 = vmatprep.subr.mxu0 0.0
        %1636 = vmatpush1.msra.mxu0 0.0
        %1637 = vmatprep.subr.mxu0 0.0
        %1638 = vmatpush1.msra.mxu0 0.0
        %1639 = vmatprep.subr.mxu0 0.0
        %1640 = vmatpush1.msra.mxu0 0.0
        %1641 = vmatprep.subr.mxu0 0.0
        %1642 = vmatpush1.msra.mxu0 0.0
        %1643 = vmatprep.subr.mxu0 0.0
        %1644 = vmatpush1.msra.mxu0 0.0
        %1645 = vmatprep.subr.mxu0 0.0
        %1646 = vmatpush1.msra.mxu0 0.0
        %1647 = vmatprep.subr.mxu0 0.0
        %1648 = vmatpush1.msra.mxu0 0.0
        %1649 = vmatprep.subr.mxu0 0.0
        %1650 = vmatpush1.msra.mxu0 0.0
        %1651 = vmatprep.subr.mxu0 0.0
        %1652 = vmatpush1.msra.mxu0 0.0
        %1653 = vmatprep.subr.mxu0 0.0
        %1654 = vmatpush1.msra.mxu0 0.0
        %1655 = vmatprep.subr.mxu0 0.0
        %1656 = vmatpush1.msra.mxu0 0.0
        %1657 = vmatprep.subr.mxu0 0.0
        %1658 = vmatpush1.msra.mxu0 0.0
        %1659 = vmatprep.subr.mxu0 0.0
        %1660 = vmatpush1.msra.mxu0 0.0
        %1661 = vmatprep.subr.mxu0 0.0
        %1662 = vmatpush1.msra.mxu0 0.0
        %1663 = vmatprep.subr.mxu0 0.0
        %1664 = vmatpush1.msra.mxu0 0.0
        %1665 = vmatprep.subr.mxu0 0.0
        %1666 = vmatpush1.msra.mxu0 0.0
        %1667 = vmatprep.subr.mxu0 0.0
        %1668 = vmatpush1.msra.mxu0 0.0
        %1669 = vmatprep.subr.mxu0 0.0
        %1670 = vmatpush1.msra.mxu0 0.0
        %1671 = vmatprep.subr.mxu0 0.0
        %1672 = vmatpush1.msra.mxu0 0.0
        %1673 = vmatprep.mubr.f32.mxu0 0.0
        %1674 = vmatmul.mubr.f32.gmra.mrb[0].mxu0 %v1607
        %v1675 = vpop.f32.mrb[0].mxu0
        %v1676 = vadd.f32 0.0, %v1675
        %v1677 = vpop.f32.mrb[0].mxu0
        %1678 = vdwg.mxu0
        %v1679 = vmul.f32 %v1676, 0.0625
        %v1680 = vadd.f32 %v1679, 1e-05
        %v1681 = vrsqrt.pop %v1680
        %v1682 = vlaneseq
        %v1683 = vshrl.u32 %v1682, 7
        %v1684 = vsub.s32 0, %v1683
        %v1685 = vrot.slane %v1681, %v1684
        %v1686 = vmul.f32 %v1597, %v1685
        %v1687 = vlaneseq
        %v1688 = vshrl.u32 %v1687, 7
        %v1689 = vsub.s32 0, %v1688
        %v1690 = vrot.slane %v1280, %v1689
        %v1691 = vmul.f32 %v1686, %v1690
        %v1692 = vlaneseq
        %v1693 = vshrl.u32 %v1692, 7
        %v1694 = vsub.s32 0, %v1693
        %v1695 = vrot.slane %v1281, %v1694
        %v1696 = vadd.f32 %v1691, %v1695
        %v1697 = vmul.f32 %v1696, 0.5
        %v1698 = vmul.f32 %v1696, 0.70710677
        %v1699 = verf.f32.pop %v1698
        %v1700 = vadd.f32 %v1699, 1.0
        %v1701 = vmul.f32 %v1697, %v1700
        %1702 = vst.msk [vmem:[#allocation2] sm:$0x1] %vm773, 0.0
        %1703 = vst.msk [vmem:[#allocation2 + $0x9] sm:$0x1] %vm773, 0.0
        %1704 = vst.msk [vmem:[#allocation2 + $0x1] sm:$0xff] %vm229, %v1701
        %s1705 = scalar_lea.vmem %s1, 288
        %v1706 = vld [vmem:[%s1705] sm:$0xff]
        %v1707 = vld [vmem:[%s1705 + $0x8] sm:$0xff]
        %v1708 = vld [vmem:[%s1705 + $0x10] sm:$0xff]
        %v1709 = vld [vmem:[%s1705 + $0x18] sm:$0xff]
        %v1710 = vld [vmem:[%s1705 + $0x20] sm:$0xff]
        %v1711 = vld [vmem:[%s1705 + $0x28] sm:$0xff]
        %v1712 = vld [vmem:[%s1705 + $0x30] sm:$0xff]
        %v1713 = vld [vmem:[%s1705 + $0x38] sm:$0xff]
        %v1714 = vld [vmem:[%s1705 + $0x40] sm:$0xff]
        %v1715 = vld [vmem:[%s1705 + $0x48] sm:$0xff]
        %v1716 = vld [vmem:[%s1705 + $0x50] sm:$0xff]
        %v1717 = vld [vmem:[%s1705 + $0x58] sm:$0xff]
        %v1718 = vld [vmem:[%s2 + $0x3] sm:$0x1]
        %v1719 = vld [vmem:[%s2 + $0x9] sm:$0x1]
        %v1720 = vld [vmem:[%s2 + $0xf] sm:$0x1]
        %v1721 = vld [vmem:[#allocation2] ss:$2 sm:$0xf]
        %v1722 = vld [vmem:[%s799] ss:$2 sm:$0xf]
        %v1724 = vsel %vm229, %v1722, 0
        %1726 = vmatprep.subr.mxu0 0.0
        %1727 = vmatpush1.msra.mxu0 %v1710
        %1728 = vmatprep.subr.mxu0 0.0
        %1729 = vmatpush1.msra.mxu0 %v1711
        %1730 = vmatprep.subr.mxu0 0.0
        %1731 = vmatpush1.msra.mxu0 %v1712
        %1732 = vmatprep.subr.mxu0 0.0
        %1733 = vmatpush1.msra.mxu0 %v1713
        %1734 = vmatprep.subr.mxu0 0.0
        %1735 = vmatpush1.msra.mxu0 0.0
        %1736 = vmatprep.subr.mxu0 0.0
        %1737 = vmatpush1.msra.mxu0 0.0
        %1738 = vmatprep.subr.mxu0 0.0
        %1739 = vmatpush1.msra.mxu0 0.0
        %1740 = vmatprep.subr.mxu0 0.0
        %1741 = vmatpush1.msra.mxu0 0.0
        %1742 = vmatprep.subr.mxu0 0.0
        %1743 = vmatpush1.msra.mxu0 0.0
        %1744 = vmatprep.subr.mxu0 0.0
        %1745 = vmatpush1.msra.mxu0 0.0
        %1746 = vmatprep.subr.mxu0 0.0
        %1747 = vmatpush1.msra.mxu0 0.0
        %1748 = vmatprep.subr.mxu0 0.0
        %1749 = vmatpush1.msra.mxu0 0.0
        %1750 = vmatprep.subr.mxu0 0.0
        %1751 = vmatpush1.msra.mxu0 0.0
        %1752 = vmatprep.subr.mxu0 0.0
        %1753 = vmatpush1.msra.mxu0 0.0
        %1754 = vmatprep.subr.mxu0 0.0
        %1755 = vmatpush1.msra.mxu0 0.0
        %1756 = vmatprep.subr.mxu0 0.0
        %1757 = vmatpush1.msra.mxu0 0.0
        %1758 = vmatprep.subr.mxu0 0.0
        %1759 = vmatpush1.msra.mxu0 0.0
        %1760 = vmatprep.subr.mxu0 0.0
        %1761 = vmatpush1.msra.mxu0 0.0
        %1762 = vmatprep.subr.mxu0 0.0
        %1763 = vmatpush1.msra.mxu0 0.0
        %1764 = vmatprep.subr.mxu0 0.0
        %1765 = vmatpush1.msra.mxu0 0.0
        %1766 = vmatprep.subr.mxu0 0.0
        %1767 = vmatpush1.msra.mxu0 0.0
        %1768 = vmatprep.subr.mxu0 0.0
        %1769 = vmatpush1.msra.mxu0 0.0
        %1770 = vmatprep.subr.mxu0 0.0
        %1771 = vmatpush1.msra.mxu0 0.0
        %1772 = vmatprep.subr.mxu0 0.0
        %1773 = vmatpush1.msra.mxu0 0.0
        %1774 = vmatprep.subr.mxu0 0.0
        %1775 = vmatpush1.msra.mxu0 0.0
        %1776 = vmatprep.subr.mxu0 0.0
        %1777 = vmatpush1.msra.mxu0 0.0
        %1778 = vmatprep.subr.mxu0 0.0
        %1779 = vmatpush1.msra.mxu0 0.0
        %1780 = vmatprep.subr.mxu0 0.0
        %1781 = vmatpush1.msra.mxu0 0.0
        %1782 = vmatprep.subr.mxu0 0.0
        %1783 = vmatpush1.msra.mxu0 0.0
        %1784 = vmatprep.subr.mxu0 0.0
        %1785 = vmatpush1.msra.mxu0 0.0
        %1786 = vmatprep.subr.mxu0 0.0
        %1787 = vmatpush1.msra.mxu0 0.0
        %1788 = vmatprep.subr.mxu0 0.0
        %1789 = vmatpush1.msra.mxu0 0.0
        %1790 = vmatprep.mubr.f32.mxu0 0.0
        %1791 = vmatmul.mubr.f32.gmra.mrb[0].mxu0 %v1724
        %v1792 = vpop.f32.mrb[0].mxu0
        %v1793 = vadd.f32 0.0, %v1792
        %v1794 = vpop.f32.mrb[0].mxu0
        %1795 = vdwg.mxu0
        %v1797 = vsel %vm229, %v1721, 0
        %1799 = vmatprep.subr.mxu0 0.0
        %1800 = vmatpush1.msra.mxu0 %v1706
        %1801 = vmatprep.subr.mxu0 0.0
        %1802 = vmatpush1.msra.mxu0 %v1707
        %1803 = vmatprep.subr.mxu0 0.0
        %1804 = vmatpush1.msra.mxu0 %v1708
        %1805 = vmatprep.subr.mxu0 0.0
        %1806 = vmatpush1.msra.mxu0 %v1709
        %1807 = vmatprep.subr.mxu0 0.0
        %1808 = vmatpush1.msra.mxu0 0.0
        %1809 = vmatprep.subr.mxu0 0.0
        %1810 = vmatpush1.msra.mxu0 0.0
        %1811 = vmatprep.subr.mxu0 0.0
        %1812 = vmatpush1.msra.mxu0 0.0
        %1813 = vmatprep.subr.mxu0 0.0
        %1814 = vmatpush1.msra.mxu0 0.0
        %1815 = vmatprep.subr.mxu0 0.0
        %1816 = vmatpush1.msra.mxu0 0.0
        %1817 = vmatprep.subr.mxu0 0.0
        %1818 = vmatpush1.msra.mxu0 0.0
        %1819 = vmatprep.subr.mxu0 0.0
        %1820 = vmatpush1.msra.mxu0 0.0
        %1821 = vmatprep.subr.mxu0 0.0
        %1822 = vmatpush1.msra.mxu0 0.0
        %1823 = vmatprep.subr.mxu0 0.0
        %1824 = vmatpush1.msra.mxu0 0.0
        %1825 = vmatprep.subr.mxu0 0.0
        %1826 = vmatpush1.msra.mxu0 0.0
        %1827 = vmatprep.subr.mxu0 0.0
        %1828 = vmatpush1.msra.mxu0 0.0
        %1829 = vmatprep.subr.mxu0 0.0
        %1830 = vmatpush1.msra.mxu0 0.0
        %1831 = vmatprep.subr.mxu0 0.0
        %1832 = vmatpush1.msra.mxu0 0.0
        %1833 = vmatprep.subr.mxu0 0.0
        %1834 = vmatpush1.msra.mxu0 0.0
        %1835 = vmatprep.subr.mxu0 0.0
        %1836 = vmatpush1.msra.mxu0 0.0
        %1837 = vmatprep.subr.mxu0 0.0
        %1838 = vmatpush1.msra.mxu0 0.0
        %1839 = vmatprep.subr.mxu0 0.0
        %1840 = vmatpush1.msra.mxu0 0.0
        %1841 = vmatprep.subr.mxu0 0.0
        %1842 = vmatpush1.msra.mxu0 0.0
        %1843 = vmatprep.subr.mxu0 0.0
        %1844 = vmatpush1.msra.mxu0 0.0
        %1845 = vmatprep.subr.mxu0 0.0
        %1846 = vmatpush1.msra.mxu0 0.0
        %1847 = vmatprep.subr.mxu0 0.0
        %1848 = vmatpush1.msra.mxu0 0.0
        %1849 = vmatprep.subr.mxu0 0.0
        %1850 = vmatpush1.msra.mxu0 0.0
        %1851 = vmatprep.subr.mxu0 0.0
        %1852 = vmatpush1.msra.mxu0 0.0
        %1853 = vmatprep.subr.mxu0 0.0
        %1854 = vmatpush1.msra.mxu0 0.0
        %1855 = vmatprep.subr.mxu0 0.0
        %1856 = vmatpush1.msra.mxu0 0.0
        %1857 = vmatprep.subr.mxu0 0.0
        %1858 = vmatpush1.msra.mxu0 0.0
        %1859 = vmatprep.subr.mxu0 0.0
        %1860 = vmatpush1.msra.mxu0 0.0
        %1861 = vmatprep.subr.mxu0 0.0
        %1862 = vmatpush1.msra.mxu0 0.0
        %1863 = vmatprep.mubr.f32.mxu0 0.0
        %1864 = vmatmul.mubr.f32.gmra.mrb[0].mxu0 %v1797
        %v1865 = vpop.f32.mrb[0].mxu0
        %v1866 = vadd.f32 %v1793, %v1865
        %v1867 = vpop.f32.mrb[0].mxu0
        %1868 = vdwg.mxu0
        %v1869 = vld [vmem:[%s965] ss:$2 sm:$0xf]
        %v1871 = vsel %vm229, %v1869, 0
        %1873 = vmatprep.subr.mxu0 0.0
        %1874 = vmatpush1.msra.mxu0 %v1714
        %1875 = vmatprep.subr.mxu0 0.0
        %1876 = vmatpush1.msra.mxu0 %v1715
        %1877 = vmatprep.subr.mxu0 0.0
        %1878 = vmatpush1.msra.mxu0 %v1716
        %1879 = vmatprep.subr.mxu0 0.0
        %1880 = vmatpush1.msra.mxu0 %v1717
        %1881 = vmatprep.subr.mxu0 0.0
        %1882 = vmatpush1.msra.mxu0 0.0
        %1883 = vmatprep.subr.mxu0 0.0
        %1884 = vmatpush1.msra.mxu0 0.0
        %1885 = vmatprep.subr.mxu0 0.0
        %1886 = vmatpush1.msra.mxu0 0.0
        %1887 = vmatprep.subr.mxu0 0.0
        %1888 = vmatpush1.msra.mxu0 0.0
        %1889 = vmatprep.subr.mxu0 0.0
        %1890 = vmatpush1.msra.mxu0 0.0
        %1891 = vmatprep.subr.mxu0 0.0
        %1892 = vmatpush1.msra.mxu0 0.0
        %1893 = vmatprep.subr.mxu0 0.0
        %1894 = vmatpush1.msra.mxu0 0.0
        %1895 = vmatprep.subr.mxu0 0.0
        %1896 = vmatpush1.msra.mxu0 0.0
        %1897 = vmatprep.subr.mxu0 0.0
        %1898 = vmatpush1.msra.mxu0 0.0
        %1899 = vmatprep.subr.mxu0 0.0
        %1900 = vmatpush1.msra.mxu0 0.0
        %1901 = vmatprep.subr.mxu0 0.0
        %1902 = vmatpush1.msra.mxu0 0.0
        %1903 = vmatprep.subr.mxu0 0.0
        %1904 = vmatpush1.msra.mxu0 0.0
        %1905 = vmatprep.subr.mxu0 0.0
        %1906 = vmatpush1.msra.mxu0 0.0
        %1907 = vmatprep.subr.mxu0 0.0
        %1908 = vmatpush1.msra.mxu0 0.0
        %1909 = vmatprep.subr.mxu0 0.0
        %1910 = vmatpush1.msra.mxu0 0.0
        %1911 = vmatprep.subr.mxu0 0.0
        %1912 = vmatpush1.msra.mxu0 0.0
        %1913 = vmatprep.subr.mxu0 0.0
        %1914 = vmatpush1.msra.mxu0 0.0
        %1915 = vmatprep.subr.mxu0 0.0
        %1916 = vmatpush1.msra.mxu0 0.0
        %1917 = vmatprep.subr.mxu0 0.0
        %1918 = vmatpush1.msra.mxu0 0.0
        %1919 = vmatprep.subr.mxu0 0.0
        %1920 = vmatpush1.msra.mxu0 0.0
        %1921 = vmatprep.subr.mxu0 0.0
        %1922 = vmatpush1.msra.mxu0 0.0
        %1923 = vmatprep.subr.mxu0 0.0
        %1924 = vmatpush1.msra.mxu0 0.0
        %1925 = vmatprep.subr.mxu0 0.0
        %1926 = vmatpush1.msra.mxu0 0.0
        %1927 = vmatprep.subr.mxu0 0.0
        %1928 = vmatpush1.msra.mxu0 0.0
        %1929 = vmatprep.subr.mxu0 0.0
        %1930 = vmatpush1.msra.mxu0 0.0
        %1931 = vmatprep.subr.mxu0 0.0
        %1932 = vmatpush1.msra.mxu0 0.0
        %1933 = vmatprep.subr.mxu0 0.0
        %1934 = vmatpush1.msra.mxu0 0.0
        %1935 = vmatprep.subr.mxu0 0.0
        %1936 = vmatpush1.msra.mxu0 0.0
        %1937 = vmatprep.mubr.f32.mxu0 0.0
        %1938 = vmatmul.mubr.f32.gmra.mrb[0].mxu0 %v1871
        %v1939 = vpop.f32.mrb[0].mxu0
        %v1940 = vadd.f32 0.0, %v1939
        %v1941 = vpop.f32.mrb[0].mxu0
        %1942 = vdwg.mxu0
        %v1943 = vadd.f32 %v1866, %v1940
        %v1944 = vlaneseq
        %v1945 = vshrl.u32 %v1944, 7
        %v1946 = vsub.s32 0, %v1945
        %v1947 = vrot.slane %v1718, %v1946
        %v1948 = vadd.f32 %v1943, %v1947
        %vm1949 = vcmask 257024
        %v1950 = vsel %vm1949, %v1948, 0.0
        %v1951 = vrot.slane %v1950, 4
        %v1952 = vadd.f32 %v1950, %v1951
        %v1953 = vrot.slane %v1952, 2
        %v1954 = vadd.f32 %v1952, %v1953
        %v1955 = vrot.slane %v1954, 1
        %v1956 = vadd.f32 %v1954, %v1955
        %v1958 = vsel %vm229, %v1956, 0
        %1960 = vmatprep.subr.mxu0 0.0
        %1961 = vmatpush1.msra.mxu0 %v195
        %1962 = vmatprep.subr.mxu0 0.0
        %1963 = vmatpush1.msra.mxu0 %v196
        %1964 = vmatprep.subr.mxu0 0.0
        %1965 = vmatpush1.msra.mxu0 %v197
        %1966 = vmatprep.subr.mxu0 0.0
        %1967 = vmatpush1.msra.mxu0 %v198
        %1968 = vmatprep.subr.mxu0 0.0
        %1969 = vmatpush1.msra.mxu0 0.0
        %1970 = vmatprep.subr.mxu0 0.0
        %1971 = vmatpush1.msra.mxu0 0.0
        %1972 = vmatprep.subr.mxu0 0.0
        %1973 = vmatpush1.msra.mxu0 0.0
        %1974 = vmatprep.subr.mxu0 0.0
        %1975 = vmatpush1.msra.mxu0 0.0
        %1976 = vmatprep.subr.mxu0 0.0
        %1977 = vmatpush1.msra.mxu0 0.0
        %1978 = vmatprep.subr.mxu0 0.0
        %1979 = vmatpush1.msra.mxu0 0.0
        %1980 = vmatprep.subr.mxu0 0.0
        %1981 = vmatpush1.msra.mxu0 0.0
        %1982 = vmatprep.subr.mxu0 0.0
        %1983 = vmatpush1.msra.mxu0 0.0
        %1984 = vmatprep.subr.mxu0 0.0
        %1985 = vmatpush1.msra.mxu0 0.0
        %1986 = vmatprep.subr.mxu0 0.0
        %1987 = vmatpush1.msra.mxu0 0.0
        %1988 = vmatprep.subr.mxu0 0.0
        %1989 = vmatpush1.msra.mxu0 0.0
        %1990 = vmatprep.subr.mxu0 0.0
        %1991 = vmatpush1.msra.mxu0 0.0
        %1992 = vmatprep.subr.mxu0 0.0
        %1993 = vmatpush1.msra.mxu0 0.0
        %1994 = vmatprep.subr.mxu0 0.0
        %1995 = vmatpush1.msra.mxu0 0.0
        %1996 = vmatprep.subr.mxu0 0.0
        %1997 = vmatpush1.msra.mxu0 0.0
        %1998 = vmatprep.subr.mxu0 0.0
        %1999 = vmatpush1.msra.mxu0 0.0
        %2000 = vmatprep.subr.mxu0 0.0
        %2001 = vmatpush1.msra.mxu0 0.0
        %2002 = vmatprep.subr.mxu0 0.0
        %2003 = vmatpush1.msra.mxu0 0.0
        %2004 = vmatprep.subr.mxu0 0.0
        %2005 = vmatpush1.msra.mxu0 0.0
        %2006 = vmatprep.subr.mxu0 0.0
        %2007 = vmatpush1.msra.mxu0 0.0
        %2008 = vmatprep.subr.mxu0 0.0
        %2009 = vmatpush1.msra.mxu0 0.0
        %2010 = vmatprep.subr.mxu0 0.0
        %2011 = vmatpush1.msra.mxu0 0.0
        %2012 = vmatprep.subr.mxu0 0.0
        %2013 = vmatpush1.msra.mxu0 0.0
        %2014 = vmatprep.subr.mxu0 0.0
        %2015 = vmatpush1.msra.mxu0 0.0
        %2016 = vmatprep.subr.mxu0 0.0
        %2017 = vmatpush1.msra.mxu0 0.0
        %2018 = vmatprep.subr.mxu0 0.0
        %2019 = vmatpush1.msra.mxu0 0.0
        %2020 = vmatprep.subr.mxu0 0.0
        %2021 = vmatpush1.msra.mxu0 0.0
        %2022 = vmatprep.subr.mxu0 0.0
        %2023 = vmatpush1.msra.mxu0 0.0
        %2024 = vmatprep.mubr.f32.mxu0 0.0
        %2025 = vmatmul.mubr.f32.gmra.mrb[0].mxu0 %v1958
        %v2026 = vpop.f32.mrb[0].mxu0
        %v2027 = vadd.f32 0.0, %v2026
        %v2028 = vpop.f32.mrb[0].mxu0
        %2029 = vdwg.mxu0
        %v2030 = vmul.f32 %v2027, 0.125
        %v2031 = vlaneseq
        %v2032 = vshrl.u32 %v2031, 7
        %v2033 = vsub.s32 0, %v2032
        %v2034 = vrot.slane %v2030, %v2033
        %v2035 = vsub.f32 %v1948, %v2034
        %v2036 = vmul.f32 %v2035, %v2035
        %v2037 = vsel %vm1949, %v2036, 0.0
        %v2038 = vrot.slane %v2037, 4
        %v2039 = vadd.f32 %v2037, %v2038
        %v2040 = vrot.slane %v2039, 2
        %v2041 = vadd.f32 %v2039, %v2040
        %v2042 = vrot.slane %v2041, 1
        %v2043 = vadd.f32 %v2041, %v2042
        %v2045 = vsel %vm229, %v2043, 0
        %2047 = vmatprep.subr.mxu0 0.0
        %2048 = vmatpush1.msra.mxu0 %v195
        %2049 = vmatprep.subr.mxu0 0.0
        %2050 = vmatpush1.msra.mxu0 %v196
        %2051 = vmatprep.subr.mxu0 0.0
        %2052 = vmatpush1.msra.mxu0 %v197
        %2053 = vmatprep.subr.mxu0 0.0
        %2054 = vmatpush1.msra.mxu0 %v198
        %2055 = vmatprep.subr.mxu0 0.0
        %2056 = vmatpush1.msra.mxu0 0.0
        %2057 = vmatprep.subr.mxu0 0.0
        %2058 = vmatpush1.msra.mxu0 0.0
        %2059 = vmatprep.subr.mxu0 0.0
        %2060 = vmatpush1.msra.mxu0 0.0
        %2061 = vmatprep.subr.mxu0 0.0
        %2062 = vmatpush1.msra.mxu0 0.0
        %2063 = vmatprep.subr.mxu0 0.0
        %2064 = vmatpush1.msra.mxu0 0.0
        %2065 = vmatprep.subr.mxu0 0.0
        %2066 = vmatpush1.msra.mxu0 0.0
        %2067 = vmatprep.subr.mxu0 0.0
        %2068 = vmatpush1.msra.mxu0 0.0
        %2069 = vmatprep.subr.mxu0 0.0
        %2070 = vmatpush1.msra.mxu0 0.0
        %2071 = vmatprep.subr.mxu0 0.0
        %2072 = vmatpush1.msra.mxu0 0.0
        %2073 = vmatprep.subr.mxu0 0.0
        %2074 = vmatpush1.msra.mxu0 0.0
        %2075 = vmatprep.subr.mxu0 0.0
        %2076 = vmatpush1.msra.mxu0 0.0
        %2077 = vmatprep.subr.mxu0 0.0
        %2078 = vmatpush1.msra.mxu0 0.0
        %2079 = vmatprep.subr.mxu0 0.0
        %2080 = vmatpush1.msra.mxu0 0.0
        %2081 = vmatprep.subr.mxu0 0.0
        %2082 = vmatpush1.msra.mxu0 0.0
        %2083 = vmatprep.subr.mxu0 0.0
        %2084 = vmatpush1.msra.mxu0 0.0
        %2085 = vmatprep.subr.mxu0 0.0
        %2086 = vmatpush1.msra.mxu0 0.0
        %2087 = vmatprep.subr.mxu0 0.0
        %2088 = vmatpush1.msra.mxu0 0.0
        %2089 = vmatprep.subr.mxu0 0.0
        %2090 = vmatpush1.msra.mxu0 0.0
        %2091 = vmatprep.subr.mxu0 0.0
        %2092 = vmatpush1.msra.mxu0 0.0
        %2093 = vmatprep.subr.mxu0 0.0
        %2094 = vmatpush1.msra.mxu0 0.0
        %2095 = vmatprep.subr.mxu0 0.0
        %2096 = vmatpush1.msra.mxu0 0.0
        %2097 = vmatprep.subr.mxu0 0.0
        %2098 = vmatpush1.msra.mxu0 0.0
        %2099 = vmatprep.subr.mxu0 0.0
        %2100 = vmatpush1.msra.mxu0 0.0
        %2101 = vmatprep.subr.mxu0 0.0
        %2102 = vmatpush1.msra.mxu0 0.0
        %2103 = vmatprep.subr.mxu0 0.0
        %2104 = vmatpush1.msra.mxu0 0.0
        %2105 = vmatprep.subr.mxu0 0.0
        %2106 = vmatpush1.msra.mxu0 0.0
        %2107 = vmatprep.subr.mxu0 0.0
        %2108 = vmatpush1.msra.mxu0 0.0
        %2109 = vmatprep.subr.mxu0 0.0
        %2110 = vmatpush1.msra.mxu0 0.0
        %2111 = vmatprep.mubr.f32.mxu0 0.0
        %2112 = vmatmul.mubr.f32.gmra.mrb[0].mxu0 %v2045
        %v2113 = vpop.f32.mrb[0].mxu0
        %v2114 = vadd.f32 0.0, %v2113
        %v2115 = vpop.f32.mrb[0].mxu0
        %2116 = vdwg.mxu0
        %v2117 = vmul.f32 %v2114, 0.125
        %v2118 = vadd.f32 %v2117, 1e-05
        %v2119 = vrsqrt.pop %v2118
        %v2120 = vlaneseq
        %v2121 = vshrl.u32 %v2120, 7
        %v2122 = vsub.s32 0, %v2121
        %v2123 = vrot.slane %v2119, %v2122
        %v2124 = vmul.f32 %v2035, %v2123
        %v2125 = vlaneseq
        %v2126 = vshrl.u32 %v2125, 7
        %v2127 = vsub.s32 0, %v2126
        %v2128 = vrot.slane %v1719, %v2127
        %v2129 = vmul.f32 %v2124, %v2128
        %v2130 = vlaneseq
        %v2131 = vshrl.u32 %v2130, 7
        %v2132 = vsub.s32 0, %v2131
        %v2133 = vrot.slane %v1720, %v2132
        %v2134 = vadd.f32 %v2129, %v2133
        %v2135 = vmul.f32 %v2134, 0.5
        %v2136 = vmul.f32 %v2134, 0.70710677
        %v2137 = verf.f32.pop %v2136
        %v2138 = vadd.f32 %v2137, 1.0
        %v2139 = vmul.f32 %v2135, %v2138
        %2140 = vst.msk [vmem:[#allocation3] sm:$0x1] %vm773, 0.0
        %2141 = vst.msk [vmem:[#allocation3 + $0x5] sm:$0x1] %vm773, 0.0
        %2142 = vst.msk [vmem:[#allocation3 + $0x1] sm:$0xf] %vm1949, %v2139
        %s2143 = scalar_lea.vmem %s1, 384
        %v2144 = vld [vmem:[%s2143] sm:$0xff]
        %v2145 = vld [vmem:[%s2143 + $0x8] sm:$0xff]
        %v2146 = vld [vmem:[%s2143 + $0x10] sm:$0xff]
        %v2147 = vld [vmem:[%s2143 + $0x18] sm:$0xff]
        %v2148 = vld [vmem:[%s2143 + $0x20] sm:$0xff]
        %v2149 = vld [vmem:[%s2143 + $0x28] sm:$0xff]
        %v2150 = vld [vmem:[%s2143 + $0x30] sm:$0xff]
        %v2151 = vld [vmem:[%s2143 + $0x38] sm:$0xff]
        %v2152 = vld [vmem:[%s2143 + $0x40] sm:$0xff]
        %v2153 = vld [vmem:[%s2143 + $0x48] sm:$0xff]
        %v2154 = vld [vmem:[%s2143 + $0x50] sm:$0xff]
        %v2155 = vld [vmem:[%s2143 + $0x58] sm:$0xff]
        %v2156 = vld [vmem:[%s2 + $0x4] sm:$0x1]
        %v2157 = vld [vmem:[%s2 + $0xa] sm:$0x1]
        %v2158 = vld [vmem:[%s2 + $0x10] sm:$0x1]
        %v2159 = vld [vmem:[#allocation3] ss:$2 sm:$0x3]
        %v2160 = vld [vmem:[%s1283] ss:$2 sm:$0x3]
        %v2162 = vsel %vm229, %v2160, 0
        %2164 = vmatprep.subr.mxu0 0.0
        %2165 = vmatpush1.msra.mxu0 %v2148
        %2166 = vmatprep.subr.mxu0 0.0
        %2167 = vmatpush1.msra.mxu0 %v2149
        %2168 = vmatprep.subr.mxu0 0.0
        %2169 = vmatpush1.msra.mxu0 %v2150
        %2170 = vmatprep.subr.mxu0 0.0
        %2171 = vmatpush1.msra.mxu0 %v2151
        %2172 = vmatprep.subr.mxu0 0.0
        %2173 = vmatpush1.msra.mxu0 0.0
        %2174 = vmatprep.subr.mxu0 0.0
        %2175 = vmatpush1.msra.mxu0 0.0
        %2176 = vmatprep.subr.mxu0 0.0
        %2177 = vmatpush1.msra.mxu0 0.0
        %2178 = vmatprep.subr.mxu0 0.0
        %2179 = vmatpush1.msra.mxu0 0.0
        %2180 = vmatprep.subr.mxu0 0.0
        %2181 = vmatpush1.msra.mxu0 0.0
        %2182 = vmatprep.subr.mxu0 0.0
        %2183 = vmatpush1.msra.mxu0 0.0
        %2184 = vmatprep.subr.mxu0 0.0
        %2185 = vmatpush1.msra.mxu0 0.0
        %2186 = vmatprep.subr.mxu0 0.0
        %2187 = vmatpush1.msra.mxu0 0.0
        %2188 = vmatprep.subr.mxu0 0.0
        %2189 = vmatpush1.msra.mxu0 0.0
        %2190 = vmatprep.subr.mxu0 0.0
        %2191 = vmatpush1.msra.mxu0 0.0
        %2192 = vmatprep.subr.mxu0 0.0
        %2193 = vmatpush1.msra.mxu0 0.0
        %2194 = vmatprep.subr.mxu0 0.0
        %2195 = vmatpush1.msra.mxu0 0.0
        %2196 = vmatprep.subr.mxu0 0.0
        %2197 = vmatpush1.msra.mxu0 0.0
        %2198 = vmatprep.subr.mxu0 0.0
        %2199 = vmatpush1.msra.mxu0 0.0
        %2200 = vmatprep.subr.mxu0 0.0
        %2201 = vmatpush1.msra.mxu0 0.0
        %2202 = vmatprep.subr.mxu0 0.0
        %2203 = vmatpush1.msra.mxu0 0.0
        %2204 = vmatprep.subr.mxu0 0.0
        %2205 = vmatpush1.msra.mxu0 0.0
        %2206 = vmatprep.subr.mxu0 0.0
        %2207 = vmatpush1.msra.mxu0 0.0
        %2208 = vmatprep.subr.mxu0 0.0
        %2209 = vmatpush1.msra.mxu0 0.0
        %2210 = vmatprep.subr.mxu0 0.0
        %2211 = vmatpush1.msra.mxu0 0.0
        %2212 = vmatprep.subr.mxu0 0.0
        %2213 = vmatpush1.msra.mxu0 0.0
        %2214 = vmatprep.subr.mxu0 0.0
        %2215 = vmatpush1.msra.mxu0 0.0
        %2216 = vmatprep.subr.mxu0 0.0
        %2217 = vmatpush1.msra.mxu0 0.0
        %2218 = vmatprep.subr.mxu0 0.0
        %2219 = vmatpush1.msra.mxu0 0.0
        %2220 = vmatprep.subr.mxu0 0.0
        %2221 = vmatpush1.msra.mxu0 0.0
        %2222 = vmatprep.subr.mxu0 0.0
        %2223 = vmatpush1.msra.mxu0 0.0
        %2224 = vmatprep.subr.mxu0 0.0
        %2225 = vmatpush1.msra.mxu0 0.0
        %2226 = vmatprep.subr.mxu0 0.0
        %2227 = vmatpush1.msra.mxu0 0.0
        %2228 = vmatprep.mubr.f32.mxu0 0.0
        %2229 = vmatmul.mubr.f32.gmra.mrb[0].mxu0 %v2162
        %v2230 = vpop.f32.mrb[0].mxu0
        %v2231 = vadd.f32 0.0, %v2230
        %v2232 = vpop.f32.mrb[0].mxu0
        %2233 = vdwg.mxu0
        %v2235 = vsel %vm229, %v2159, 0
        %2237 = vmatprep.subr.mxu0 0.0
        %2238 = vmatpush1.msra.mxu0 %v2144
        %2239 = vmatprep.subr.mxu0 0.0
        %2240 = vmatpush1.msra.mxu0 %v2145
        %2241 = vmatprep.subr.mxu0 0.0
        %2242 = vmatpush1.msra.mxu0 %v2146
        %2243 = vmatprep.subr.mxu0 0.0
        %2244 = vmatpush1.msra.mxu0 %v2147
        %2245 = vmatprep.subr.mxu0 0.0
        %2246 = vmatpush1.msra.mxu0 0.0
        %2247 = vmatprep.subr.mxu0 0.0
        %2248 = vmatpush1.msra.mxu0 0.0
        %2249 = vmatprep.subr.mxu0 0.0
        %2250 = vmatpush1.msra.mxu0 0.0
        %2251 = vmatprep.subr.mxu0 0.0
        %2252 = vmatpush1.msra.mxu0 0.0
        %2253 = vmatprep.subr.mxu0 0.0
        %2254 = vmatpush1.msra.mxu0 0.0
        %2255 = vmatprep.subr.mxu0 0.0
        %2256 = vmatpush1.msra.mxu0 0.0
        %2257 = vmatprep.subr.mxu0 0.0
        %2258 = vmatpush1.msra.mxu0 0.0
        %2259 = vmatprep.subr.mxu0 0.0
        %2260 = vmatpush1.msra.mxu0 0.0
        %2261 = vmatprep.subr.mxu0 0.0
        %2262 = vmatpush1.msra.mxu0 0.0
        %2263 = vmatprep.subr.mxu0 0.0
        %2264 = vmatpush1.msra.mxu0 0.0
        %2265 = vmatprep.subr.mxu0 0.0
        %2266 = vmatpush1.msra.mxu0 0.0
        %2267 = vmatprep.subr.mxu0 0.0
        %2268 = vmatpush1.msra.mxu0 0.0
        %2269 = vmatprep.subr.mxu0 0.0
        %2270 = vmatpush1.msra.mxu0 0.0
        %2271 = vmatprep.subr.mxu0 0.0
        %2272 = vmatpush1.msra.mxu0 0.0
        %2273 = vmatprep.subr.mxu0 0.0
        %2274 = vmatpush1.msra.mxu0 0.0
        %2275 = vmatprep.subr.mxu0 0.0
        %2276 = vmatpush1.msra.mxu0 0.0
        %2277 = vmatprep.subr.mxu0 0.0
        %2278 = vmatpush1.msra.mxu0 0.0
        %2279 = vmatprep.subr.mxu0 0.0
        %2280 = vmatpush1.msra.mxu0 0.0
        %2281 = vmatprep.subr.mxu0 0.0
        %2282 = vmatpush1.msra.mxu0 0.0
        %2283 = vmatprep.subr.mxu0 0.0
        %2284 = vmatpush1.msra.mxu0 0.0
        %2285 = vmatprep.subr.mxu0 0.0
        %2286 = vmatpush1.msra.mxu0 0.0
        %2287 = vmatprep.subr.mxu0 0.0
        %2288 = vmatpush1.msra.mxu0 0.0
        %2289 = vmatprep.subr.mxu0 0.0
        %2290 = vmatpush1.msra.mxu0 0.0
        %2291 = vmatprep.subr.mxu0 0.0
        %2292 = vmatpush1.msra.mxu0 0.0
        %2293 = vmatprep.subr.mxu0 0.0
        %2294 = vmatpush1.msra.mxu0 0.0
        %2295 = vmatprep.subr.mxu0 0.0
        %2296 = vmatpush1.msra.mxu0 0.0
        %2297 = vmatprep.subr.mxu0 0.0
        %2298 = vmatpush1.msra.mxu0 0.0
        %2299 = vmatprep.subr.mxu0 0.0
        %2300 = vmatpush1.msra.mxu0 0.0
        %2301 = vmatprep.mubr.f32.mxu0 0.0
        %2302 = vmatmul.mubr.f32.gmra.mrb[0].mxu0 %v2235
        %v2303 = vpop.f32.mrb[0].mxu0
        %v2304 = vadd.f32 %v2231, %v2303
        %v2305 = vpop.f32.mrb[0].mxu0
        %2306 = vdwg.mxu0
        %v2307 = vld [vmem:[%s1431] ss:$2 sm:$0x3]
        %v2309 = vsel %vm229, %v2307, 0
        %2311 = vmatprep.subr.mxu0 0.0
        %2312 = vmatpush1.msra.mxu0 %v2152
        %2313 = vmatprep.subr.mxu0 0.0
        %2314 = vmatpush1.msra.mxu0 %v2153
        %2315 = vmatprep.subr.mxu0 0.0
        %2316 = vmatpush1.msra.mxu0 %v2154
        %2317 = vmatprep.subr.mxu0 0.0
        %2318 = vmatpush1.msra.mxu0 %v2155
        %2319 = vmatprep.subr.mxu0 0.0
        %2320 = vmatpush1.msra.mxu0 0.0
        %2321 = vmatprep.subr.mxu0 0.0
        %2322 = vmatpush1.msra.mxu0 0.0
        %2323 = vmatprep.subr.mxu0 0.0
        %2324 = vmatpush1.msra.mxu0 0.0
        %2325 = vmatprep.subr.mxu0 0.0
        %2326 = vmatpush1.msra.mxu0 0.0
        %2327 = vmatprep.subr.mxu0 0.0
        %2328 = vmatpush1.msra.mxu0 0.0
        %2329 = vmatprep.subr.mxu0 0.0
        %2330 = vmatpush1.msra.mxu0 0.0
        %2331 = vmatprep.subr.mxu0 0.0
        %2332 = vmatpush1.msra.mxu0 0.0
        %2333 = vmatprep.subr.mxu0 0.0
        %2334 = vmatpush1.msra.mxu0 0.0
        %2335 = vmatprep.subr.mxu0 0.0
        %2336 = vmatpush1.msra.mxu0 0.0
        %2337 = vmatprep.subr.mxu0 0.0
        %2338 = vmatpush1.msra.mxu0 0.0
        %2339 = vmatprep.subr.mxu0 0.0
        %2340 = vmatpush1.msra.mxu0 0.0
        %2341 = vmatprep.subr.mxu0 0.0
        %2342 = vmatpush1.msra.mxu0 0.0
        %2343 = vmatprep.subr.mxu0 0.0
        %2344 = vmatpush1.msra.mxu0 0.0
        %2345 = vmatprep.subr.mxu0 0.0
        %2346 = vmatpush1.msra.mxu0 0.0
        %2347 = vmatprep.subr.mxu0 0.0
        %2348 = vmatpush1.msra.mxu0 0.0
        %2349 = vmatprep.subr.mxu0 0.0
        %2350 = vmatpush1.msra.mxu0 0.0
        %2351 = vmatprep.subr.mxu0 0.0
        %2352 = vmatpush1.msra.mxu0 0.0
        %2353 = vmatprep.subr.mxu0 0.0
        %2354 = vmatpush1.msra.mxu0 0.0
        %2355 = vmatprep.subr.mxu0 0.0
        %2356 = vmatpush1.msra.mxu0 0.0
        %2357 = vmatprep.subr.mxu0 0.0
        %2358 = vmatpush1.msra.mxu0 0.0
        %2359 = vmatprep.subr.mxu0 0.0
        %2360 = vmatpush1.msra.mxu0 0.0
        %2361 = vmatprep.subr.mxu0 0.0
        %2362 = vmatpush1.msra.mxu0 0.0
        %2363 = vmatprep.subr.mxu0 0.0
        %2364 = vmatpush1.msra.mxu0 0.0
        %2365 = vmatprep.subr.mxu0 0.0
        %2366 = vmatpush1.msra.mxu0 0.0
        %2367 = vmatprep.subr.mxu0 0.0
        %2368 = vmatpush1.msra.mxu0 0.0
        %2369 = vmatprep.subr.mxu0 0.0
        %2370 = vmatpush1.msra.mxu0 0.0
        %2371 = vmatprep.subr.mxu0 0.0
        %2372 = vmatpush1.msra.mxu0 0.0
        %2373 = vmatprep.subr.mxu0 0.0
        %2374 = vmatpush1.msra.mxu0 0.0
        %2375 = vmatprep.mubr.f32.mxu0 0.0
        %2376 = vmatmul.mubr.f32.gmra.mrb[0].mxu0 %v2309
        %v2377 = vpop.f32.mrb[0].mxu0
        %v2378 = vadd.f32 0.0, %v2377
        %v2379 = vpop.f32.mrb[0].mxu0
        %2380 = vdwg.mxu0
        %v2381 = vadd.f32 %v2304, %v2378
        %v2382 = vlaneseq
        %v2383 = vshrl.u32 %v2382, 7
        %v2384 = vsub.s32 0, %v2383
        %v2385 = vrot.slane %v2156, %v2384
        %v2386 = vadd.f32 %v2381, %v2385
        %vm2387 = vcmask 254976
        %v2388 = vsel %vm2387, %v2386, 0.0
        %v2389 = vrot.slane %v2388, 4
        %v2390 = vadd.f32 %v2388, %v2389
        %v2391 = vrot.slane %v2390, 2
        %v2392 = vadd.f32 %v2390, %v2391
        %v2393 = vrot.slane %v2392, 1
        %v2394 = vadd.f32 %v2392, %v2393
        %v2396 = vsel %vm229, %v2394, 0
        %2398 = vmatprep.subr.mxu0 0.0
        %2399 = vmatpush1.msra.mxu0 %v195
        %2400 = vmatprep.subr.mxu0 0.0
        %2401 = vmatpush1.msra.mxu0 %v196
        %2402 = vmatprep.subr.mxu0 0.0
        %2403 = vmatpush1.msra.mxu0 %v197
        %2404 = vmatprep.subr.mxu0 0.0
        %2405 = vmatpush1.msra.mxu0 %v198
        %2406 = vmatprep.subr.mxu0 0.0
        %2407 = vmatpush1.msra.mxu0 0.0
        %2408 = vmatprep.subr.mxu0 0.0
        %2409 = vmatpush1.msra.mxu0 0.0
        %2410 = vmatprep.subr.mxu0 0.0
        %2411 = vmatpush1.msra.mxu0 0.0
        %2412 = vmatprep.subr.mxu0 0.0
        %2413 = vmatpush1.msra.mxu0 0.0
        %2414 = vmatprep.subr.mxu0 0.0
        %2415 = vmatpush1.msra.mxu0 0.0
        %2416 = vmatprep.subr.mxu0 0.0
        %2417 = vmatpush1.msra.mxu0 0.0
        %2418 = vmatprep.subr.mxu0 0.0
        %2419 = vmatpush1.msra.mxu0 0.0
        %2420 = vmatprep.subr.mxu0 0.0
        %2421 = vmatpush1.msra.mxu0 0.0
        %2422 = vmatprep.subr.mxu0 0.0
        %2423 = vmatpush1.msra.mxu0 0.0
        %2424 = vmatprep.subr.mxu0 0.0
        %2425 = vmatpush1.msra.mxu0 0.0
        %2426 = vmatprep.subr.mxu0 0.0
        %2427 = vmatpush1.msra.mxu0 0.0
        %2428 = vmatprep.subr.mxu0 0.0
        %2429 = vmatpush1.msra.mxu0 0.0
        %2430 = vmatprep.subr.mxu0 0.0
        %2431 = vmatpush1.msra.mxu0 0.0
        %2432 = vmatprep.subr.mxu0 0.0
        %2433 = vmatpush1.msra.mxu0 0.0
        %2434 = vmatprep.subr.mxu0 0.0
        %2435 = vmatpush1.msra.mxu0 0.0
        %2436 = vmatprep.subr.mxu0 0.0
        %2437 = vmatpush1.msra.mxu0 0.0
        %2438 = vmatprep.subr.mxu0 0.0
        %2439 = vmatpush1.msra.mxu0 0.0
        %2440 = vmatprep.subr.mxu0 0.0
        %2441 = vmatpush1.msra.mxu0 0.0
        %2442 = vmatprep.subr.mxu0 0.0
        %2443 = vmatpush1.msra.mxu0 0.0
        %2444 = vmatprep.subr.mxu0 0.0
        %2445 = vmatpush1.msra.mxu0 0.0
        %2446 = vmatprep.subr.mxu0 0.0
        %2447 = vmatpush1.msra.mxu0 0.0
        %2448 = vmatprep.subr.mxu0 0.0
        %2449 = vmatpush1.msra.mxu0 0.0
        %2450 = vmatprep.subr.mxu0 0.0
        %2451 = vmatpush1.msra.mxu0 0.0
        %2452 = vmatprep.subr.mxu0 0.0
        %2453 = vmatpush1.msra.mxu0 0.0
        %2454 = vmatprep.subr.mxu0 0.0
        %2455 = vmatpush1.msra.mxu0 0.0
        %2456 = vmatprep.subr.mxu0 0.0
        %2457 = vmatpush1.msra.mxu0 0.0
        %2458 = vmatprep.subr.mxu0 0.0
        %2459 = vmatpush1.msra.mxu0 0.0
        %2460 = vmatprep.subr.mxu0 0.0
        %2461 = vmatpush1.msra.mxu0 0.0
        %2462 = vmatprep.mubr.f32.mxu0 0.0
        %2463 = vmatmul.mubr.f32.gmra.mrb[0].mxu0 %v2396
        %v2464 = vpop.f32.mrb[0].mxu0
        %v2465 = vadd.f32 0.0, %v2464
        %v2466 = vpop.f32.mrb[0].mxu0
        %2467 = vdwg.mxu0
        %v2468 = vmul.f32 %v2465, 0.25
        %v2469 = vlaneseq
        %v2470 = vshrl.u32 %v2469, 7
        %v2471 = vsub.s32 0, %v2470
        %v2472 = vrot.slane %v2468, %v2471
        %v2473 = vsub.f32 %v2386, %v2472
        %v2474 = vmul.f32 %v2473, %v2473
        %v2475 = vsel %vm2387, %v2474, 0.0
        %v2476 = vrot.slane %v2475, 4
        %v2477 = vadd.f32 %v2475, %v2476
        %v2478 = vrot.slane %v2477, 2
        %v2479 = vadd.f32 %v2477, %v2478
        %v2480 = vrot.slane %v2479, 1
        %v2481 = vadd.f32 %v2479, %v2480
        %v2483 = vsel %vm229, %v2481, 0
        %2485 = vmatprep.subr.mxu0 0.0
        %2486 = vmatpush1.msra.mxu0 %v195
        %2487 = vmatprep.subr.mxu0 0.0
        %2488 = vmatpush1.msra.mxu0 %v196
        %2489 = vmatprep.subr.mxu0 0.0
        %2490 = vmatpush1.msra.mxu0 %v197
        %2491 = vmatprep.subr.mxu0 0.0
        %2492 = vmatpush1.msra.mxu0 %v198
        %2493 = vmatprep.subr.mxu0 0.0
        %2494 = vmatpush1.msra.mxu0 0.0
        %2495 = vmatprep.subr.mxu0 0.0
        %2496 = vmatpush1.msra.mxu0 0.0
        %2497 = vmatprep.subr.mxu0 0.0
        %2498 = vmatpush1.msra.mxu0 0.0
        %2499 = vmatprep.subr.mxu0 0.0
        %2500 = vmatpush1.msra.mxu0 0.0
        %2501 = vmatprep.subr.mxu0 0.0
        %2502 = vmatpush1.msra.mxu0 0.0
        %2503 = vmatprep.subr.mxu0 0.0
        %2504 = vmatpush1.msra.mxu0 0.0
        %2505 = vmatprep.subr.mxu0 0.0
        %2506 = vmatpush1.msra.mxu0 0.0
        %2507 = vmatprep.subr.mxu0 0.0
        %2508 = vmatpush1.msra.mxu0 0.0
        %2509 = vmatprep.subr.mxu0 0.0
        %2510 = vmatpush1.msra.mxu0 0.0
        %2511 = vmatprep.subr.mxu0 0.0
        %2512 = vmatpush1.msra.mxu0 0.0
        %2513 = vmatprep.subr.mxu0 0.0
        %2514 = vmatpush1.msra.mxu0 0.0
        %2515 = vmatprep.subr.mxu0 0.0
        %2516 = vmatpush1.msra.mxu0 0.0
        %2517 = vmatprep.subr.mxu0 0.0
        %2518 = vmatpush1.msra.mxu0 0.0
        %2519 = vmatprep.subr.mxu0 0.0
        %2520 = vmatpush1.msra.mxu0 0.0
        %2521 = vmatprep.subr.mxu0 0.0
        %2522 = vmatpush1.msra.mxu0 0.0
        %2523 = vmatprep.subr.mxu0 0.0
        %2524 = vmatpush1.msra.mxu0 0.0
        %2525 = vmatprep.subr.mxu0 0.0
        %2526 = vmatpush1.msra.mxu0 0.0
        %2527 = vmatprep.subr.mxu0 0.0
        %2528 = vmatpush1.msra.mxu0 0.0
        %2529 = vmatprep.subr.mxu0 0.0
        %2530 = vmatpush1.msra.mxu0 0.0
        %2531 = vmatprep.subr.mxu0 0.0
        %2532 = vmatpush1.msra.mxu0 0.0
        %2533 = vmatprep.subr.mxu0 0.0
        %2534 = vmatpush1.msra.mxu0 0.0
        %2535 = vmatprep.subr.mxu0 0.0
        %2536 = vmatpush1.msra.mxu0 0.0
        %2537 = vmatprep.subr.mxu0 0.0
        %2538 = vmatpush1.msra.mxu0 0.0
        %2539 = vmatprep.subr.mxu0 0.0
        %2540 = vmatpush1.msra.mxu0 0.0
        %2541 = vmatprep.subr.mxu0 0.0
        %2542 = vmatpush1.msra.mxu0 0.0
        %2543 = vmatprep.subr.mxu0 0.0
        %2544 = vmatpush1.msra.mxu0 0.0
        %2545 = vmatprep.subr.mxu0 0.0
        %2546 = vmatpush1.msra.mxu0 0.0
        %2547 = vmatprep.subr.mxu0 0.0
        %2548 = vmatpush1.msra.mxu0 0.0
        %2549 = vmatprep.mubr.f32.mxu0 0.0
        %2550 = vmatmul.mubr.f32.gmra.mrb[0].mxu0 %v2483
        %v2551 = vpop.f32.mrb[0].mxu0
        %v2552 = vadd.f32 0.0, %v2551
        %v2553 = vpop.f32.mrb[0].mxu0
        %2554 = vdwg.mxu0
        %v2555 = vmul.f32 %v2552, 0.25
        %v2556 = vadd.f32 %v2555, 1e-05
        %v2557 = vrsqrt.pop %v2556
        %v2558 = vlaneseq
        %v2559 = vshrl.u32 %v2558, 7
        %v2560 = vsub.s32 0, %v2559
        %v2561 = vrot.slane %v2557, %v2560
        %v2562 = vmul.f32 %v2473, %v2561
        %v2563 = vlaneseq
        %v2564 = vshrl.u32 %v2563, 7
        %v2565 = vsub.s32 0, %v2564
        %v2566 = vrot.slane %v2157, %v2565
        %v2567 = vmul.f32 %v2562, %v2566
        %v2568 = vlaneseq
        %v2569 = vshrl.u32 %v2568, 7
        %v2570 = vsub.s32 0, %v2569
        %v2571 = vrot.slane %v2158, %v2570
        %v2572 = vadd.f32 %v2567, %v2571
        %v2573 = vmul.f32 %v2572, 0.5
        %v2574 = vmul.f32 %v2572, 0.70710677
        %v2575 = verf.f32.pop %v2574
        %v2576 = vadd.f32 %v2575, 1.0
        %v2577 = vmul.f32 %v2573, %v2576
        %2578 = vst.msk [vmem:[#allocation2] sm:$0x1] %vm773, 0.0
        %2579 = vst.msk [vmem:[#allocation2 + $0x3] sm:$0x1] %vm773, 0.0
        %2580 = vst.msk [vmem:[#allocation2 + $0x1] sm:$0x3] %vm2387, %v2577
        %s2581 = scalar_lea.vmem %s1, 480
        %v2582 = vld [vmem:[%s2581] sm:$0xff]
        %v2583 = vld [vmem:[%s2581 + $0x8] sm:$0xff]
        %v2584 = vld [vmem:[%s2581 + $0x10] sm:$0xff]
        %v2585 = vld [vmem:[%s2581 + $0x18] sm:$0xff]
        %v2586 = vld [vmem:[%s2581 + $0x20] sm:$0xff]
        %v2587 = vld [vmem:[%s2581 + $0x28] sm:$0xff]
        %v2588 = vld [vmem:[%s2581 + $0x30] sm:$0xff]
        %v2589 = vld [vmem:[%s2581 + $0x38] sm:$0xff]
        %v2590 = vld [vmem:[%s2581 + $0x40] sm:$0xff]
        %v2591 = vld [vmem:[%s2581 + $0x48] sm:$0xff]
        %v2592 = vld [vmem:[%s2581 + $0x50] sm:$0xff]
        %v2593 = vld [vmem:[%s2581 + $0x58] sm:$0xff]
        %v2594 = vld [vmem:[%s2 + $0x5] sm:$0x1]
        %v2595 = vld [vmem:[%s2 + $0xb] sm:$0x1]
        %v2596 = vld [vmem:[%s2 + $0x11] sm:$0x1]
        %v2597 = vld [vmem:[#allocation2] sm:$0x1]
        %v2598 = vld [vmem:[#allocation2 + $0x1] sm:$0x1]
        %v2600 = vsel %vm229, %v2598, 0
        %2602 = vmatprep.subr.mxu0 0.0
        %2603 = vmatpush1.msra.mxu0 %v2586
        %2604 = vmatprep.subr.mxu0 0.0
        %2605 = vmatpush1.msra.mxu0 %v2587
        %2606 = vmatprep.subr.mxu0 0.0
        %2607 = vmatpush1.msra.mxu0 %v2588
        %2608 = vmatprep.subr.mxu0 0.0
        %2609 = vmatpush1.msra.mxu0 %v2589
        %2610 = vmatprep.subr.mxu0 0.0
        %2611 = vmatpush1.msra.mxu0 0.0
        %2612 = vmatprep.subr.mxu0 0.0
        %2613 = vmatpush1.msra.mxu0 0.0
        %2614 = vmatprep.subr.mxu0 0.0
        %2615 = vmatpush1.msra.mxu0 0.0
        %2616 = vmatprep.subr.mxu0 0.0
        %2617 = vmatpush1.msra.mxu0 0.0
        %2618 = vmatprep.subr.mxu0 0.0
        %2619 = vmatpush1.msra.mxu0 0.0
        %2620 = vmatprep.subr.mxu0 0.0
        %2621 = vmatpush1.msra.mxu0 0.0
        %2622 = vmatprep.subr.mxu0 0.0
        %2623 = vmatpush1.msra.mxu0 0.0
        %2624 = vmatprep.subr.mxu0 0.0
        %2625 = vmatpush1.msra.mxu0 0.0
        %2626 = vmatprep.subr.mxu0 0.0
        %2627 = vmatpush1.msra.mxu0 0.0
        %2628 = vmatprep.subr.mxu0 0.0
        %2629 = vmatpush1.msra.mxu0 0.0
        %2630 = vmatprep.subr.mxu0 0.0
        %2631 = vmatpush1.msra.mxu0 0.0
        %2632 = vmatprep.subr.mxu0 0.0
        %2633 = vmatpush1.msra.mxu0 0.0
        %2634 = vmatprep.subr.mxu0 0.0
        %2635 = vmatpush1.msra.mxu0 0.0
        %2636 = vmatprep.subr.mxu0 0.0
        %2637 = vmatpush1.msra.mxu0 0.0
        %2638 = vmatprep.subr.mxu0 0.0
        %2639 = vmatpush1.msra.mxu0 0.0
        %2640 = vmatprep.subr.mxu0 0.0
        %2641 = vmatpush1.msra.mxu0 0.0
        %2642 = vmatprep.subr.mxu0 0.0
        %2643 = vmatpush1.msra.mxu0 0.0
        %2644 = vmatprep.subr.mxu0 0.0
        %2645 = vmatpush1.msra.mxu0 0.0
        %2646 = vmatprep.subr.mxu0 0.0
        %2647 = vmatpush1.msra.mxu0 0.0
        %2648 = vmatprep.subr.mxu0 0.0
        %2649 = vmatpush1.msra.mxu0 0.0
        %2650 = vmatprep.subr.mxu0 0.0
        %2651 = vmatpush1.msra.mxu0 0.0
        %2652 = vmatprep.subr.mxu0 0.0
        %2653 = vmatpush1.msra.mxu0 0.0
        %2654 = vmatprep.subr.mxu0 0.0
        %2655 = vmatpush1.msra.mxu0 0.0
        %2656 = vmatprep.subr.mxu0 0.0
        %2657 = vmatpush1.msra.mxu0 0.0
        %2658 = vmatprep.subr.mxu0 0.0
        %2659 = vmatpush1.msra.mxu0 0.0
        %2660 = vmatprep.subr.mxu0 0.0
        %2661 = vmatpush1.msra.mxu0 0.0
        %2662 = vmatprep.subr.mxu0 0.0
        %2663 = vmatpush1.msra.mxu0 0.0
        %2664 = vmatprep.subr.mxu0 0.0
        %2665 = vmatpush1.msra.mxu0 0.0
        %2666 = vmatprep.mubr.f32.mxu0 0.0
        %2667 = vmatmul.mubr.f32.gmra.mrb[0].mxu0 %v2600
        %v2668 = vpop.f32.mrb[0].mxu0
        %v2669 = vadd.f32 0.0, %v2668
        %v2670 = vpop.f32.mrb[0].mxu0
        %2671 = vdwg.mxu0
        %v2673 = vsel %vm229, %v2597, 0
        %2675 = vmatprep.subr.mxu0 0.0
        %2676 = vmatpush1.msra.mxu0 %v2582
        %2677 = vmatprep.subr.mxu0 0.0
        %2678 = vmatpush1.msra.mxu0 %v2583
        %2679 = vmatprep.subr.mxu0 0.0
        %2680 = vmatpush1.msra.mxu0 %v2584
        %2681 = vmatprep.subr.mxu0 0.0
        %2682 = vmatpush1.msra.mxu0 %v2585
        %2683 = vmatprep.subr.mxu0 0.0
        %2684 = vmatpush1.msra.mxu0 0.0
        %2685 = vmatprep.subr.mxu0 0.0
        %2686 = vmatpush1.msra.mxu0 0.0
        %2687 = vmatprep.subr.mxu0 0.0
        %2688 = vmatpush1.msra.mxu0 0.0
        %2689 = vmatprep.subr.mxu0 0.0
        %2690 = vmatpush1.msra.mxu0 0.0
        %2691 = vmatprep.subr.mxu0 0.0
        %2692 = vmatpush1.msra.mxu0 0.0
        %2693 = vmatprep.subr.mxu0 0.0
        %2694 = vmatpush1.msra.mxu0 0.0
        %2695 = vmatprep.subr.mxu0 0.0
        %2696 = vmatpush1.msra.mxu0 0.0
        %2697 = vmatprep.subr.mxu0 0.0
        %2698 = vmatpush1.msra.mxu0 0.0
        %2699 = vmatprep.subr.mxu0 0.0
        %2700 = vmatpush1.msra.mxu0 0.0
        %2701 = vmatprep.subr.mxu0 0.0
        %2702 = vmatpush1.msra.mxu0 0.0
        %2703 = vmatprep.subr.mxu0 0.0
        %2704 = vmatpush1.msra.mxu0 0.0
        %2705 = vmatprep.subr.mxu0 0.0
        %2706 = vmatpush1.msra.mxu0 0.0
        %2707 = vmatprep.subr.mxu0 0.0
        %2708 = vmatpush1.msra.mxu0 0.0
        %2709 = vmatprep.subr.mxu0 0.0
        %2710 = vmatpush1.msra.mxu0 0.0
        %2711 = vmatprep.subr.mxu0 0.0
        %2712 = vmatpush1.msra.mxu0 0.0
        %2713 = vmatprep.subr.mxu0 0.0
        %2714 = vmatpush1.msra.mxu0 0.0
        %2715 = vmatprep.subr.mxu0 0.0
        %2716 = vmatpush1.msra.mxu0 0.0
        %2717 = vmatprep.subr.mxu0 0.0
        %2718 = vmatpush1.msra.mxu0 0.0
        %2719 = vmatprep.subr.mxu0 0.0
        %2720 = vmatpush1.msra.mxu0 0.0
        %2721 = vmatprep.subr.mxu0 0.0
        %2722 = vmatpush1.msra.mxu0 0.0
        %2723 = vmatprep.subr.mxu0 0.0
        %2724 = vmatpush1.msra.mxu0 0.0
        %2725 = vmatprep.subr.mxu0 0.0
        %2726 = vmatpush1.msra.mxu0 0.0
        %2727 = vmatprep.subr.mxu0 0.0
        %2728 = vmatpush1.msra.mxu0 0.0
        %2729 = vmatprep.subr.mxu0 0.0
        %2730 = vmatpush1.msra.mxu0 0.0
        %2731 = vmatprep.subr.mxu0 0.0
        %2732 = vmatpush1.msra.mxu0 0.0
        %2733 = vmatprep.subr.mxu0 0.0
        %2734 = vmatpush1.msra.mxu0 0.0
        %2735 = vmatprep.subr.mxu0 0.0
        %2736 = vmatpush1.msra.mxu0 0.0
        %2737 = vmatprep.subr.mxu0 0.0
        %2738 = vmatpush1.msra.mxu0 0.0
        %2739 = vmatprep.mubr.f32.mxu0 0.0
        %2740 = vmatmul.mubr.f32.gmra.mrb[0].mxu0 %v2673
        %v2741 = vpop.f32.mrb[0].mxu0
        %v2742 = vadd.f32 %v2669, %v2741
        %v2743 = vpop.f32.mrb[0].mxu0
        %2744 = vdwg.mxu0
        %v2745 = vld [vmem:[#allocation2 + $0x2] sm:$0x1]
        %v2747 = vsel %vm229, %v2745, 0
        %2749 = vmatprep.subr.mxu0 0.0
        %2750 = vmatpush1.msra.mxu0 %v2590
        %2751 = vmatprep.subr.mxu0 0.0
        %2752 = vmatpush1.msra.mxu0 %v2591
        %2753 = vmatprep.subr.mxu0 0.0
        %2754 = vmatpush1.msra.mxu0 %v2592
        %2755 = vmatprep.subr.mxu0 0.0
        %2756 = vmatpush1.msra.mxu0 %v2593
        %2757 = vmatprep.subr.mxu0 0.0
        %2758 = vmatpush1.msra.mxu0 0.0
        %2759 = vmatprep.subr.mxu0 0.0
        %2760 = vmatpush1.msra.mxu0 0.0
        %2761 = vmatprep.subr.mxu0 0.0
        %2762 = vmatpush1.msra.mxu0 0.0
        %2763 = vmatprep.subr.mxu0 0.0
        %2764 = vmatpush1.msra.mxu0 0.0
        %2765 = vmatprep.subr.mxu0 0.0
        %2766 = vmatpush1.msra.mxu0 0.0
        %2767 = vmatprep.subr.mxu0 0.0
        %2768 = vmatpush1.msra.mxu0 0.0
        %2769 = vmatprep.subr.mxu0 0.0
        %2770 = vmatpush1.msra.mxu0 0.0
        %2771 = vmatprep.subr.mxu0 0.0
        %2772 = vmatpush1.msra.mxu0 0.0
        %2773 = vmatprep.subr.mxu0 0.0
        %2774 = vmatpush1.msra.mxu0 0.0
        %2775 = vmatprep.subr.mxu0 0.0
        %2776 = vmatpush1.msra.mxu0 0.0
        %2777 = vmatprep.subr.mxu0 0.0
        %2778 = vmatpush1.msra.mxu0 0.0
        %2779 = vmatprep.subr.mxu0 0.0
        %2780 = vmatpush1.msra.mxu0 0.0
        %2781 = vmatprep.subr.mxu0 0.0
        %2782 = vmatpush1.msra.mxu0 0.0
        %2783 = vmatprep.subr.mxu0 0.0
        %2784 = vmatpush1.msra.mxu0 0.0
        %2785 = vmatprep.subr.mxu0 0.0
        %2786 = vmatpush1.msra.mxu0 0.0
        %2787 = vmatprep.subr.mxu0 0.0
        %2788 = vmatpush1.msra.mxu0 0.0
        %2789 = vmatprep.subr.mxu0 0.0
        %2790 = vmatpush1.msra.mxu0 0.0
        %2791 = vmatprep.subr.mxu0 0.0
        %2792 = vmatpush1.msra.mxu0 0.0
        %2793 = vmatprep.subr.mxu0 0.0
        %2794 = vmatpush1.msra.mxu0 0.0
        %2795 = vmatprep.subr.mxu0 0.0
        %2796 = vmatpush1.msra.mxu0 0.0
        %2797 = vmatprep.subr.mxu0 0.0
        %2798 = vmatpush1.msra.mxu0 0.0
        %2799 = vmatprep.subr.mxu0 0.0
        %2800 = vmatpush1.msra.mxu0 0.0
        %2801 = vmatprep.subr.mxu0 0.0
        %2802 = vmatpush1.msra.mxu0 0.0
        %2803 = vmatprep.subr.mxu0 0.0
        %2804 = vmatpush1.msra.mxu0 0.0
        %2805 = vmatprep.subr.mxu0 0.0
        %2806 = vmatpush1.msra.mxu0 0.0
        %2807 = vmatprep.subr.mxu0 0.0
        %2808 = vmatpush1.msra.mxu0 0.0
        %2809 = vmatprep.subr.mxu0 0.0
        %2810 = vmatpush1.msra.mxu0 0.0
        %2811 = vmatprep.subr.mxu0 0.0
        %2812 = vmatpush1.msra.mxu0 0.0
        %2813 = vmatprep.mubr.f32.mxu0 0.0
        %2814 = vmatmul.mubr.f32.gmra.mrb[0].mxu0 %v2747
        %v2815 = vpop.f32.mrb[0].mxu0
        %v2816 = vadd.f32 0.0, %v2815
        %v2817 = vpop.f32.mrb[0].mxu0
        %2818 = vdwg.mxu0
        %v2819 = vadd.f32 %v2742, %v2816
        %v2820 = vadd.f32 %v2819, %v2594
        %v2821 = vadd.f32 %v2820, 0.0
        %v2823 = vsel %vm229, %v2821, 0
        %2825 = vmatprep.subr.mxu0 0.0
        %2826 = vmatpush1.msra.mxu0 %v195
        %2827 = vmatprep.subr.mxu0 0.0
        %2828 = vmatpush1.msra.mxu0 %v196
        %2829 = vmatprep.subr.mxu0 0.0
        %2830 = vmatpush1.msra.mxu0 %v197
        %2831 = vmatprep.subr.mxu0 0.0
        %2832 = vmatpush1.msra.mxu0 %v198
        %2833 = vmatprep.subr.mxu0 0.0
        %2834 = vmatpush1.msra.mxu0 0.0
        %2835 = vmatprep.subr.mxu0 0.0
        %2836 = vmatpush1.msra.mxu0 0.0
        %2837 = vmatprep.subr.mxu0 0.0
        %2838 = vmatpush1.msra.mxu0 0.0
        %2839 = vmatprep.subr.mxu0 0.0
        %2840 = vmatpush1.msra.mxu0 0.0
        %2841 = vmatprep.subr.mxu0 0.0
        %2842 = vmatpush1.msra.mxu0 0.0
        %2843 = vmatprep.subr.mxu0 0.0
        %2844 = vmatpush1.msra.mxu0 0.0
        %2845 = vmatprep.subr.mxu0 0.0
        %2846 = vmatpush1.msra.mxu0 0.0
        %2847 = vmatprep.subr.mxu0 0.0
        %2848 = vmatpush1.msra.mxu0 0.0
        %2849 = vmatprep.subr.mxu0 0.0
        %2850 = vmatpush1.msra.mxu0 0.0
        %2851 = vmatprep.subr.mxu0 0.0
        %2852 = vmatpush1.msra.mxu0 0.0
        %2853 = vmatprep.subr.mxu0 0.0
        %2854 = vmatpush1.msra.mxu0 0.0
        %2855 = vmatprep.subr.mxu0 0.0
        %2856 = vmatpush1.msra.mxu0 0.0
        %2857 = vmatprep.subr.mxu0 0.0
        %2858 = vmatpush1.msra.mxu0 0.0
        %2859 = vmatprep.subr.mxu0 0.0
        %2860 = vmatpush1.msra.mxu0 0.0
        %2861 = vmatprep.subr.mxu0 0.0
        %2862 = vmatpush1.msra.mxu0 0.0
        %2863 = vmatprep.subr.mxu0 0.0
        %2864 = vmatpush1.msra.mxu0 0.0
        %2865 = vmatprep.subr.mxu0 0.0
        %2866 = vmatpush1.msra.mxu0 0.0
        %2867 = vmatprep.subr.mxu0 0.0
        %2868 = vmatpush1.msra.mxu0 0.0
        %2869 = vmatprep.subr.mxu0 0.0
        %2870 = vmatpush1.msra.mxu0 0.0
        %2871 = vmatprep.subr.mxu0 0.0
        %2872 = vmatpush1.msra.mxu0 0.0
        %2873 = vmatprep.subr.mxu0 0.0
        %2874 = vmatpush1.msra.mxu0 0.0
        %2875 = vmatprep.subr.mxu0 0.0
        %2876 = vmatpush1.msra.mxu0 0.0
        %2877 = vmatprep.subr.mxu0 0.0
        %2878 = vmatpush1.msra.mxu0 0.0
        %2879 = vmatprep.subr.mxu0 0.0
        %2880 = vmatpush1.msra.mxu0 0.0
        %2881 = vmatprep.subr.mxu0 0.0
        %2882 = vmatpush1.msra.mxu0 0.0
        %2883 = vmatprep.subr.mxu0 0.0
        %2884 = vmatpush1.msra.mxu0 0.0
        %2885 = vmatprep.subr.mxu0 0.0
        %2886 = vmatpush1.msra.mxu0 0.0
        %2887 = vmatprep.subr.mxu0 0.0
        %2888 = vmatpush1.msra.mxu0 0.0
        %2889 = vmatprep.mubr.f32.mxu0 0.0
        %2890 = vmatmul.mubr.f32.gmra.mrb[0].mxu0 %v2823
        %v2891 = vpop.f32.mrb[0].mxu0
        %v2892 = vadd.f32 0.0, %v2891
        %v2893 = vpop.f32.mrb[0].mxu0
        %2894 = vdwg.mxu0
        %v2895 = vmul.f32 %v2892, 0.5
        %v2896 = vsub.f32 %v2820, %v2895
        %v2897 = vmul.f32 %v2896, %v2896
        %v2898 = vadd.f32 %v2897, 0.0
        %v2900 = vsel %vm229, %v2898, 0
        %2902 = vmatprep.subr.mxu0 0.0
        %2903 = vmatpush1.msra.mxu0 %v195
        %2904 = vmatprep.subr.mxu0 0.0
        %2905 = vmatpush1.msra.mxu0 %v196
        %2906 = vmatprep.subr.mxu0 0.0
        %2907 = vmatpush1.msra.mxu0 %v197
        %2908 = vmatprep.subr.mxu0 0.0
        %2909 = vmatpush1.msra.mxu0 %v198
        %2910 = vmatprep.subr.mxu0 0.0
        %2911 = vmatpush1.msra.mxu0 0.0
        %2912 = vmatprep.subr.mxu0 0.0
        %2913 = vmatpush1.msra.mxu0 0.0
        %2914 = vmatprep.subr.mxu0 0.0
        %2915 = vmatpush1.msra.mxu0 0.0
        %2916 = vmatprep.subr.mxu0 0.0
        %2917 = vmatpush1.msra.mxu0 0.0
        %2918 = vmatprep.subr.mxu0 0.0
        %2919 = vmatpush1.msra.mxu0 0.0
        %2920 = vmatprep.subr.mxu0 0.0
        %2921 = vmatpush1.msra.mxu0 0.0
        %2922 = vmatprep.subr.mxu0 0.0
        %2923 = vmatpush1.msra.mxu0 0.0
        %2924 = vmatprep.subr.mxu0 0.0
        %2925 = vmatpush1.msra.mxu0 0.0
        %2926 = vmatprep.subr.mxu0 0.0
        %2927 = vmatpush1.msra.mxu0 0.0
        %2928 = vmatprep.subr.mxu0 0.0
        %2929 = vmatpush1.msra.mxu0 0.0
        %2930 = vmatprep.subr.mxu0 0.0
        %2931 = vmatpush1.msra.mxu0 0.0
        %2932 = vmatprep.subr.mxu0 0.0
        %2933 = vmatpush1.msra.mxu0 0.0
        %2934 = vmatprep.subr.mxu0 0.0
        %2935 = vmatpush1.msra.mxu0 0.0
        %2936 = vmatprep.subr.mxu0 0.0
        %2937 = vmatpush1.msra.mxu0 0.0
        %2938 = vmatprep.subr.mxu0 0.0
        %2939 = vmatpush1.msra.mxu0 0.0
        %2940 = vmatprep.subr.mxu0 0.0
        %2941 = vmatpush1.msra.mxu0 0.0
        %2942 = vmatprep.subr.mxu0 0.0
        %2943 = vmatpush1.msra.mxu0 0.0
        %2944 = vmatprep.subr.mxu0 0.0
        %2945 = vmatpush1.msra.mxu0 0.0
        %2946 = vmatprep.subr.mxu0 0.0
        %2947 = vmatpush1.msra.mxu0 0.0
        %2948 = vmatprep.subr.mxu0 0.0
        %2949 = vmatpush1.msra.mxu0 0.0
        %2950 = vmatprep.subr.mxu0 0.0
        %2951 = vmatpush1.msra.mxu0 0.0
        %2952 = vmatprep.subr.mxu0 0.0
        %2953 = vmatpush1.msra.mxu0 0.0
        %2954 = vmatprep.subr.mxu0 0.0
        %2955 = vmatpush1.msra.mxu0 0.0
        %2956 = vmatprep.subr.mxu0 0.0
        %2957 = vmatpush1.msra.mxu0 0.0
        %2958 = vmatprep.subr.mxu0 0.0
        %2959 = vmatpush1.msra.mxu0 0.0
        %2960 = vmatprep.subr.mxu0 0.0
        %2961 = vmatpush1.msra.mxu0 0.0
        %2962 = vmatprep.subr.mxu0 0.0
        %2963 = vmatpush1.msra.mxu0 0.0
        %2964 = vmatprep.subr.mxu0 0.0
        %2965 = vmatpush1.msra.mxu0 0.0
        %2966 = vmatprep.mubr.f32.mxu0 0.0
        %2967 = vmatmul.mubr.f32.gmra.mrb[0].mxu0 %v2900
        %v2968 = vpop.f32.mrb[0].mxu0
        %v2969 = vadd.f32 0.0, %v2968
        %v2970 = vpop.f32.mrb[0].mxu0
        %2971 = vdwg.mxu0
        %v2972 = vmul.f32 %v2969, 0.5
        %v2973 = vadd.f32 %v2972, 1e-05
        %v2974 = vrsqrt.pop %v2973
        %v2975 = vmul.f32 %v2896, %v2974
        %v2976 = vmul.f32 %v2975, %v2595
        %v2977 = vadd.f32 %v2976, %v2596
        %v2978 = vmul.f32 %v2977, 0.5
        %v2979 = vmul.f32 %v2977, 0.70710677
        %v2980 = verf.f32.pop %v2979
        %v2981 = vadd.f32 %v2980, 1.0
        %v2982 = vmul.f32 %v2978, %v2981
        %2983 = vst.msk [vmem:[%s189] sm:$0x1] %vm773, %v2982
        %s2984 = sand.u32 %s115, 1
        %s2985 = scalar_lea.sflag [#allocation5], %s2984
        %s2986 = sand.u32 %s115, 1
        %s2987 = scalar_lea.vmem [#allocation4], %s2986
        // Predicated region
        $region37: #{tpu_custom_call.1} parent=35 // pred_check
          %p2988 = pneg %p125
        $region38: #{tpu_custom_call.1} parent=35 // pred_check_branch
          %2990 = sbr.rel (%p2988) target = $region40
        $region39: #{tpu_custom_call.1} parent=35 // pred_region
          %s2992 = ssub.s32 16, 16
          %2993 = vsyncadd %s2985, %s2992
          %s2994 = smul.addr %s18, 16
          %s2995 = scalar_lea.hbm %s4, %s2994
          %s2997 = sshll.u32 %s2987, 4
          %s2998 = int_to_ptr.vmem [resolvable:$true] %s2997
          %3000 = dma.vmem_to_hbm [thread:$0]  %s2998, 16, %s2995, %s2985
        $region40: #{tpu_custom_call.1} parent=35 // pred_fallthru
          _
      $region36: #{tpu_custom_call.1} parent=5 // pred_fallthru
        _
      %p3001 = scmp.le.s32.totalorder 2, %s13
      // Predicated region
      $region41: #{tpu_custom_call.1} parent=5 // pred_check
        %p3002 = pneg %p3001
      $region42: #{tpu_custom_call.1} parent=5 // pred_check_branch
        %3004 = sbr.rel (%p3002) target = $region44
      $region43: #{tpu_custom_call.1} parent=5 // pred_region
        %s3005 = ssub.s32 %s13, 2
        // Predicated region
        $region45: #{tpu_custom_call.1} parent=43 // pred_check
          %p3006 = pneg %p131
        $region46: #{tpu_custom_call.1} parent=43 // pred_check_branch
          %3008 = sbr.rel (%p3006) target = $region48
        $region47: #{tpu_custom_call.1} parent=43 // pred_region
          %s3009 = sand.u32 %s116, 1
          %s3010 = scalar_lea.sflag [#allocation5], %s3009
          %s3011 = sand.u32 %s116, 1
          %s3012 = scalar_lea.vmem [#allocation4], %s3011
          %3013 = dma.done %s3010, 16
        $region48: #{tpu_custom_call.1} parent=43 // pred_fallthru
          _
      $region44: #{tpu_custom_call.1} parent=5 // pred_fallthru
        _
    $region6: #{tpu_custom_call.1} parent=1 // loop_footer
      %s17 = sadd.s32 1, %s13
    $region7: #{tpu_custom_call.1} parent=1 // loop_footer_branch
      %12 = sbr.rel target = $region3
    $region8: #{tpu_custom_call.1} parent=1 // loop_exit
      _
    %3014 = vsyncpa [#allocation5], 1
    %s3015 = scalar_lea.sflag [#allocation5], 1
    %3016 = vsyncpa %s3015, 1

</llo_original>
